<compile_context>
chip_gen: v7x
topology: tpu7x:2x2x1
jax: 0.10.0
libtpu: 0.0.40
codegen_flags: <defaults>
</compile_context>

<pallas_src>
import math

import numpy as np
import jax
import jax.numpy as jnp
from jax.experimental import pallas as pl
from jax.experimental.pallas import tpu as pltpu  # noqa: F401

# --- model hyper-parameters (small, consistent with the config dataclass) ---
B = 2                 # number of graphs in the batch
S_ENC = 8             # padded encoder (node) sequence length
T_DEC = 8             # padded decoder sequence length (<= max_output_length)
H = 32                # node_hidden_dim
NH = 4                # attention heads
HD = H // NH          # head dim
FF = 4 * H            # feed-forward dim (128, lane-dense)
NUM_DEC_LAYERS = 2    # num_decoder_layers
IN_VOCAB = 64         # input tokenizer vocab
OUT_VOCAB = 128       # output tokenizer vocab (num_outputs) — lane-dense logits
PAD_IN = 0
PAD_OUT = 0
MAX_LEN = 512         # cfg.max_length (positional embedding table)
NEG_INF = -1e9
DECODER_NODE_TYPE = "token"
MXU_DTYPE = jnp.bfloat16   # matmul operand dtype (f32 accumulation everywhere)

BT = B * T_DEC        # flattened decoder rows
BS = B * S_ENC        # flattened encoder rows
LANES = 128           # slab lane width

# ------------------- packed-slab row layouts (shared host/kernel) -------------------
# bf16 weight slab: per layer [s_wqkv(H) | s_wo(H) | c_wqkv(H) | c_wo(H) | w1(H) | w2(FF)]
ROWS_PER_LAYER_W = 5 * H + FF


def _w_off(l):
    base = l * ROWS_PER_LAYER_W
    return dict(s_wqkv=base, s_wo=base + H, c_wqkv=base + 2 * H, c_wo=base + 3 * H,
                w1=base + 4 * H, w2=base + 5 * H)


W_OFF = [_w_off(l) for l in range(NUM_DEC_LAYERS)]
WOUT_OFF = NUM_DEC_LAYERS * ROWS_PER_LAYER_W
W_TOTAL_ROWS = WOUT_OFF + H          # 608 rows x 128 lanes (bf16)

# f32 param slab: one row per bias / LN vector
ROWS_PER_LAYER_P = 12


def _p_off(l):
    base = l * ROWS_PER_LAYER_P
    return dict(s_bqkv=base, s_bo=base + 1, c_bqkv=base + 2, c_bo=base + 3,
                b1=base + 4, b2=base + 5,
                ln_g0=base + 6, ln_b0=base + 7, ln_g1=base + 8, ln_b1=base + 9,
                ln_g2=base + 10, ln_b2=base + 11)


P_OFF = [_p_off(l) for l in range(NUM_DEC_LAYERS)]
BOUT_OFF = NUM_DEC_LAYERS * ROWS_PER_LAYER_P
P_TOTAL_ROWS = ((BOUT_OFF + 1 + 7) // 8) * 8   # sublane-aligned (32 rows)


# ------------------------- in-kernel helpers -------------------------
def _mm(a, b):
    """MXU matmul: bf16 operands (weights already bf16), f32 accumulation."""
    return jnp.dot(a.astype(MXU_DTYPE), b.astype(MXU_DTYPE),
                   preferred_element_type=jnp.float32)


def _mm_nt(a, b):
    """a [M, D] contracted with b [N, D] on the last dim -> [M, N] (no transpose copy)."""
    return jax.lax.dot_general(a.astype(MXU_DTYPE), b.astype(MXU_DTYPE),
                               dimension_numbers=(((1,), (1,)), ((), ())),
                               preferred_element_type=jnp.float32)


def _layer_norm(x, g=None, b=None, eps=1e-5):
    """x: [N, H] f32; g/b: [1, H] f32 or None (non-affine). All elementwise math f32."""
    mu = jnp.mean(x, axis=-1, keepdims=True)
    var = jnp.mean(jnp.square(x - mu), axis=-1, keepdims=True)
    y = (x - mu) * jax.lax.rsqrt(var + eps)
    if g is not None:
        y = y * g + b
    return y


def _attn(x_q, x_kv, add_mask, w_ref, p_ref, wqkv_row, bqkv_row, wo_row, bo_row):
    """Flattened multi-head attention.

    x_q: [Nq, H], x_kv: [Nk, H], add_mask: [Nq, Nk] additive (0 / -1e9, block-diagonal
    over the batch). Fused Q and KV projections; per-head slices are static lane
    slices; head outputs are lane-concatenated and projected with a single Wo matmul.
    The 1/sqrt(HD) softmax scale is folded into the Q weights on host.
    """
    q_all = _mm(x_q, w_ref[wqkv_row:wqkv_row + H, 0:H]) \
        + p_ref[bqkv_row:bqkv_row + 1, 0:H]                       # [Nq, H]
    kv_all = _mm(x_kv, w_ref[wqkv_row:wqkv_row + H, H:3 * H]) \
        + p_ref[bqkv_row:bqkv_row + 1, H:3 * H]                   # [Nk, 2H] (K | V)
    heads = []
    for h in range(NH):                                           # static head loop
        q = q_all[:, h * HD:(h + 1) * HD]
        k = kv_all[:, h * HD:(h + 1) * HD]
        v = kv_all[:, H + h * HD:H + (h + 1) * HD]
        s = _mm_nt(q, k) + add_mask
        s = s - jnp.max(s, axis=-1, keepdims=True)                # keep: padded rows
        p = jnp.exp(s)
        p = p * pl.reciprocal(jnp.sum(p, axis=-1, keepdims=True), approx=True)
        heads.append(_mm(p, v))                                   # [Nq, HD]
    concat = jnp.concatenate(heads, axis=-1)                      # lane concat -> [Nq, H]
    return _mm(concat, w_ref[wo_row:wo_row + H, 0:H]) + p_ref[bo_row:bo_row + 1, 0:H]


# ------------------ fused decoder-head kernel (single launch) ------------------
def decoder_kernel(acts_ref, mask_ref, w_ref, p_ref, o_ref):
    x = acts_ref[0:BT, :]                     # [BT, H] decoder input embeddings (f32)
    enc = acts_ref[BT:BT + BS, :]             # [BS, H] encoder outputs (IdentityGNN)
    smask = mask_ref[:, 0:BT]                 # [BT, BT] additive causal block mask
    cmask = mask_ref[:, BT:BT + BS]           # [BT, BS] additive rectangular block mask

    for l in range(NUM_DEC_LAYERS):           # static loop; static slab offsets
        wo = W_OFF[l]
        po = P_OFF[l]
        # --- self-attention + residual + LN (post-norm; dropout identity in eval) ---
        sa = _attn(x, x, smask, w_ref, p_ref,
                   wo['s_wqkv'], po['s_bqkv'], wo['s_wo'], po['s_bo'])
        x = _layer_norm(x + sa,
                        p_ref[po['ln_g0']:po['ln_g0'] + 1, 0:H],
                        p_ref[po['ln_b0']:po['ln_b0'] + 1, 0:H])
        # --- cross-attention over encoder outputs + residual + LN ---
        ca = _attn(x, enc, cmask, w_ref, p_ref,
                   wo['c_wqkv'], po['c_bqkv'], wo['c_wo'], po['c_bo'])
        x = _layer_norm(x + ca,
                        p_ref[po['ln_g1']:po['ln_g1'] + 1, 0:H],
                        p_ref[po['ln_b1']:po['ln_b1'] + 1, 0:H])
        # --- ReLU feed-forward + residual + LN ---
        ff = jnp.maximum(_mm(x, w_ref[wo['w1']:wo['w1'] + H, 0:FF])
                         + p_ref[po['b1']:po['b1'] + 1, 0:FF], 0.0)
        ff = _mm(ff, w_ref[wo['w2']:wo['w2'] + FF, 0:H]) + p_ref[po['b2']:po['b2'] + 1, 0:H]
        if l == NUM_DEC_LAYERS - 1:
            # final LN affine folded into wout/bout on host -> non-affine LN here
            x = _layer_norm(x + ff)
        else:
            x = _layer_norm(x + ff,
                            p_ref[po['ln_g2']:po['ln_g2'] + 1, 0:H],
                            p_ref[po['ln_b2']:po['ln_b2'] + 1, 0:H])

    # output projection to the output-tokenizer vocabulary — lane-dense [BT, 128] store
    o_ref[...] = (_mm(x, w_ref[WOUT_OFF:WOUT_OFF + H, 0:OUT_VOCAB])
                  + p_ref[BOUT_OFF:BOUT_OFF + 1, 0:OUT_VOCAB])


# -------------------------- parameters --------------------------
def init_params(key):
    ks = jax.random.split(key, 10)
    L = NUM_DEC_LAYERS

    def nrm(k, shape, scale=0.02):
        return np.asarray(jax.random.normal(k, shape, jnp.float32)) * scale

    in_tok_emb = nrm(ks[0], (IN_VOCAB, H));  in_tok_emb[PAD_IN] = 0.0
    out_tok_emb = nrm(ks[1], (OUT_VOCAB, H)); out_tok_emb[PAD_OUT] = 0.0
    pos_emb = nrm(ks[2], (MAX_LEN, H))

    s_wqkv = nrm(ks[3], (L, H, 3 * H)); s_bqkv = np.zeros((L, 3 * H), np.float32)
    s_wo = nrm(ks[4], (L, H, H));       s_bo = np.zeros((L, H), np.float32)
    c_wqkv = nrm(ks[5], (L, H, 3 * H)); c_bqkv = np.zeros((L, 3 * H), np.float32)
    c_wo = nrm(ks[6], (L, H, H));       c_bo = np.zeros((L, H), np.float32)
    w1 = nrm(ks[7], (L, H, FF));        b1 = np.zeros((L, FF), np.float32)
    w2 = nrm(ks[8], (L, FF, H));        b2 = np.zeros((L, H), np.float32)
    ln_g = np.ones((L, 3, H), np.float32); ln_b = np.zeros((L, 3, H), np.float32)
    wout = nrm(ks[9], (H, OUT_VOCAB));  bout = np.zeros((OUT_VOCAB,), np.float32)

    # fold softmax scale 1/sqrt(HD) into Q projection (columns 0:H of the fused QKV)
    scale = 1.0 / math.sqrt(HD)
    s_wqkv[:, :, 0:H] *= scale
    s_bqkv[:, 0:H] *= scale
    c_wqkv[:, :, 0:H] *= scale
    c_bqkv[:, 0:H] *= scale

    # fold last layer's final LayerNorm affine into the output projection
    g_last = ln_g[L - 1, 2]
    b_last = ln_b[L - 1, 2]
    wout_f = wout * g_last[:, None]
    bout_f = bout + b_last @ wout

    # --- pack matmul weights into one bf16 slab [W_TOTAL_ROWS, 128] ---
    w_slab = np.zeros((W_TOTAL_ROWS, LANES), np.float32)
    for l in range(L):
        o = W_OFF[l]
        w_slab[o['s_wqkv']:o['s_wqkv'] + H, 0:3 * H] = s_wqkv[l]
        w_slab[o['s_wo']:o['s_wo'] + H, 0:H] = s_wo[l]
        w_slab[o['c_wqkv']:o['c_wqkv'] + H, 0:3 * H] = c_wqkv[l]
        w_slab[o['c_wo']:o['c_wo'] + H, 0:H] = c_wo[l]
        w_slab[o['w1']:o['w1'] + H, 0:FF] = w1[l]
        w_slab[o['w2']:o['w2'] + FF, 0:H] = w2[l]
    w_slab[WOUT_OFF:WOUT_OFF + H, 0:OUT_VOCAB] = wout_f

    # --- pack biases / LayerNorm params into one f32 slab [P_TOTAL_ROWS, 128] ---
    p_slab = np.zeros((P_TOTAL_ROWS, LANES), np.float32)
    for l in range(L):
        o = P_OFF[l]
        p_slab[o['s_bqkv'], 0:3 * H] = s_bqkv[l]
        p_slab[o['s_bo'], 0:H] = s_bo[l]
        p_slab[o['c_bqkv'], 0:3 * H] = c_bqkv[l]
        p_slab[o['c_bo'], 0:H] = c_bo[l]
        p_slab[o['b1'], 0:FF] = b1[l]
        p_slab[o['b2'], 0:H] = b2[l]
        p_slab[o['ln_g0'], 0:H] = ln_g[l, 0]; p_slab[o['ln_b0'], 0:H] = ln_b[l, 0]
        p_slab[o['ln_g1'], 0:H] = ln_g[l, 1]; p_slab[o['ln_b1'], 0:H] = ln_b[l, 1]
        p_slab[o['ln_g2'], 0:H] = ln_g[l, 2]; p_slab[o['ln_b2'], 0:H] = ln_b[l, 2]
    p_slab[BOUT_OFF, 0:OUT_VOCAB] = bout_f

    return dict(
        in_tok_emb=jnp.asarray(in_tok_emb),
        out_tok_emb=jnp.asarray(out_tok_emb),
        pos_emb=jnp.asarray(pos_emb),
        w_slab=jnp.asarray(w_slab, dtype=MXU_DTYPE),   # pre-cast to bf16 on host
        p_slab=jnp.asarray(p_slab, dtype=jnp.float32),
    )


# -------------------------- forward --------------------------
def forward(params, enc_tokens, enc_valid, dec_tokens, dec_positions,
            self_mask_flat, cross_mask_flat):
    # encode(g): GraphEmbedding + IdentityGNN (pass-through). Gathers stay in plain JAX.
    enc_pos = jnp.arange(S_ENC, dtype=jnp.int32)[None, :]
    enc = params['in_tok_emb'][enc_tokens] + params['pos_emb'][enc_pos]
    enc = enc * enc_valid[..., None].astype(jnp.float32)            # zero pad rows

    # decoder input embedding at encoder-aligned positions (decoder_positions)
    xdec = params['out_tok_emb'][dec_tokens] + params['pos_emb'][dec_positions]

    # pack activations (decoder rows then encoder rows) and the two additive masks
    acts = jnp.concatenate([xdec.reshape(BT, H), enc.reshape(BS, H)], axis=0)
    masks = jnp.concatenate([self_mask_flat, cross_mask_flat], axis=1)   # [BT, BT+BS]

    # single fused pallas_call: whole batch, both decoder layers, output projection
    logits_flat = pl.pallas_call(
        decoder_kernel,
        out_shape=jax.ShapeDtypeStruct((BT, OUT_VOCAB), jnp.float32),
    )(acts, masks, params['w_slab'], params['p_slab'])

    outputs = {DECODER_NODE_TYPE: logits_flat.reshape(B, T_DEC, OUT_VOCAB)}
    additional_losses = {}   # IdentityGNN.get_additional_losses() == {}
    return outputs, additional_losses


# -------------------------- example batch --------------------------
def build_example_batch(key):
    # Each graph has several decoder "nodes": the node's encoder tokens form one
    # encoder group and its target sequence forms the matching decoder group
    # (torch: encoder_group_lengths / decoder_group_lengths).
    enc_groups = [[3, 5], [2, 3]]      # graph 0: 8 encoder tokens, graph 1: 5
    dec_groups = [[4, 4], [3, 2]]      # graph 0: 8 decoder tokens, graph 1: 5

    enc_gid = np.full((B, S_ENC), -1, np.int64)
    dec_gid = np.full((B, T_DEC), -1, np.int64)
    dec_pos = np.zeros((B, T_DEC), np.int64)
    for b in range(B):
        starts, s = [], 0
        for g, n in enumerate(enc_groups[b]):
            starts.append(s)
            enc_gid[b, s:s + n] = g
            s += n
        t = 0
        for g, n in enumerate(dec_groups[b]):
            dec_gid[b, t:t + n] = g
            # positions aligned with the start of the matching encoder group
            dec_pos[b, t:t + n] = np.arange(starts[g], starts[g] + n)
            t += n

    enc_valid = enc_gid >= 0
    dec_valid = dec_gid >= 0

    # rectangular block mask: decoder group g attends only its encoder group g
    cross_allowed = ((dec_gid[:, :, None] == enc_gid[:, None, :])
                     & dec_valid[:, :, None] & enc_valid[:, None, :])
    # square causal block mask: causal inside each decoder group, blocked across groups
    idx = np.arange(T_DEC)
    causal = (idx[:, None] >= idx[None, :])
    self_allowed = ((dec_gid[:, :, None] == dec_gid[:, None, :])
                    & dec_valid[:, :, None] & dec_valid[:, None, :]
                    & causal[None]) | np.eye(T_DEC, dtype=bool)[None]

    # flattened block-diagonal additive masks (cross-batch entries = -1e9)
    self_flat = np.full((BT, BT), NEG_INF, np.float32)
    cross_flat = np.full((BT, BS), NEG_INF, np.float32)
    for b in range(B):
        self_flat[b * T_DEC:(b + 1) * T_DEC, b * T_DEC:(b + 1) * T_DEC] = \
            np.where(self_allowed[b], 0.0, NEG_INF)
        cross_flat[b * T_DEC:(b + 1) * T_DEC, b * S_ENC:(b + 1) * S_ENC] = \
            np.where(cross_allowed[b], 0.0, NEG_INF)

    k1, k2 = jax.random.split(key)
    enc_tokens = jax.random.randint(k1, (B, S_ENC), 1, IN_VOCAB, dtype=jnp.int32)
    enc_tokens = jnp.where(jnp.asarray(enc_valid), enc_tokens, PAD_IN)
    dec_tokens = jax.random.randint(k2, (B, T_DEC), 1, OUT_VOCAB, dtype=jnp.int32)
    dec_tokens = jnp.where(jnp.asarray(dec_valid), dec_tokens, PAD_OUT)

    return (enc_tokens, jnp.asarray(enc_valid), dec_tokens,
            jnp.asarray(dec_pos, dtype=jnp.int32),
            jnp.asarray(self_flat), jnp.asarray(cross_flat))


if __name__ == "__main__":
    key = jax.random.PRNGKey(0)
    pkey, dkey = jax.random.split(key)

    params = init_params(pkey)
    batch = build_example_batch(dkey)

    outputs, aux_losses = forward(params, *batch)
    logits = jax.block_until_ready(outputs[DECODER_NODE_TYPE])

    assert logits.shape == (B, T_DEC, OUT_VOCAB), logits.shape
    assert bool(jnp.all(jnp.isfinite(logits)))
    assert aux_losses == {}
    print("KERNEL_OK")
</pallas_src>

<mosaic_0001>
module attributes {stable_mosaic.version = 11 : i64} {
  func.func @decoder_kernel(%arg0: memref<32x32xf32, #tpu.memory_space<vmem>>, %arg1: memref<16x32xf32, #tpu.memory_space<vmem>>, %arg2: memref<608x128xbf16, #tpu.memory_space<vmem>>, %arg3: memref<32x128xf32, #tpu.memory_space<vmem>>, %arg4: memref<16x128xf32, #tpu.memory_space<vmem>>) attributes {dimension_semantics = [], scalar_prefetch = 0 : i64, scratch_operands = 0 : i64, tpu.core_type = #tpu.core_type<tc>} {
    %c0 = arith.constant 0 : index
    %c0_0 = arith.constant 0 : index
    %0 = vector.load %arg0[%c0, %c0_0] : memref<32x32xf32, #tpu.memory_space<vmem>>, vector<16x32xf32>
    %c16 = arith.constant 16 : index
    %c0_1 = arith.constant 0 : index
    %1 = vector.load %arg0[%c16, %c0_1] : memref<32x32xf32, #tpu.memory_space<vmem>>, vector<16x32xf32>
    %c0_2 = arith.constant 0 : index
    %c0_3 = arith.constant 0 : index
    %2 = vector.load %arg1[%c0_2, %c0_3] : memref<16x32xf32, #tpu.memory_space<vmem>>, vector<16x16xf32>
    %c0_4 = arith.constant 0 : index
    %c16_5 = arith.constant 16 : index
    %3 = vector.load %arg1[%c0_4, %c16_5] : memref<16x32xf32, #tpu.memory_space<vmem>>, vector<16x16xf32>
    %c0_6 = arith.constant 0 : index
    %c0_7 = arith.constant 0 : index
    %4 = vector.load %arg2[%c0_6, %c0_7] : memref<608x128xbf16, #tpu.memory_space<vmem>>, vector<32x32xbf16>
    %5 = arith.truncf %0 : vector<16x32xf32> to vector<16x32xbf16>
    %cst = arith.constant dense<0.000000e+00> : vector<16x32xf32>
    %6 = tpu.matmul %5, %4, %cst {dimension_numbers = #tpu.dot_dimension_numbers<[1], [0], [0], [1], [0, 0, 1, 1], [], []>} : vector<16x32xbf16>, vector<32x32xbf16>, vector<16x32xf32> -> vector<16x32xf32>
    %c0_8 = arith.constant 0 : index
    %c0_9 = arith.constant 0 : index
    %7 = vector.load %arg3[%c0_8, %c0_9] : memref<32x128xf32, #tpu.memory_space<vmem>>, vector<1x32xf32>
    %8 = vector.broadcast %7 : vector<1x32xf32> to vector<16x32xf32>
    %9 = arith.addf %6, %8 : vector<16x32xf32>
    %c0_10 = arith.constant 0 : index
    %c32 = arith.constant 32 : index
    %10 = vector.load %arg2[%c0_10, %c32] : memref<608x128xbf16, #tpu.memory_space<vmem>>, vector<32x64xbf16>
    %11 = arith.truncf %0 : vector<16x32xf32> to vector<16x32xbf16>
    %cst_11 = arith.constant dense<0.000000e+00> : vector<16x64xf32>
    %12 = tpu.matmul %11, %10, %cst_11 {dimension_numbers = #tpu.dot_dimension_numbers<[1], [0], [0], [1], [0, 0, 1, 1], [], []>} : vector<16x32xbf16>, vector<32x64xbf16>, vector<16x64xf32> -> vector<16x64xf32>
    %c0_12 = arith.constant 0 : index
    %c32_13 = arith.constant 32 : index
    %13 = vector.load %arg3[%c0_12, %c32_13] : memref<32x128xf32, #tpu.memory_space<vmem>>, vector<1x64xf32>
    %14 = vector.broadcast %13 : vector<1x64xf32> to vector<16x64xf32>
    %15 = arith.addf %12, %14 : vector<16x64xf32>
    %16 = vector.extract_strided_slice %9 {offsets = [0, 0], sizes = [16, 8], strides = [1, 1]} : vector<16x32xf32> to vector<16x8xf32>
    %17 = vector.extract_strided_slice %15 {offsets = [0, 0], sizes = [16, 8], strides = [1, 1]} : vector<16x64xf32> to vector<16x8xf32>
    %18 = vector.extract_strided_slice %15 {offsets = [0, 32], sizes = [16, 8], strides = [1, 1]} : vector<16x64xf32> to vector<16x8xf32>
    %19 = arith.truncf %16 : vector<16x8xf32> to vector<16x8xbf16>
    %20 = arith.truncf %17 : vector<16x8xf32> to vector<16x8xbf16>
    %cst_14 = arith.constant dense<0.000000e+00> : vector<16x16xf32>
    %21 = tpu.matmul %19, %20, %cst_14 {dimension_numbers = #tpu.dot_dimension_numbers<[1], [1], [0], [0], [0, 0, 1, 0], [], []>} : vector<16x8xbf16>, vector<16x8xbf16>, vector<16x16xf32> -> vector<16x16xf32>
    %22 = arith.addf %21, %2 : vector<16x16xf32>
    %cst_15 = arith.constant dense<0xFF800000> : vector<16xf32>
    %23 = vector.multi_reduction <maximumf>, %22, %cst_15 [1] : vector<16x16xf32> to vector<16xf32>
    %24 = vector.shape_cast %23 : vector<16xf32> to vector<16x1xf32>
    %25 = vector.broadcast %24 : vector<16x1xf32> to vector<16x16xf32>
    %26 = arith.subf %22, %25 : vector<16x16xf32>
    %27 = math.exp %26 : vector<16x16xf32>
    %cst_16 = arith.constant dense<0.000000e+00> : vector<16xf32>
    %28 = vector.multi_reduction <add>, %27, %cst_16 [1] : vector<16x16xf32> to vector<16xf32>
    %29 = vector.shape_cast %28 : vector<16xf32> to vector<16x1xf32>
    %30 = tpu.reciprocal %29 {approx = true} : vector<16x1xf32> -> vector<16x1xf32>
    %31 = vector.broadcast %30 : vector<16x1xf32> to vector<16x16xf32>
    %32 = arith.mulf %27, %31 : vector<16x16xf32>
    %33 = arith.truncf %32 : vector<16x16xf32> to vector<16x16xbf16>
    %34 = arith.truncf %18 : vector<16x8xf32> to vector<16x8xbf16>
    %cst_17 = arith.constant dense<0.000000e+00> : vector<16x8xf32>
    %35 = tpu.matmul %33, %34, %cst_17 {dimension_numbers = #tpu.dot_dimension_numbers<[1], [0], [0], [1], [0, 0, 1, 1], [], []>} : vector<16x16xbf16>, vector<16x8xbf16>, vector<16x8xf32> -> vector<16x8xf32>
    %36 = vector.extract_strided_slice %9 {offsets = [0, 8], sizes = [16, 8], strides = [1, 1]} : vector<16x32xf32> to vector<16x8xf32>
    %37 = vector.extract_strided_slice %15 {offsets = [0, 8], sizes = [16, 8], strides = [1, 1]} : vector<16x64xf32> to vector<16x8xf32>
    %38 = vector.extract_strided_slice %15 {offsets = [0, 40], sizes = [16, 8], strides = [1, 1]} : vector<16x64xf32> to vector<16x8xf32>
    %39 = arith.truncf %36 : vector<16x8xf32> to vector<16x8xbf16>
    %40 = arith.truncf %37 : vector<16x8xf32> to vector<16x8xbf16>
    %cst_18 = arith.constant dense<0.000000e+00> : vector<16x16xf32>
    %41 = tpu.matmul %39, %40, %cst_18 {dimension_numbers = #tpu.dot_dimension_numbers<[1], [1], [0], [0], [0, 0, 1, 0], [], []>} : vector<16x8xbf16>, vector<16x8xbf16>, vector<16x16xf32> -> vector<16x16xf32>
    %42 = arith.addf %41, %2 : vector<16x16xf32>
    %cst_19 = arith.constant dense<0xFF800000> : vector<16xf32>
    %43 = vector.multi_reduction <maximumf>, %42, %cst_19 [1] : vector<16x16xf32> to vector<16xf32>
    %44 = vector.shape_cast %43 : vector<16xf32> to vector<16x1xf32>
    %45 = vector.broadcast %44 : vector<16x1xf32> to vector<16x16xf32>
    %46 = arith.subf %42, %45 : vector<16x16xf32>
    %47 = math.exp %46 : vector<16x16xf32>
    %cst_20 = arith.constant dense<0.000000e+00> : vector<16xf32>
    %48 = vector.multi_reduction <add>, %47, %cst_20 [1] : vector<16x16xf32> to vector<16xf32>
    %49 = vector.shape_cast %48 : vector<16xf32> to vector<16x1xf32>
    %50 = tpu.reciprocal %49 {approx = true} : vector<16x1xf32> -> vector<16x1xf32>
    %51 = vector.broadcast %50 : vector<16x1xf32> to vector<16x16xf32>
    %52 = arith.mulf %47, %51 : vector<16x16xf32>
    %53 = arith.truncf %52 : vector<16x16xf32> to vector<16x16xbf16>
    %54 = arith.truncf %38 : vector<16x8xf32> to vector<16x8xbf16>
    %cst_21 = arith.constant dense<0.000000e+00> : vector<16x8xf32>
    %55 = tpu.matmul %53, %54, %cst_21 {dimension_numbers = #tpu.dot_dimension_numbers<[1], [0], [0], [1], [0, 0, 1, 1], [], []>} : vector<16x16xbf16>, vector<16x8xbf16>, vector<16x8xf32> -> vector<16x8xf32>
    %56 = vector.extract_strided_slice %9 {offsets = [0, 16], sizes = [16, 8], strides = [1, 1]} : vector<16x32xf32> to vector<16x8xf32>
    %57 = vector.extract_strided_slice %15 {offsets = [0, 16], sizes = [16, 8], strides = [1, 1]} : vector<16x64xf32> to vector<16x8xf32>
    %58 = vector.extract_strided_slice %15 {offsets = [0, 48], sizes = [16, 8], strides = [1, 1]} : vector<16x64xf32> to vector<16x8xf32>
    %59 = arith.truncf %56 : vector<16x8xf32> to vector<16x8xbf16>
    %60 = arith.truncf %57 : vector<16x8xf32> to vector<16x8xbf16>
    %cst_22 = arith.constant dense<0.000000e+00> : vector<16x16xf32>
    %61 = tpu.matmul %59, %60, %cst_22 {dimension_numbers = #tpu.dot_dimension_numbers<[1], [1], [0], [0], [0, 0, 1, 0], [], []>} : vector<16x8xbf16>, vector<16x8xbf16>, vector<16x16xf32> -> vector<16x16xf32>
    %62 = arith.addf %61, %2 : vector<16x16xf32>
    %cst_23 = arith.constant dense<0xFF800000> : vector<16xf32>
    %63 = vector.multi_reduction <maximumf>, %62, %cst_23 [1] : vector<16x16xf32> to vector<16xf32>
    %64 = vector.shape_cast %63 : vector<16xf32> to vector<16x1xf32>
    %65 = vector.broadcast %64 : vector<16x1xf32> to vector<16x16xf32>
    %66 = arith.subf %62, %65 : vector<16x16xf32>
    %67 = math.exp %66 : vector<16x16xf32>
    %cst_24 = arith.constant dense<0.000000e+00> : vector<16xf32>
    %68 = vector.multi_reduction <add>, %67, %cst_24 [1] : vector<16x16xf32> to vector<16xf32>
    %69 = vector.shape_cast %68 : vector<16xf32> to vector<16x1xf32>
    %70 = tpu.reciprocal %69 {approx = true} : vector<16x1xf32> -> vector<16x1xf32>
    %71 = vector.broadcast %70 : vector<16x1xf32> to vector<16x16xf32>
    %72 = arith.mulf %67, %71 : vector<16x16xf32>
    %73 = arith.truncf %72 : vector<16x16xf32> to vector<16x16xbf16>
    %74 = arith.truncf %58 : vector<16x8xf32> to vector<16x8xbf16>
    %cst_25 = arith.constant dense<0.000000e+00> : vector<16x8xf32>
    %75 = tpu.matmul %73, %74, %cst_25 {dimension_numbers = #tpu.dot_dimension_numbers<[1], [0], [0], [1], [0, 0, 1, 1], [], []>} : vector<16x16xbf16>, vector<16x8xbf16>, vector<16x8xf32> -> vector<16x8xf32>
    %76 = vector.extract_strided_slice %9 {offsets = [0, 24], sizes = [16, 8], strides = [1, 1]} : vector<16x32xf32> to vector<16x8xf32>
    %77 = vector.extract_strided_slice %15 {offsets = [0, 24], sizes = [16, 8], strides = [1, 1]} : vector<16x64xf32> to vector<16x8xf32>
    %78 = vector.extract_strided_slice %15 {offsets = [0, 56], sizes = [16, 8], strides = [1, 1]} : vector<16x64xf32> to vector<16x8xf32>
    %79 = arith.truncf %76 : vector<16x8xf32> to vector<16x8xbf16>
    %80 = arith.truncf %77 : vector<16x8xf32> to vector<16x8xbf16>
    %cst_26 = arith.constant dense<0.000000e+00> : vector<16x16xf32>
    %81 = tpu.matmul %79, %80, %cst_26 {dimension_numbers = #tpu.dot_dimension_numbers<[1], [1], [0], [0], [0, 0, 1, 0], [], []>} : vector<16x8xbf16>, vector<16x8xbf16>, vector<16x16xf32> -> vector<16x16xf32>
    %82 = arith.addf %81, %2 : vector<16x16xf32>
    %cst_27 = arith.constant dense<0xFF800000> : vector<16xf32>
    %83 = vector.multi_reduction <maximumf>, %82, %cst_27 [1] : vector<16x16xf32> to vector<16xf32>
    %84 = vector.shape_cast %83 : vector<16xf32> to vector<16x1xf32>
    %85 = vector.broadcast %84 : vector<16x1xf32> to vector<16x16xf32>
    %86 = arith.subf %82, %85 : vector<16x16xf32>
    %87 = math.exp %86 : vector<16x16xf32>
    %cst_28 = arith.constant dense<0.000000e+00> : vector<16xf32>
    %88 = vector.multi_reduction <add>, %87, %cst_28 [1] : vector<16x16xf32> to vector<16xf32>
    %89 = vector.shape_cast %88 : vector<16xf32> to vector<16x1xf32>
    %90 = tpu.reciprocal %89 {approx = true} : vector<16x1xf32> -> vector<16x1xf32>
    %91 = vector.broadcast %90 : vector<16x1xf32> to vector<16x16xf32>
    %92 = arith.mulf %87, %91 : vector<16x16xf32>
    %93 = arith.truncf %92 : vector<16x16xf32> to vector<16x16xbf16>
    %94 = arith.truncf %78 : vector<16x8xf32> to vector<16x8xbf16>
    %cst_29 = arith.constant dense<0.000000e+00> : vector<16x8xf32>
    %95 = tpu.matmul %93, %94, %cst_29 {dimension_numbers = #tpu.dot_dimension_numbers<[1], [0], [0], [1], [0, 0, 1, 1], [], []>} : vector<16x16xbf16>, vector<16x8xbf16>, vector<16x8xf32> -> vector<16x8xf32>
    %96 = tpu.concatenate %35, %55, %75, %95 in 1 : vector<16x8xf32>, vector<16x8xf32>, vector<16x8xf32>, vector<16x8xf32> -> vector<16x32xf32>
    %c32_30 = arith.constant 32 : index
    %c0_31 = arith.constant 0 : index
    %97 = vector.load %arg2[%c32_30, %c0_31] : memref<608x128xbf16, #tpu.memory_space<vmem>>, vector<32x32xbf16>
    %98 = arith.truncf %96 : vector<16x32xf32> to vector<16x32xbf16>
    %cst_32 = arith.constant dense<0.000000e+00> : vector<16x32xf32>
    %99 = tpu.matmul %98, %97, %cst_32 {dimension_numbers = #tpu.dot_dimension_numbers<[1], [0], [0], [1], [0, 0, 1, 1], [], []>} : vector<16x32xbf16>, vector<32x32xbf16>, vector<16x32xf32> -> vector<16x32xf32>
    %c1 = arith.constant 1 : index
    %c0_33 = arith.constant 0 : index
    %100 = vector.load %arg3[%c1, %c0_33] : memref<32x128xf32, #tpu.memory_space<vmem>>, vector<1x32xf32>
    %101 = vector.broadcast %100 : vector<1x32xf32> to vector<16x32xf32>
    %102 = arith.addf %99, %101 : vector<16x32xf32>
    %103 = arith.addf %0, %102 : vector<16x32xf32>
    %c6 = arith.constant 6 : index
    %c0_34 = arith.constant 0 : index
    %104 = vector.load %arg3[%c6, %c0_34] : memref<32x128xf32, #tpu.memory_space<vmem>>, vector<1x32xf32>
    %c7 = arith.constant 7 : index
    %c0_35 = arith.constant 0 : index
    %105 = vector.load %arg3[%c7, %c0_35] : memref<32x128xf32, #tpu.memory_space<vmem>>, vector<1x32xf32>
    %cst_36 = arith.constant dense<0.000000e+00> : vector<16xf32>
    %106 = vector.multi_reduction <add>, %103, %cst_36 [1] : vector<16x32xf32> to vector<16xf32>
    %107 = vector.shape_cast %106 : vector<16xf32> to vector<16x1xf32>
    %cst_37 = arith.constant 3.200000e+01 : f32
    %108 = vector.broadcast %cst_37 : f32 to vector<16x1xf32>
    %109 = arith.divf %107, %108 : vector<16x1xf32>
    %110 = vector.broadcast %109 : vector<16x1xf32> to vector<16x32xf32>
    %111 = arith.subf %103, %110 : vector<16x32xf32>
    %112 = arith.mulf %111, %111 : vector<16x32xf32>
    %cst_38 = arith.constant dense<0.000000e+00> : vector<16xf32>
    %113 = vector.multi_reduction <add>, %112, %cst_38 [1] : vector<16x32xf32> to vector<16xf32>
    %114 = vector.shape_cast %113 : vector<16xf32> to vector<16x1xf32>
    %cst_39 = arith.constant 3.200000e+01 : f32
    %115 = vector.broadcast %cst_39 : f32 to vector<16x1xf32>
    %116 = arith.divf %114, %115 : vector<16x1xf32>
    %117 = vector.broadcast %109 : vector<16x1xf32> to vector<16x32xf32>
    %118 = arith.subf %103, %117 : vector<16x32xf32>
    %cst_40 = arith.constant 9.99999974E-6 : f32
    %119 = vector.broadcast %cst_40 : f32 to vector<16x1xf32>
    %120 = arith.addf %116, %119 : vector<16x1xf32>
    %121 = math.rsqrt %120 : vector<16x1xf32>
    %122 = vector.broadcast %121 : vector<16x1xf32> to vector<16x32xf32>
    %123 = arith.mulf %118, %122 : vector<16x32xf32>
    %124 = vector.broadcast %104 : vector<1x32xf32> to vector<16x32xf32>
    %125 = arith.mulf %123, %124 : vector<16x32xf32>
    %126 = vector.broadcast %105 : vector<1x32xf32> to vector<16x32xf32>
    %127 = arith.addf %125, %126 : vector<16x32xf32>
    %c64 = arith.constant 64 : index
    %c0_41 = arith.constant 0 : index
    %128 = vector.load %arg2[%c64, %c0_41] : memref<608x128xbf16, #tpu.memory_space<vmem>>, vector<32x32xbf16>
    %129 = arith.truncf %127 : vector<16x32xf32> to vector<16x32xbf16>
    %cst_42 = arith.constant dense<0.000000e+00> : vector<16x32xf32>
    %130 = tpu.matmul %129, %128, %cst_42 {dimension_numbers = #tpu.dot_dimension_numbers<[1], [0], [0], [1], [0, 0, 1, 1], [], []>} : vector<16x32xbf16>, vector<32x32xbf16>, vector<16x32xf32> -> vector<16x32xf32>
    %c2 = arith.constant 2 : index
    %c0_43 = arith.constant 0 : index
    %131 = vector.load %arg3[%c2, %c0_43] : memref<32x128xf32, #tpu.memory_space<vmem>>, vector<1x32xf32>
    %132 = vector.broadcast %131 : vector<1x32xf32> to vector<16x32xf32>
    %133 = arith.addf %130, %132 : vector<16x32xf32>
    %c64_44 = arith.constant 64 : index
    %c32_45 = arith.constant 32 : index
    %134 = vector.load %arg2[%c64_44, %c32_45] : memref<608x128xbf16, #tpu.memory_space<vmem>>, vector<32x64xbf16>
    %135 = arith.truncf %1 : vector<16x32xf32> to vector<16x32xbf16>
    %cst_46 = arith.constant dense<0.000000e+00> : vector<16x64xf32>
    %136 = tpu.matmul %135, %134, %cst_46 {dimension_numbers = #tpu.dot_dimension_numbers<[1], [0], [0], [1], [0, 0, 1, 1], [], []>} : vector<16x32xbf16>, vector<32x64xbf16>, vector<16x64xf32> -> vector<16x64xf32>
    %c2_47 = arith.constant 2 : index
    %c32_48 = arith.constant 32 : index
    %137 = vector.load %arg3[%c2_47, %c32_48] : memref<32x128xf32, #tpu.memory_space<vmem>>, vector<1x64xf32>
    %138 = vector.broadcast %137 : vector<1x64xf32> to vector<16x64xf32>
    %139 = arith.addf %136, %138 : vector<16x64xf32>
    %140 = vector.extract_strided_slice %133 {offsets = [0, 0], sizes = [16, 8], strides = [1, 1]} : vector<16x32xf32> to vector<16x8xf32>
    %141 = vector.extract_strided_slice %139 {offsets = [0, 0], sizes = [16, 8], strides = [1, 1]} : vector<16x64xf32> to vector<16x8xf32>
    %142 = vector.extract_strided_slice %139 {offsets = [0, 32], sizes = [16, 8], strides = [1, 1]} : vector<16x64xf32> to vector<16x8xf32>
    %143 = arith.truncf %140 : vector<16x8xf32> to vector<16x8xbf16>
    %144 = arith.truncf %141 : vector<16x8xf32> to vector<16x8xbf16>
    %cst_49 = arith.constant dense<0.000000e+00> : vector<16x16xf32>
    %145 = tpu.matmul %143, %144, %cst_49 {dimension_numbers = #tpu.dot_dimension_numbers<[1], [1], [0], [0], [0, 0, 1, 0], [], []>} : vector<16x8xbf16>, vector<16x8xbf16>, vector<16x16xf32> -> vector<16x16xf32>
    %146 = arith.addf %145, %3 : vector<16x16xf32>
    %cst_50 = arith.constant dense<0xFF800000> : vector<16xf32>
    %147 = vector.multi_reduction <maximumf>, %146, %cst_50 [1] : vector<16x16xf32> to vector<16xf32>
    %148 = vector.shape_cast %147 : vector<16xf32> to vector<16x1xf32>
    %149 = vector.broadcast %148 : vector<16x1xf32> to vector<16x16xf32>
    %150 = arith.subf %146, %149 : vector<16x16xf32>
    %151 = math.exp %150 : vector<16x16xf32>
    %cst_51 = arith.constant dense<0.000000e+00> : vector<16xf32>
    %152 = vector.multi_reduction <add>, %151, %cst_51 [1] : vector<16x16xf32> to vector<16xf32>
    %153 = vector.shape_cast %152 : vector<16xf32> to vector<16x1xf32>
    %154 = tpu.reciprocal %153 {approx = true} : vector<16x1xf32> -> vector<16x1xf32>
    %155 = vector.broadcast %154 : vector<16x1xf32> to vector<16x16xf32>
    %156 = arith.mulf %151, %155 : vector<16x16xf32>
    %157 = arith.truncf %156 : vector<16x16xf32> to vector<16x16xbf16>
    %158 = arith.truncf %142 : vector<16x8xf32> to vector<16x8xbf16>
    %cst_52 = arith.constant dense<0.000000e+00> : vector<16x8xf32>
    %159 = tpu.matmul %157, %158, %cst_52 {dimension_numbers = #tpu.dot_dimension_numbers<[1], [0], [0], [1], [0, 0, 1, 1], [], []>} : vector<16x16xbf16>, vector<16x8xbf16>, vector<16x8xf32> -> vector<16x8xf32>
    %160 = vector.extract_strided_slice %133 {offsets = [0, 8], sizes = [16, 8], strides = [1, 1]} : vector<16x32xf32> to vector<16x8xf32>
    %161 = vector.extract_strided_slice %139 {offsets = [0, 8], sizes = [16, 8], strides = [1, 1]} : vector<16x64xf32> to vector<16x8xf32>
    %162 = vector.extract_strided_slice %139 {offsets = [0, 40], sizes = [16, 8], strides = [1, 1]} : vector<16x64xf32> to vector<16x8xf32>
    %163 = arith.truncf %160 : vector<16x8xf32> to vector<16x8xbf16>
    %164 = arith.truncf %161 : vector<16x8xf32> to vector<16x8xbf16>
    %cst_53 = arith.constant dense<0.000000e+00> : vector<16x16xf32>
    %165 = tpu.matmul %163, %164, %cst_53 {dimension_numbers = #tpu.dot_dimension_numbers<[1], [1], [0], [0], [0, 0, 1, 0], [], []>} : vector<16x8xbf16>, vector<16x8xbf16>, vector<16x16xf32> -> vector<16x16xf32>
    %166 = arith.addf %165, %3 : vector<16x16xf32>
    %cst_54 = arith.constant dense<0xFF800000> : vector<16xf32>
    %167 = vector.multi_reduction <maximumf>, %166, %cst_54 [1] : vector<16x16xf32> to vector<16xf32>
    %168 = vector.shape_cast %167 : vector<16xf32> to vector<16x1xf32>
    %169 = vector.broadcast %168 : vector<16x1xf32> to vector<16x16xf32>
    %170 = arith.subf %166, %169 : vector<16x16xf32>
    %171 = math.exp %170 : vector<16x16xf32>
    %cst_55 = arith.constant dense<0.000000e+00> : vector<16xf32>
    %172 = vector.multi_reduction <add>, %171, %cst_55 [1] : vector<16x16xf32> to vector<16xf32>
    %173 = vector.shape_cast %172 : vector<16xf32> to vector<16x1xf32>
    %174 = tpu.reciprocal %173 {approx = true} : vector<16x1xf32> -> vector<16x1xf32>
    %175 = vector.broadcast %174 : vector<16x1xf32> to vector<16x16xf32>
    %176 = arith.mulf %171, %175 : vector<16x16xf32>
    %177 = arith.truncf %176 : vector<16x16xf32> to vector<16x16xbf16>
    %178 = arith.truncf %162 : vector<16x8xf32> to vector<16x8xbf16>
    %cst_56 = arith.constant dense<0.000000e+00> : vector<16x8xf32>
    %179 = tpu.matmul %177, %178, %cst_56 {dimension_numbers = #tpu.dot_dimension_numbers<[1], [0], [0], [1], [0, 0, 1, 1], [], []>} : vector<16x16xbf16>, vector<16x8xbf16>, vector<16x8xf32> -> vector<16x8xf32>
    %180 = vector.extract_strided_slice %133 {offsets = [0, 16], sizes = [16, 8], strides = [1, 1]} : vector<16x32xf32> to vector<16x8xf32>
    %181 = vector.extract_strided_slice %139 {offsets = [0, 16], sizes = [16, 8], strides = [1, 1]} : vector<16x64xf32> to vector<16x8xf32>
    %182 = vector.extract_strided_slice %139 {offsets = [0, 48], sizes = [16, 8], strides = [1, 1]} : vector<16x64xf32> to vector<16x8xf32>
    %183 = arith.truncf %180 : vector<16x8xf32> to vector<16x8xbf16>
    %184 = arith.truncf %181 : vector<16x8xf32> to vector<16x8xbf16>
    %cst_57 = arith.constant dense<0.000000e+00> : vector<16x16xf32>
    %185 = tpu.matmul %183, %184, %cst_57 {dimension_numbers = #tpu.dot_dimension_numbers<[1], [1], [0], [0], [0, 0, 1, 0], [], []>} : vector<16x8xbf16>, vector<16x8xbf16>, vector<16x16xf32> -> vector<16x16xf32>
    %186 = arith.addf %185, %3 : vector<16x16xf32>
    %cst_58 = arith.constant dense<0xFF800000> : vector<16xf32>
    %187 = vector.multi_reduction <maximumf>, %186, %cst_58 [1] : vector<16x16xf32> to vector<16xf32>
    %188 = vector.shape_cast %187 : vector<16xf32> to vector<16x1xf32>
    %189 = vector.broadcast %188 : vector<16x1xf32> to vector<16x16xf32>
    %190 = arith.subf %186, %189 : vector<16x16xf32>
    %191 = math.exp %190 : vector<16x16xf32>
    %cst_59 = arith.constant dense<0.000000e+00> : vector<16xf32>
    %192 = vector.multi_reduction <add>, %191, %cst_59 [1] : vector<16x16xf32> to vector<16xf32>
    %193 = vector.shape_cast %192 : vector<16xf32> to vector<16x1xf32>
    %194 = tpu.reciprocal %193 {approx = true} : vector<16x1xf32> -> vector<16x1xf32>
    %195 = vector.broadcast %194 : vector<16x1xf32> to vector<16x16xf32>
    %196 = arith.mulf %191, %195 : vector<16x16xf32>
    %197 = arith.truncf %196 : vector<16x16xf32> to vector<16x16xbf16>
    %198 = arith.truncf %182 : vector<16x8xf32> to vector<16x8xbf16>
    %cst_60 = arith.constant dense<0.000000e+00> : vector<16x8xf32>
    %199 = tpu.matmul %197, %198, %cst_60 {dimension_numbers = #tpu.dot_dimension_numbers<[1], [0], [0], [1], [0, 0, 1, 1], [], []>} : vector<16x16xbf16>, vector<16x8xbf16>, vector<16x8xf32> -> vector<16x8xf32>
    %200 = vector.extract_strided_slice %133 {offsets = [0, 24], sizes = [16, 8], strides = [1, 1]} : vector<16x32xf32> to vector<16x8xf32>
    %201 = vector.extract_strided_slice %139 {offsets = [0, 24], sizes = [16, 8], strides = [1, 1]} : vector<16x64xf32> to vector<16x8xf32>
    %202 = vector.extract_strided_slice %139 {offsets = [0, 56], sizes = [16, 8], strides = [1, 1]} : vector<16x64xf32> to vector<16x8xf32>
    %203 = arith.truncf %200 : vector<16x8xf32> to vector<16x8xbf16>
    %204 = arith.truncf %201 : vector<16x8xf32> to vector<16x8xbf16>
    %cst_61 = arith.constant dense<0.000000e+00> : vector<16x16xf32>
    %205 = tpu.matmul %203, %204, %cst_61 {dimension_numbers = #tpu.dot_dimension_numbers<[1], [1], [0], [0], [0, 0, 1, 0], [], []>} : vector<16x8xbf16>, vector<16x8xbf16>, vector<16x16xf32> -> vector<16x16xf32>
    %206 = arith.addf %205, %3 : vector<16x16xf32>
    %cst_62 = arith.constant dense<0xFF800000> : vector<16xf32>
    %207 = vector.multi_reduction <maximumf>, %206, %cst_62 [1] : vector<16x16xf32> to vector<16xf32>
    %208 = vector.shape_cast %207 : vector<16xf32> to vector<16x1xf32>
    %209 = vector.broadcast %208 : vector<16x1xf32> to vector<16x16xf32>
    %210 = arith.subf %206, %209 : vector<16x16xf32>
    %211 = math.exp %210 : vector<16x16xf32>
    %cst_63 = arith.constant dense<0.000000e+00> : vector<16xf32>
    %212 = vector.multi_reduction <add>, %211, %cst_63 [1] : vector<16x16xf32> to vector<16xf32>
    %213 = vector.shape_cast %212 : vector<16xf32> to vector<16x1xf32>
    %214 = tpu.reciprocal %213 {approx = true} : vector<16x1xf32> -> vector<16x1xf32>
    %215 = vector.broadcast %214 : vector<16x1xf32> to vector<16x16xf32>
    %216 = arith.mulf %211, %215 : vector<16x16xf32>
    %217 = arith.truncf %216 : vector<16x16xf32> to vector<16x16xbf16>
    %218 = arith.truncf %202 : vector<16x8xf32> to vector<16x8xbf16>
    %cst_64 = arith.constant dense<0.000000e+00> : vector<16x8xf32>
    %219 = tpu.matmul %217, %218, %cst_64 {dimension_numbers = #tpu.dot_dimension_numbers<[1], [0], [0], [1], [0, 0, 1, 1], [], []>} : vector<16x16xbf16>, vector<16x8xbf16>, vector<16x8xf32> -> vector<16x8xf32>
    %220 = tpu.concatenate %159, %179, %199, %219 in 1 : vector<16x8xf32>, vector<16x8xf32>, vector<16x8xf32>, vector<16x8xf32> -> vector<16x32xf32>
    %c96 = arith.constant 96 : index
    %c0_65 = arith.constant 0 : index
    %221 = vector.load %arg2[%c96, %c0_65] : memref<608x128xbf16, #tpu.memory_space<vmem>>, vector<32x32xbf16>
    %222 = arith.truncf %220 : vector<16x32xf32> to vector<16x32xbf16>
    %cst_66 = arith.constant dense<0.000000e+00> : vector<16x32xf32>
    %223 = tpu.matmul %222, %221, %cst_66 {dimension_numbers = #tpu.dot_dimension_numbers<[1], [0], [0], [1], [0, 0, 1, 1], [], []>} : vector<16x32xbf16>, vector<32x32xbf16>, vector<16x32xf32> -> vector<16x32xf32>
    %c3 = arith.constant 3 : index
    %c0_67 = arith.constant 0 : index
    %224 = vector.load %arg3[%c3, %c0_67] : memref<32x128xf32, #tpu.memory_space<vmem>>, vector<1x32xf32>
    %225 = vector.broadcast %224 : vector<1x32xf32> to vector<16x32xf32>
    %226 = arith.addf %223, %225 : vector<16x32xf32>
    %227 = arith.addf %127, %226 : vector<16x32xf32>
    %c8 = arith.constant 8 : index
    %c0_68 = arith.constant 0 : index
    %228 = vector.load %arg3[%c8, %c0_68] : memref<32x128xf32, #tpu.memory_space<vmem>>, vector<1x32xf32>
    %c9 = arith.constant 9 : index
    %c0_69 = arith.constant 0 : index
    %229 = vector.load %arg3[%c9, %c0_69] : memref<32x128xf32, #tpu.memory_space<vmem>>, vector<1x32xf32>
    %cst_70 = arith.constant dense<0.000000e+00> : vector<16xf32>
    %230 = vector.multi_reduction <add>, %227, %cst_70 [1] : vector<16x32xf32> to vector<16xf32>
    %231 = vector.shape_cast %230 : vector<16xf32> to vector<16x1xf32>
    %cst_71 = arith.constant 3.200000e+01 : f32
    %232 = vector.broadcast %cst_71 : f32 to vector<16x1xf32>
    %233 = arith.divf %231, %232 : vector<16x1xf32>
    %234 = vector.broadcast %233 : vector<16x1xf32> to vector<16x32xf32>
    %235 = arith.subf %227, %234 : vector<16x32xf32>
    %236 = arith.mulf %235, %235 : vector<16x32xf32>
    %cst_72 = arith.constant dense<0.000000e+00> : vector<16xf32>
    %237 = vector.multi_reduction <add>, %236, %cst_72 [1] : vector<16x32xf32> to vector<16xf32>
    %238 = vector.shape_cast %237 : vector<16xf32> to vector<16x1xf32>
    %cst_73 = arith.constant 3.200000e+01 : f32
    %239 = vector.broadcast %cst_73 : f32 to vector<16x1xf32>
    %240 = arith.divf %238, %239 : vector<16x1xf32>
    %241 = vector.broadcast %233 : vector<16x1xf32> to vector<16x32xf32>
    %242 = arith.subf %227, %241 : vector<16x32xf32>
    %cst_74 = arith.constant 9.99999974E-6 : f32
    %243 = vector.broadcast %cst_74 : f32 to vector<16x1xf32>
    %244 = arith.addf %240, %243 : vector<16x1xf32>
    %245 = math.rsqrt %244 : vector<16x1xf32>
    %246 = vector.broadcast %245 : vector<16x1xf32> to vector<16x32xf32>
    %247 = arith.mulf %242, %246 : vector<16x32xf32>
    %248 = vector.broadcast %228 : vector<1x32xf32> to vector<16x32xf32>
    %249 = arith.mulf %247, %248 : vector<16x32xf32>
    %250 = vector.broadcast %229 : vector<1x32xf32> to vector<16x32xf32>
    %251 = arith.addf %249, %250 : vector<16x32xf32>
    %c128 = arith.constant 128 : index
    %c0_75 = arith.constant 0 : index
    %252 = vector.load %arg2[%c128, %c0_75] : memref<608x128xbf16, #tpu.memory_space<vmem>>, vector<32x128xbf16>
    %253 = arith.truncf %251 : vector<16x32xf32> to vector<16x32xbf16>
    %cst_76 = arith.constant dense<0.000000e+00> : vector<16x128xf32>
    %254 = tpu.matmul %253, %252, %cst_76 {dimension_numbers = #tpu.dot_dimension_numbers<[1], [0], [0], [1], [0, 0, 1, 1], [], []>} : vector<16x32xbf16>, vector<32x128xbf16>, vector<16x128xf32> -> vector<16x128xf32>
    %c4 = arith.constant 4 : index
    %c0_77 = arith.constant 0 : index
    %255 = vector.load %arg3[%c4, %c0_77] : memref<32x128xf32, #tpu.memory_space<vmem>>, vector<1x128xf32>
    %256 = vector.broadcast %255 : vector<1x128xf32> to vector<16x128xf32>
    %257 = arith.addf %254, %256 : vector<16x128xf32>
    %cst_78 = arith.constant 0.000000e+00 : f32
    %258 = vector.broadcast %cst_78 : f32 to vector<16x128xf32>
    %259 = arith.maximumf %257, %258 : vector<16x128xf32>
    %c160 = arith.constant 160 : index
    %c0_79 = arith.constant 0 : index
    %260 = vector.load %arg2[%c160, %c0_79] : memref<608x128xbf16, #tpu.memory_space<vmem>>, vector<128x32xbf16>
    %261 = arith.truncf %259 : vector<16x128xf32> to vector<16x128xbf16>
    %cst_80 = arith.constant dense<0.000000e+00> : vector<16x32xf32>
    %262 = tpu.matmul %261, %260, %cst_80 {dimension_numbers = #tpu.dot_dimension_numbers<[1], [0], [0], [1], [0, 0, 1, 1], [], []>} : vector<16x128xbf16>, vector<128x32xbf16>, vector<16x32xf32> -> vector<16x32xf32>
    %c5 = arith.constant 5 : index
    %c0_81 = arith.constant 0 : index
    %263 = vector.load %arg3[%c5, %c0_81] : memref<32x128xf32, #tpu.memory_space<vmem>>, vector<1x32xf32>
    %264 = vector.broadcast %263 : vector<1x32xf32> to vector<16x32xf32>
    %265 = arith.addf %262, %264 : vector<16x32xf32>
    %266 = arith.addf %251, %265 : vector<16x32xf32>
    %c10 = arith.constant 10 : index
    %c0_82 = arith.constant 0 : index
    %267 = vector.load %arg3[%c10, %c0_82] : memref<32x128xf32, #tpu.memory_space<vmem>>, vector<1x32xf32>
    %c11 = arith.constant 11 : index
    %c0_83 = arith.constant 0 : index
    %268 = vector.load %arg3[%c11, %c0_83] : memref<32x128xf32, #tpu.memory_space<vmem>>, vector<1x32xf32>
    %cst_84 = arith.constant dense<0.000000e+00> : vector<16xf32>
    %269 = vector.multi_reduction <add>, %266, %cst_84 [1] : vector<16x32xf32> to vector<16xf32>
    %270 = vector.shape_cast %269 : vector<16xf32> to vector<16x1xf32>
    %cst_85 = arith.constant 3.200000e+01 : f32
    %271 = vector.broadcast %cst_85 : f32 to vector<16x1xf32>
    %272 = arith.divf %270, %271 : vector<16x1xf32>
    %273 = vector.broadcast %272 : vector<16x1xf32> to vector<16x32xf32>
    %274 = arith.subf %266, %273 : vector<16x32xf32>
    %275 = arith.mulf %274, %274 : vector<16x32xf32>
    %cst_86 = arith.constant dense<0.000000e+00> : vector<16xf32>
    %276 = vector.multi_reduction <add>, %275, %cst_86 [1] : vector<16x32xf32> to vector<16xf32>
    %277 = vector.shape_cast %276 : vector<16xf32> to vector<16x1xf32>
    %cst_87 = arith.constant 3.200000e+01 : f32
    %278 = vector.broadcast %cst_87 : f32 to vector<16x1xf32>
    %279 = arith.divf %277, %278 : vector<16x1xf32>
    %280 = vector.broadcast %272 : vector<16x1xf32> to vector<16x32xf32>
    %281 = arith.subf %266, %280 : vector<16x32xf32>
    %cst_88 = arith.constant 9.99999974E-6 : f32
    %282 = vector.broadcast %cst_88 : f32 to vector<16x1xf32>
    %283 = arith.addf %279, %282 : vector<16x1xf32>
    %284 = math.rsqrt %283 : vector<16x1xf32>
    %285 = vector.broadcast %284 : vector<16x1xf32> to vector<16x32xf32>
    %286 = arith.mulf %281, %285 : vector<16x32xf32>
    %287 = vector.broadcast %267 : vector<1x32xf32> to vector<16x32xf32>
    %288 = arith.mulf %286, %287 : vector<16x32xf32>
    %289 = vector.broadcast %268 : vector<1x32xf32> to vector<16x32xf32>
    %290 = arith.addf %288, %289 : vector<16x32xf32>
    %c288 = arith.constant 288 : index
    %c0_89 = arith.constant 0 : index
    %291 = vector.load %arg2[%c288, %c0_89] : memref<608x128xbf16, #tpu.memory_space<vmem>>, vector<32x32xbf16>
    %292 = arith.truncf %290 : vector<16x32xf32> to vector<16x32xbf16>
    %cst_90 = arith.constant dense<0.000000e+00> : vector<16x32xf32>
    %293 = tpu.matmul %292, %291, %cst_90 {dimension_numbers = #tpu.dot_dimension_numbers<[1], [0], [0], [1], [0, 0, 1, 1], [], []>} : vector<16x32xbf16>, vector<32x32xbf16>, vector<16x32xf32> -> vector<16x32xf32>
    %c12 = arith.constant 12 : index
    %c0_91 = arith.constant 0 : index
    %294 = vector.load %arg3[%c12, %c0_91] : memref<32x128xf32, #tpu.memory_space<vmem>>, vector<1x32xf32>
    %295 = vector.broadcast %294 : vector<1x32xf32> to vector<16x32xf32>
    %296 = arith.addf %293, %295 : vector<16x32xf32>
    %c288_92 = arith.constant 288 : index
    %c32_93 = arith.constant 32 : index
    %297 = vector.load %arg2[%c288_92, %c32_93] : memref<608x128xbf16, #tpu.memory_space<vmem>>, vector<32x64xbf16>
    %298 = arith.truncf %290 : vector<16x32xf32> to vector<16x32xbf16>
    %cst_94 = arith.constant dense<0.000000e+00> : vector<16x64xf32>
    %299 = tpu.matmul %298, %297, %cst_94 {dimension_numbers = #tpu.dot_dimension_numbers<[1], [0], [0], [1], [0, 0, 1, 1], [], []>} : vector<16x32xbf16>, vector<32x64xbf16>, vector<16x64xf32> -> vector<16x64xf32>
    %c12_95 = arith.constant 12 : index
    %c32_96 = arith.constant 32 : index
    %300 = vector.load %arg3[%c12_95, %c32_96] : memref<32x128xf32, #tpu.memory_space<vmem>>, vector<1x64xf32>
    %301 = vector.broadcast %300 : vector<1x64xf32> to vector<16x64xf32>
    %302 = arith.addf %299, %301 : vector<16x64xf32>
    %303 = vector.extract_strided_slice %296 {offsets = [0, 0], sizes = [16, 8], strides = [1, 1]} : vector<16x32xf32> to vector<16x8xf32>
    %304 = vector.extract_strided_slice %302 {offsets = [0, 0], sizes = [16, 8], strides = [1, 1]} : vector<16x64xf32> to vector<16x8xf32>
    %305 = vector.extract_strided_slice %302 {offsets = [0, 32], sizes = [16, 8], strides = [1, 1]} : vector<16x64xf32> to vector<16x8xf32>
    %306 = arith.truncf %303 : vector<16x8xf32> to vector<16x8xbf16>
    %307 = arith.truncf %304 : vector<16x8xf32> to vector<16x8xbf16>
    %cst_97 = arith.constant dense<0.000000e+00> : vector<16x16xf32>
    %308 = tpu.matmul %306, %307, %cst_97 {dimension_numbers = #tpu.dot_dimension_numbers<[1], [1], [0], [0], [0, 0, 1, 0], [], []>} : vector<16x8xbf16>, vector<16x8xbf16>, vector<16x16xf32> -> vector<16x16xf32>
    %309 = arith.addf %308, %2 : vector<16x16xf32>
    %cst_98 = arith.constant dense<0xFF800000> : vector<16xf32>
    %310 = vector.multi_reduction <maximumf>, %309, %cst_98 [1] : vector<16x16xf32> to vector<16xf32>
    %311 = vector.shape_cast %310 : vector<16xf32> to vector<16x1xf32>
    %312 = vector.broadcast %311 : vector<16x1xf32> to vector<16x16xf32>
    %313 = arith.subf %309, %312 : vector<16x16xf32>
    %314 = math.exp %313 : vector<16x16xf32>
    %cst_99 = arith.constant dense<0.000000e+00> : vector<16xf32>
    %315 = vector.multi_reduction <add>, %314, %cst_99 [1] : vector<16x16xf32> to vector<16xf32>
    %316 = vector.shape_cast %315 : vector<16xf32> to vector<16x1xf32>
    %317 = tpu.reciprocal %316 {approx = true} : vector<16x1xf32> -> vector<16x1xf32>
    %318 = vector.broadcast %317 : vector<16x1xf32> to vector<16x16xf32>
    %319 = arith.mulf %314, %318 : vector<16x16xf32>
    %320 = arith.truncf %319 : vector<16x16xf32> to vector<16x16xbf16>
    %321 = arith.truncf %305 : vector<16x8xf32> to vector<16x8xbf16>
    %cst_100 = arith.constant dense<0.000000e+00> : vector<16x8xf32>
    %322 = tpu.matmul %320, %321, %cst_100 {dimension_numbers = #tpu.dot_dimension_numbers<[1], [0], [0], [1], [0, 0, 1, 1], [], []>} : vector<16x16xbf16>, vector<16x8xbf16>, vector<16x8xf32> -> vector<16x8xf32>
    %323 = vector.extract_strided_slice %296 {offsets = [0, 8], sizes = [16, 8], strides = [1, 1]} : vector<16x32xf32> to vector<16x8xf32>
    %324 = vector.extract_strided_slice %302 {offsets = [0, 8], sizes = [16, 8], strides = [1, 1]} : vector<16x64xf32> to vector<16x8xf32>
    %325 = vector.extract_strided_slice %302 {offsets = [0, 40], sizes = [16, 8], strides = [1, 1]} : vector<16x64xf32> to vector<16x8xf32>
    %326 = arith.truncf %323 : vector<16x8xf32> to vector<16x8xbf16>
    %327 = arith.truncf %324 : vector<16x8xf32> to vector<16x8xbf16>
    %cst_101 = arith.constant dense<0.000000e+00> : vector<16x16xf32>
    %328 = tpu.matmul %326, %327, %cst_101 {dimension_numbers = #tpu.dot_dimension_numbers<[1], [1], [0], [0], [0, 0, 1, 0], [], []>} : vector<16x8xbf16>, vector<16x8xbf16>, vector<16x16xf32> -> vector<16x16xf32>
    %329 = arith.addf %328, %2 : vector<16x16xf32>
    %cst_102 = arith.constant dense<0xFF800000> : vector<16xf32>
    %330 = vector.multi_reduction <maximumf>, %329, %cst_102 [1] : vector<16x16xf32> to vector<16xf32>
    %331 = vector.shape_cast %330 : vector<16xf32> to vector<16x1xf32>
    %332 = vector.broadcast %331 : vector<16x1xf32> to vector<16x16xf32>
    %333 = arith.subf %329, %332 : vector<16x16xf32>
    %334 = math.exp %333 : vector<16x16xf32>
    %cst_103 = arith.constant dense<0.000000e+00> : vector<16xf32>
    %335 = vector.multi_reduction <add>, %334, %cst_103 [1] : vector<16x16xf32> to vector<16xf32>
    %336 = vector.shape_cast %335 : vector<16xf32> to vector<16x1xf32>
    %337 = tpu.reciprocal %336 {approx = true} : vector<16x1xf32> -> vector<16x1xf32>
    %338 = vector.broadcast %337 : vector<16x1xf32> to vector<16x16xf32>
    %339 = arith.mulf %334, %338 : vector<16x16xf32>
    %340 = arith.truncf %339 : vector<16x16xf32> to vector<16x16xbf16>
    %341 = arith.truncf %325 : vector<16x8xf32> to vector<16x8xbf16>
    %cst_104 = arith.constant dense<0.000000e+00> : vector<16x8xf32>
    %342 = tpu.matmul %340, %341, %cst_104 {dimension_numbers = #tpu.dot_dimension_numbers<[1], [0], [0], [1], [0, 0, 1, 1], [], []>} : vector<16x16xbf16>, vector<16x8xbf16>, vector<16x8xf32> -> vector<16x8xf32>
    %343 = vector.extract_strided_slice %296 {offsets = [0, 16], sizes = [16, 8], strides = [1, 1]} : vector<16x32xf32> to vector<16x8xf32>
    %344 = vector.extract_strided_slice %302 {offsets = [0, 16], sizes = [16, 8], strides = [1, 1]} : vector<16x64xf32> to vector<16x8xf32>
    %345 = vector.extract_strided_slice %302 {offsets = [0, 48], sizes = [16, 8], strides = [1, 1]} : vector<16x64xf32> to vector<16x8xf32>
    %346 = arith.truncf %343 : vector<16x8xf32> to vector<16x8xbf16>
    %347 = arith.truncf %344 : vector<16x8xf32> to vector<16x8xbf16>
    %cst_105 = arith.constant dense<0.000000e+00> : vector<16x16xf32>
    %348 = tpu.matmul %346, %347, %cst_105 {dimension_numbers = #tpu.dot_dimension_numbers<[1], [1], [0], [0], [0, 0, 1, 0], [], []>} : vector<16x8xbf16>, vector<16x8xbf16>, vector<16x16xf32> -> vector<16x16xf32>
    %349 = arith.addf %348, %2 : vector<16x16xf32>
    %cst_106 = arith.constant dense<0xFF800000> : vector<16xf32>
    %350 = vector.multi_reduction <maximumf>, %349, %cst_106 [1] : vector<16x16xf32> to vector<16xf32>
    %351 = vector.shape_cast %350 : vector<16xf32> to vector<16x1xf32>
    %352 = vector.broadcast %351 : vector<16x1xf32> to vector<16x16xf32>
    %353 = arith.subf %349, %352 : vector<16x16xf32>
    %354 = math.exp %353 : vector<16x16xf32>
    %cst_107 = arith.constant dense<0.000000e+00> : vector<16xf32>
    %355 = vector.multi_reduction <add>, %354, %cst_107 [1] : vector<16x16xf32> to vector<16xf32>
    %356 = vector.shape_cast %355 : vector<16xf32> to vector<16x1xf32>
    %357 = tpu.reciprocal %356 {approx = true} : vector<16x1xf32> -> vector<16x1xf32>
    %358 = vector.broadcast %357 : vector<16x1xf32> to vector<16x16xf32>
    %359 = arith.mulf %354, %358 : vector<16x16xf32>
    %360 = arith.truncf %359 : vector<16x16xf32> to vector<16x16xbf16>
    %361 = arith.truncf %345 : vector<16x8xf32> to vector<16x8xbf16>
    %cst_108 = arith.constant dense<0.000000e+00> : vector<16x8xf32>
    %362 = tpu.matmul %360, %361, %cst_108 {dimension_numbers = #tpu.dot_dimension_numbers<[1], [0], [0], [1], [0, 0, 1, 1], [], []>} : vector<16x16xbf16>, vector<16x8xbf16>, vector<16x8xf32> -> vector<16x8xf32>
    %363 = vector.extract_strided_slice %296 {offsets = [0, 24], sizes = [16, 8], strides = [1, 1]} : vector<16x32xf32> to vector<16x8xf32>
    %364 = vector.extract_strided_slice %302 {offsets = [0, 24], sizes = [16, 8], strides = [1, 1]} : vector<16x64xf32> to vector<16x8xf32>
    %365 = vector.extract_strided_slice %302 {offsets = [0, 56], sizes = [16, 8], strides = [1, 1]} : vector<16x64xf32> to vector<16x8xf32>
    %366 = arith.truncf %363 : vector<16x8xf32> to vector<16x8xbf16>
    %367 = arith.truncf %364 : vector<16x8xf32> to vector<16x8xbf16>
    %cst_109 = arith.constant dense<0.000000e+00> : vector<16x16xf32>
    %368 = tpu.matmul %366, %367, %cst_109 {dimension_numbers = #tpu.dot_dimension_numbers<[1], [1], [0], [0], [0, 0, 1, 0], [], []>} : vector<16x8xbf16>, vector<16x8xbf16>, vector<16x16xf32> -> vector<16x16xf32>
    %369 = arith.addf %368, %2 : vector<16x16xf32>
    %cst_110 = arith.constant dense<0xFF800000> : vector<16xf32>
    %370 = vector.multi_reduction <maximumf>, %369, %cst_110 [1] : vector<16x16xf32> to vector<16xf32>
    %371 = vector.shape_cast %370 : vector<16xf32> to vector<16x1xf32>
    %372 = vector.broadcast %371 : vector<16x1xf32> to vector<16x16xf32>
    %373 = arith.subf %369, %372 : vector<16x16xf32>
    %374 = math.exp %373 : vector<16x16xf32>
    %cst_111 = arith.constant dense<0.000000e+00> : vector<16xf32>
    %375 = vector.multi_reduction <add>, %374, %cst_111 [1] : vector<16x16xf32> to vector<16xf32>
    %376 = vector.shape_cast %375 : vector<16xf32> to vector<16x1xf32>
    %377 = tpu.reciprocal %376 {approx = true} : vector<16x1xf32> -> vector<16x1xf32>
    %378 = vector.broadcast %377 : vector<16x1xf32> to vector<16x16xf32>
    %379 = arith.mulf %374, %378 : vector<16x16xf32>
    %380 = arith.truncf %379 : vector<16x16xf32> to vector<16x16xbf16>
    %381 = arith.truncf %365 : vector<16x8xf32> to vector<16x8xbf16>
    %cst_112 = arith.constant dense<0.000000e+00> : vector<16x8xf32>
    %382 = tpu.matmul %380, %381, %cst_112 {dimension_numbers = #tpu.dot_dimension_numbers<[1], [0], [0], [1], [0, 0, 1, 1], [], []>} : vector<16x16xbf16>, vector<16x8xbf16>, vector<16x8xf32> -> vector<16x8xf32>
    %383 = tpu.concatenate %322, %342, %362, %382 in 1 : vector<16x8xf32>, vector<16x8xf32>, vector<16x8xf32>, vector<16x8xf32> -> vector<16x32xf32>
    %c320 = arith.constant 320 : index
    %c0_113 = arith.constant 0 : index
    %384 = vector.load %arg2[%c320, %c0_113] : memref<608x128xbf16, #tpu.memory_space<vmem>>, vector<32x32xbf16>
    %385 = arith.truncf %383 : vector<16x32xf32> to vector<16x32xbf16>
    %cst_114 = arith.constant dense<0.000000e+00> : vector<16x32xf32>
    %386 = tpu.matmul %385, %384, %cst_114 {dimension_numbers = #tpu.dot_dimension_numbers<[1], [0], [0], [1], [0, 0, 1, 1], [], []>} : vector<16x32xbf16>, vector<32x32xbf16>, vector<16x32xf32> -> vector<16x32xf32>
    %c13 = arith.constant 13 : index
    %c0_115 = arith.constant 0 : index
    %387 = vector.load %arg3[%c13, %c0_115] : memref<32x128xf32, #tpu.memory_space<vmem>>, vector<1x32xf32>
    %388 = vector.broadcast %387 : vector<1x32xf32> to vector<16x32xf32>
    %389 = arith.addf %386, %388 : vector<16x32xf32>
    %390 = arith.addf %290, %389 : vector<16x32xf32>
    %c18 = arith.constant 18 : index
    %c0_116 = arith.constant 0 : index
    %391 = vector.load %arg3[%c18, %c0_116] : memref<32x128xf32, #tpu.memory_space<vmem>>, vector<1x32xf32>
    %c19 = arith.constant 19 : index
    %c0_117 = arith.constant 0 : index
    %392 = vector.load %arg3[%c19, %c0_117] : memref<32x128xf32, #tpu.memory_space<vmem>>, vector<1x32xf32>
    %cst_118 = arith.constant dense<0.000000e+00> : vector<16xf32>
    %393 = vector.multi_reduction <add>, %390, %cst_118 [1] : vector<16x32xf32> to vector<16xf32>
    %394 = vector.shape_cast %393 : vector<16xf32> to vector<16x1xf32>
    %cst_119 = arith.constant 3.200000e+01 : f32
    %395 = vector.broadcast %cst_119 : f32 to vector<16x1xf32>
    %396 = arith.divf %394, %395 : vector<16x1xf32>
    %397 = vector.broadcast %396 : vector<16x1xf32> to vector<16x32xf32>
    %398 = arith.subf %390, %397 : vector<16x32xf32>
    %399 = arith.mulf %398, %398 : vector<16x32xf32>
    %cst_120 = arith.constant dense<0.000000e+00> : vector<16xf32>
    %400 = vector.multi_reduction <add>, %399, %cst_120 [1] : vector<16x32xf32> to vector<16xf32>
    %401 = vector.shape_cast %400 : vector<16xf32> to vector<16x1xf32>
    %cst_121 = arith.constant 3.200000e+01 : f32
    %402 = vector.broadcast %cst_121 : f32 to vector<16x1xf32>
    %403 = arith.divf %401, %402 : vector<16x1xf32>
    %404 = vector.broadcast %396 : vector<16x1xf32> to vector<16x32xf32>
    %405 = arith.subf %390, %404 : vector<16x32xf32>
    %cst_122 = arith.constant 9.99999974E-6 : f32
    %406 = vector.broadcast %cst_122 : f32 to vector<16x1xf32>
    %407 = arith.addf %403, %406 : vector<16x1xf32>
    %408 = math.rsqrt %407 : vector<16x1xf32>
    %409 = vector.broadcast %408 : vector<16x1xf32> to vector<16x32xf32>
    %410 = arith.mulf %405, %409 : vector<16x32xf32>
    %411 = vector.broadcast %391 : vector<1x32xf32> to vector<16x32xf32>
    %412 = arith.mulf %410, %411 : vector<16x32xf32>
    %413 = vector.broadcast %392 : vector<1x32xf32> to vector<16x32xf32>
    %414 = arith.addf %412, %413 : vector<16x32xf32>
    %c352 = arith.constant 352 : index
    %c0_123 = arith.constant 0 : index
    %415 = vector.load %arg2[%c352, %c0_123] : memref<608x128xbf16, #tpu.memory_space<vmem>>, vector<32x32xbf16>
    %416 = arith.truncf %414 : vector<16x32xf32> to vector<16x32xbf16>
    %cst_124 = arith.constant dense<0.000000e+00> : vector<16x32xf32>
    %417 = tpu.matmul %416, %415, %cst_124 {dimension_numbers = #tpu.dot_dimension_numbers<[1], [0], [0], [1], [0, 0, 1, 1], [], []>} : vector<16x32xbf16>, vector<32x32xbf16>, vector<16x32xf32> -> vector<16x32xf32>
    %c14 = arith.constant 14 : index
    %c0_125 = arith.constant 0 : index
    %418 = vector.load %arg3[%c14, %c0_125] : memref<32x128xf32, #tpu.memory_space<vmem>>, vector<1x32xf32>
    %419 = vector.broadcast %418 : vector<1x32xf32> to vector<16x32xf32>
    %420 = arith.addf %417, %419 : vector<16x32xf32>
    %c352_126 = arith.constant 352 : index
    %c32_127 = arith.constant 32 : index
    %421 = vector.load %arg2[%c352_126, %c32_127] : memref<608x128xbf16, #tpu.memory_space<vmem>>, vector<32x64xbf16>
    %422 = arith.truncf %1 : vector<16x32xf32> to vector<16x32xbf16>
    %cst_128 = arith.constant dense<0.000000e+00> : vector<16x64xf32>
    %423 = tpu.matmul %422, %421, %cst_128 {dimension_numbers = #tpu.dot_dimension_numbers<[1], [0], [0], [1], [0, 0, 1, 1], [], []>} : vector<16x32xbf16>, vector<32x64xbf16>, vector<16x64xf32> -> vector<16x64xf32>
    %c14_129 = arith.constant 14 : index
    %c32_130 = arith.constant 32 : index
    %424 = vector.load %arg3[%c14_129, %c32_130] : memref<32x128xf32, #tpu.memory_space<vmem>>, vector<1x64xf32>
    %425 = vector.broadcast %424 : vector<1x64xf32> to vector<16x64xf32>
    %426 = arith.addf %423, %425 : vector<16x64xf32>
    %427 = vector.extract_strided_slice %420 {offsets = [0, 0], sizes = [16, 8], strides = [1, 1]} : vector<16x32xf32> to vector<16x8xf32>
    %428 = vector.extract_strided_slice %426 {offsets = [0, 0], sizes = [16, 8], strides = [1, 1]} : vector<16x64xf32> to vector<16x8xf32>
    %429 = vector.extract_strided_slice %426 {offsets = [0, 32], sizes = [16, 8], strides = [1, 1]} : vector<16x64xf32> to vector<16x8xf32>
    %430 = arith.truncf %427 : vector<16x8xf32> to vector<16x8xbf16>
    %431 = arith.truncf %428 : vector<16x8xf32> to vector<16x8xbf16>
    %cst_131 = arith.constant dense<0.000000e+00> : vector<16x16xf32>
    %432 = tpu.matmul %430, %431, %cst_131 {dimension_numbers = #tpu.dot_dimension_numbers<[1], [1], [0], [0], [0, 0, 1, 0], [], []>} : vector<16x8xbf16>, vector<16x8xbf16>, vector<16x16xf32> -> vector<16x16xf32>
    %433 = arith.addf %432, %3 : vector<16x16xf32>
    %cst_132 = arith.constant dense<0xFF800000> : vector<16xf32>
    %434 = vector.multi_reduction <maximumf>, %433, %cst_132 [1] : vector<16x16xf32> to vector<16xf32>
    %435 = vector.shape_cast %434 : vector<16xf32> to vector<16x1xf32>
    %436 = vector.broadcast %435 : vector<16x1xf32> to vector<16x16xf32>
    %437 = arith.subf %433, %436 : vector<16x16xf32>
    %438 = math.exp %437 : vector<16x16xf32>
    %cst_133 = arith.constant dense<0.000000e+00> : vector<16xf32>
    %439 = vector.multi_reduction <add>, %438, %cst_133 [1] : vector<16x16xf32> to vector<16xf32>
    %440 = vector.shape_cast %439 : vector<16xf32> to vector<16x1xf32>
    %441 = tpu.reciprocal %440 {approx = true} : vector<16x1xf32> -> vector<16x1xf32>
    %442 = vector.broadcast %441 : vector<16x1xf32> to vector<16x16xf32>
    %443 = arith.mulf %438, %442 : vector<16x16xf32>
    %444 = arith.truncf %443 : vector<16x16xf32> to vector<16x16xbf16>
    %445 = arith.truncf %429 : vector<16x8xf32> to vector<16x8xbf16>
    %cst_134 = arith.constant dense<0.000000e+00> : vector<16x8xf32>
    %446 = tpu.matmul %444, %445, %cst_134 {dimension_numbers = #tpu.dot_dimension_numbers<[1], [0], [0], [1], [0, 0, 1, 1], [], []>} : vector<16x16xbf16>, vector<16x8xbf16>, vector<16x8xf32> -> vector<16x8xf32>
    %447 = vector.extract_strided_slice %420 {offsets = [0, 8], sizes = [16, 8], strides = [1, 1]} : vector<16x32xf32> to vector<16x8xf32>
    %448 = vector.extract_strided_slice %426 {offsets = [0, 8], sizes = [16, 8], strides = [1, 1]} : vector<16x64xf32> to vector<16x8xf32>
    %449 = vector.extract_strided_slice %426 {offsets = [0, 40], sizes = [16, 8], strides = [1, 1]} : vector<16x64xf32> to vector<16x8xf32>
    %450 = arith.truncf %447 : vector<16x8xf32> to vector<16x8xbf16>
    %451 = arith.truncf %448 : vector<16x8xf32> to vector<16x8xbf16>
    %cst_135 = arith.constant dense<0.000000e+00> : vector<16x16xf32>
    %452 = tpu.matmul %450, %451, %cst_135 {dimension_numbers = #tpu.dot_dimension_numbers<[1], [1], [0], [0], [0, 0, 1, 0], [], []>} : vector<16x8xbf16>, vector<16x8xbf16>, vector<16x16xf32> -> vector<16x16xf32>
    %453 = arith.addf %452, %3 : vector<16x16xf32>
    %cst_136 = arith.constant dense<0xFF800000> : vector<16xf32>
    %454 = vector.multi_reduction <maximumf>, %453, %cst_136 [1] : vector<16x16xf32> to vector<16xf32>
    %455 = vector.shape_cast %454 : vector<16xf32> to vector<16x1xf32>
    %456 = vector.broadcast %455 : vector<16x1xf32> to vector<16x16xf32>
    %457 = arith.subf %453, %456 : vector<16x16xf32>
    %458 = math.exp %457 : vector<16x16xf32>
    %cst_137 = arith.constant dense<0.000000e+00> : vector<16xf32>
    %459 = vector.multi_reduction <add>, %458, %cst_137 [1] : vector<16x16xf32> to vector<16xf32>
    %460 = vector.shape_cast %459 : vector<16xf32> to vector<16x1xf32>
    %461 = tpu.reciprocal %460 {approx = true} : vector<16x1xf32> -> vector<16x1xf32>
    %462 = vector.broadcast %461 : vector<16x1xf32> to vector<16x16xf32>
    %463 = arith.mulf %458, %462 : vector<16x16xf32>
    %464 = arith.truncf %463 : vector<16x16xf32> to vector<16x16xbf16>
    %465 = arith.truncf %449 : vector<16x8xf32> to vector<16x8xbf16>
    %cst_138 = arith.constant dense<0.000000e+00> : vector<16x8xf32>
    %466 = tpu.matmul %464, %465, %cst_138 {dimension_numbers = #tpu.dot_dimension_numbers<[1], [0], [0], [1], [0, 0, 1, 1], [], []>} : vector<16x16xbf16>, vector<16x8xbf16>, vector<16x8xf32> -> vector<16x8xf32>
    %467 = vector.extract_strided_slice %420 {offsets = [0, 16], sizes = [16, 8], strides = [1, 1]} : vector<16x32xf32> to vector<16x8xf32>
    %468 = vector.extract_strided_slice %426 {offsets = [0, 16], sizes = [16, 8], strides = [1, 1]} : vector<16x64xf32> to vector<16x8xf32>
    %469 = vector.extract_strided_slice %426 {offsets = [0, 48], sizes = [16, 8], strides = [1, 1]} : vector<16x64xf32> to vector<16x8xf32>
    %470 = arith.truncf %467 : vector<16x8xf32> to vector<16x8xbf16>
    %471 = arith.truncf %468 : vector<16x8xf32> to vector<16x8xbf16>
    %cst_139 = arith.constant dense<0.000000e+00> : vector<16x16xf32>
    %472 = tpu.matmul %470, %471, %cst_139 {dimension_numbers = #tpu.dot_dimension_numbers<[1], [1], [0], [0], [0, 0, 1, 0], [], []>} : vector<16x8xbf16>, vector<16x8xbf16>, vector<16x16xf32> -> vector<16x16xf32>
    %473 = arith.addf %472, %3 : vector<16x16xf32>
    %cst_140 = arith.constant dense<0xFF800000> : vector<16xf32>
    %474 = vector.multi_reduction <maximumf>, %473, %cst_140 [1] : vector<16x16xf32> to vector<16xf32>
    %475 = vector.shape_cast %474 : vector<16xf32> to vector<16x1xf32>
    %476 = vector.broadcast %475 : vector<16x1xf32> to vector<16x16xf32>
    %477 = arith.subf %473, %476 : vector<16x16xf32>
    %478 = math.exp %477 : vector<16x16xf32>
    %cst_141 = arith.constant dense<0.000000e+00> : vector<16xf32>
    %479 = vector.multi_reduction <add>, %478, %cst_141 [1] : vector<16x16xf32> to vector<16xf32>
    %480 = vector.shape_cast %479 : vector<16xf32> to vector<16x1xf32>
    %481 = tpu.reciprocal %480 {approx = true} : vector<16x1xf32> -> vector<16x1xf32>
    %482 = vector.broadcast %481 : vector<16x1xf32> to vector<16x16xf32>
    %483 = arith.mulf %478, %482 : vector<16x16xf32>
    %484 = arith.truncf %483 : vector<16x16xf32> to vector<16x16xbf16>
    %485 = arith.truncf %469 : vector<16x8xf32> to vector<16x8xbf16>
    %cst_142 = arith.constant dense<0.000000e+00> : vector<16x8xf32>
    %486 = tpu.matmul %484, %485, %cst_142 {dimension_numbers = #tpu.dot_dimension_numbers<[1], [0], [0], [1], [0, 0, 1, 1], [], []>} : vector<16x16xbf16>, vector<16x8xbf16>, vector<16x8xf32> -> vector<16x8xf32>
    %487 = vector.extract_strided_slice %420 {offsets = [0, 24], sizes = [16, 8], strides = [1, 1]} : vector<16x32xf32> to vector<16x8xf32>
    %488 = vector.extract_strided_slice %426 {offsets = [0, 24], sizes = [16, 8], strides = [1, 1]} : vector<16x64xf32> to vector<16x8xf32>
    %489 = vector.extract_strided_slice %426 {offsets = [0, 56], sizes = [16, 8], strides = [1, 1]} : vector<16x64xf32> to vector<16x8xf32>
    %490 = arith.truncf %487 : vector<16x8xf32> to vector<16x8xbf16>
    %491 = arith.truncf %488 : vector<16x8xf32> to vector<16x8xbf16>
    %cst_143 = arith.constant dense<0.000000e+00> : vector<16x16xf32>
    %492 = tpu.matmul %490, %491, %cst_143 {dimension_numbers = #tpu.dot_dimension_numbers<[1], [1], [0], [0], [0, 0, 1, 0], [], []>} : vector<16x8xbf16>, vector<16x8xbf16>, vector<16x16xf32> -> vector<16x16xf32>
    %493 = arith.addf %492, %3 : vector<16x16xf32>
    %cst_144 = arith.constant dense<0xFF800000> : vector<16xf32>
    %494 = vector.multi_reduction <maximumf>, %493, %cst_144 [1] : vector<16x16xf32> to vector<16xf32>
    %495 = vector.shape_cast %494 : vector<16xf32> to vector<16x1xf32>
    %496 = vector.broadcast %495 : vector<16x1xf32> to vector<16x16xf32>
    %497 = arith.subf %493, %496 : vector<16x16xf32>
    %498 = math.exp %497 : vector<16x16xf32>
    %cst_145 = arith.constant dense<0.000000e+00> : vector<16xf32>
    %499 = vector.multi_reduction <add>, %498, %cst_145 [1] : vector<16x16xf32> to vector<16xf32>
    %500 = vector.shape_cast %499 : vector<16xf32> to vector<16x1xf32>
    %501 = tpu.reciprocal %500 {approx = true} : vector<16x1xf32> -> vector<16x1xf32>
    %502 = vector.broadcast %501 : vector<16x1xf32> to vector<16x16xf32>
    %503 = arith.mulf %498, %502 : vector<16x16xf32>
    %504 = arith.truncf %503 : vector<16x16xf32> to vector<16x16xbf16>
    %505 = arith.truncf %489 : vector<16x8xf32> to vector<16x8xbf16>
    %cst_146 = arith.constant dense<0.000000e+00> : vector<16x8xf32>
    %506 = tpu.matmul %504, %505, %cst_146 {dimension_numbers = #tpu.dot_dimension_numbers<[1], [0], [0], [1], [0, 0, 1, 1], [], []>} : vector<16x16xbf16>, vector<16x8xbf16>, vector<16x8xf32> -> vector<16x8xf32>
    %507 = tpu.concatenate %446, %466, %486, %506 in 1 : vector<16x8xf32>, vector<16x8xf32>, vector<16x8xf32>, vector<16x8xf32> -> vector<16x32xf32>
    %c384 = arith.constant 384 : index
    %c0_147 = arith.constant 0 : index
    %508 = vector.load %arg2[%c384, %c0_147] : memref<608x128xbf16, #tpu.memory_space<vmem>>, vector<32x32xbf16>
    %509 = arith.truncf %507 : vector<16x32xf32> to vector<16x32xbf16>
    %cst_148 = arith.constant dense<0.000000e+00> : vector<16x32xf32>
    %510 = tpu.matmul %509, %508, %cst_148 {dimension_numbers = #tpu.dot_dimension_numbers<[1], [0], [0], [1], [0, 0, 1, 1], [], []>} : vector<16x32xbf16>, vector<32x32xbf16>, vector<16x32xf32> -> vector<16x32xf32>
    %c15 = arith.constant 15 : index
    %c0_149 = arith.constant 0 : index
    %511 = vector.load %arg3[%c15, %c0_149] : memref<32x128xf32, #tpu.memory_space<vmem>>, vector<1x32xf32>
    %512 = vector.broadcast %511 : vector<1x32xf32> to vector<16x32xf32>
    %513 = arith.addf %510, %512 : vector<16x32xf32>
    %514 = arith.addf %414, %513 : vector<16x32xf32>
    %c20 = arith.constant 20 : index
    %c0_150 = arith.constant 0 : index
    %515 = vector.load %arg3[%c20, %c0_150] : memref<32x128xf32, #tpu.memory_space<vmem>>, vector<1x32xf32>
    %c21 = arith.constant 21 : index
    %c0_151 = arith.constant 0 : index
    %516 = vector.load %arg3[%c21, %c0_151] : memref<32x128xf32, #tpu.memory_space<vmem>>, vector<1x32xf32>
    %cst_152 = arith.constant dense<0.000000e+00> : vector<16xf32>
    %517 = vector.multi_reduction <add>, %514, %cst_152 [1] : vector<16x32xf32> to vector<16xf32>
    %518 = vector.shape_cast %517 : vector<16xf32> to vector<16x1xf32>
    %cst_153 = arith.constant 3.200000e+01 : f32
    %519 = vector.broadcast %cst_153 : f32 to vector<16x1xf32>
    %520 = arith.divf %518, %519 : vector<16x1xf32>
    %521 = vector.broadcast %520 : vector<16x1xf32> to vector<16x32xf32>
    %522 = arith.subf %514, %521 : vector<16x32xf32>
    %523 = arith.mulf %522, %522 : vector<16x32xf32>
    %cst_154 = arith.constant dense<0.000000e+00> : vector<16xf32>
    %524 = vector.multi_reduction <add>, %523, %cst_154 [1] : vector<16x32xf32> to vector<16xf32>
    %525 = vector.shape_cast %524 : vector<16xf32> to vector<16x1xf32>
    %cst_155 = arith.constant 3.200000e+01 : f32
    %526 = vector.broadcast %cst_155 : f32 to vector<16x1xf32>
    %527 = arith.divf %525, %526 : vector<16x1xf32>
    %528 = vector.broadcast %520 : vector<16x1xf32> to vector<16x32xf32>
    %529 = arith.subf %514, %528 : vector<16x32xf32>
    %cst_156 = arith.constant 9.99999974E-6 : f32
    %530 = vector.broadcast %cst_156 : f32 to vector<16x1xf32>
    %531 = arith.addf %527, %530 : vector<16x1xf32>
    %532 = math.rsqrt %531 : vector<16x1xf32>
    %533 = vector.broadcast %532 : vector<16x1xf32> to vector<16x32xf32>
    %534 = arith.mulf %529, %533 : vector<16x32xf32>
    %535 = vector.broadcast %515 : vector<1x32xf32> to vector<16x32xf32>
    %536 = arith.mulf %534, %535 : vector<16x32xf32>
    %537 = vector.broadcast %516 : vector<1x32xf32> to vector<16x32xf32>
    %538 = arith.addf %536, %537 : vector<16x32xf32>
    %c416 = arith.constant 416 : index
    %c0_157 = arith.constant 0 : index
    %539 = vector.load %arg2[%c416, %c0_157] : memref<608x128xbf16, #tpu.memory_space<vmem>>, vector<32x128xbf16>
    %540 = arith.truncf %538 : vector<16x32xf32> to vector<16x32xbf16>
    %cst_158 = arith.constant dense<0.000000e+00> : vector<16x128xf32>
    %541 = tpu.matmul %540, %539, %cst_158 {dimension_numbers = #tpu.dot_dimension_numbers<[1], [0], [0], [1], [0, 0, 1, 1], [], []>} : vector<16x32xbf16>, vector<32x128xbf16>, vector<16x128xf32> -> vector<16x128xf32>
    %c16_159 = arith.constant 16 : index
    %c0_160 = arith.constant 0 : index
    %542 = vector.load %arg3[%c16_159, %c0_160] : memref<32x128xf32, #tpu.memory_space<vmem>>, vector<1x128xf32>
    %543 = vector.broadcast %542 : vector<1x128xf32> to vector<16x128xf32>
    %544 = arith.addf %541, %543 : vector<16x128xf32>
    %cst_161 = arith.constant 0.000000e+00 : f32
    %545 = vector.broadcast %cst_161 : f32 to vector<16x128xf32>
    %546 = arith.maximumf %544, %545 : vector<16x128xf32>
    %c448 = arith.constant 448 : index
    %c0_162 = arith.constant 0 : index
    %547 = vector.load %arg2[%c448, %c0_162] : memref<608x128xbf16, #tpu.memory_space<vmem>>, vector<128x32xbf16>
    %548 = arith.truncf %546 : vector<16x128xf32> to vector<16x128xbf16>
    %cst_163 = arith.constant dense<0.000000e+00> : vector<16x32xf32>
    %549 = tpu.matmul %548, %547, %cst_163 {dimension_numbers = #tpu.dot_dimension_numbers<[1], [0], [0], [1], [0, 0, 1, 1], [], []>} : vector<16x128xbf16>, vector<128x32xbf16>, vector<16x32xf32> -> vector<16x32xf32>
    %c17 = arith.constant 17 : index
    %c0_164 = arith.constant 0 : index
    %550 = vector.load %arg3[%c17, %c0_164] : memref<32x128xf32, #tpu.memory_space<vmem>>, vector<1x32xf32>
    %551 = vector.broadcast %550 : vector<1x32xf32> to vector<16x32xf32>
    %552 = arith.addf %549, %551 : vector<16x32xf32>
    %553 = arith.addf %538, %552 : vector<16x32xf32>
    %cst_165 = arith.constant dense<0.000000e+00> : vector<16xf32>
    %554 = vector.multi_reduction <add>, %553, %cst_165 [1] : vector<16x32xf32> to vector<16xf32>
    %555 = vector.shape_cast %554 : vector<16xf32> to vector<16x1xf32>
    %cst_166 = arith.constant 3.200000e+01 : f32
    %556 = vector.broadcast %cst_166 : f32 to vector<16x1xf32>
    %557 = arith.divf %555, %556 : vector<16x1xf32>
    %558 = vector.broadcast %557 : vector<16x1xf32> to vector<16x32xf32>
    %559 = arith.subf %553, %558 : vector<16x32xf32>
    %560 = arith.mulf %559, %559 : vector<16x32xf32>
    %cst_167 = arith.constant dense<0.000000e+00> : vector<16xf32>
    %561 = vector.multi_reduction <add>, %560, %cst_167 [1] : vector<16x32xf32> to vector<16xf32>
    %562 = vector.shape_cast %561 : vector<16xf32> to vector<16x1xf32>
    %cst_168 = arith.constant 3.200000e+01 : f32
    %563 = vector.broadcast %cst_168 : f32 to vector<16x1xf32>
    %564 = arith.divf %562, %563 : vector<16x1xf32>
    %565 = vector.broadcast %557 : vector<16x1xf32> to vector<16x32xf32>
    %566 = arith.subf %553, %565 : vector<16x32xf32>
    %cst_169 = arith.constant 9.99999974E-6 : f32
    %567 = vector.broadcast %cst_169 : f32 to vector<16x1xf32>
    %568 = arith.addf %564, %567 : vector<16x1xf32>
    %569 = math.rsqrt %568 : vector<16x1xf32>
    %570 = vector.broadcast %569 : vector<16x1xf32> to vector<16x32xf32>
    %571 = arith.mulf %566, %570 : vector<16x32xf32>
    %c576 = arith.constant 576 : index
    %c0_170 = arith.constant 0 : index
    %572 = vector.load %arg2[%c576, %c0_170] : memref<608x128xbf16, #tpu.memory_space<vmem>>, vector<32x128xbf16>
    %573 = arith.truncf %571 : vector<16x32xf32> to vector<16x32xbf16>
    %cst_171 = arith.constant dense<0.000000e+00> : vector<16x128xf32>
    %574 = tpu.matmul %573, %572, %cst_171 {dimension_numbers = #tpu.dot_dimension_numbers<[1], [0], [0], [1], [0, 0, 1, 1], [], []>} : vector<16x32xbf16>, vector<32x128xbf16>, vector<16x128xf32> -> vector<16x128xf32>
    %c24 = arith.constant 24 : index
    %c0_172 = arith.constant 0 : index
    %575 = vector.load %arg3[%c24, %c0_172] : memref<32x128xf32, #tpu.memory_space<vmem>>, vector<1x128xf32>
    %576 = vector.broadcast %575 : vector<1x128xf32> to vector<16x128xf32>
    %577 = arith.addf %574, %576 : vector<16x128xf32>
    %c0_173 = arith.constant 0 : index
    %c0_174 = arith.constant 0 : index
    %578 = vector.load %arg4[%c0_173, %c0_174] : memref<16x128xf32, #tpu.memory_space<vmem>>, vector<16x128xf32>
    tpu.vector_store %arg4[%c0_173, %c0_174], %577 {strides = array<i32>} : memref<16x128xf32, #tpu.memory_space<vmem>>, vector<16x128xf32>,
    return
  }
}

</mosaic_0001>

<llo_original>
// kernel: tpu_custom_call.1
$region0: #{tpu_custom_call.1}
  #allocation0 [shape = 'u32[]', space=smem, size = 0x4, offset = 0x4, fixed_abs, tag = 'smem constant byte address 0x4 - core index']
  #allocation1 [shape = 'u32[144,128]{1,0:T(1,128)}', space=vmem, size = 0x12000, scoped, tag = 'internal scratch']
  %s0 = inlined_call_operand.hbm [shape: f32[32,32], index: 0, kind: input, shape index: {}]
  %s1 = inlined_call_operand.hbm [shape: f32[16,32], index: 1, kind: input, shape index: {}]
  %s2 = inlined_call_operand.hbm [shape: bf16[608,128], index: 2, kind: input, shape index: {}]
  %s3 = inlined_call_operand.hbm [shape: f32[32,128], index: 3, kind: input, shape index: {}]
  %s4 = inlined_call_operand.hbm [shape: f32[16,128], index: 4, kind: output, shape index: {}]
  %s5 = sld [smem:[#allocation0]]
  $region42: #{tpu_custom_call.1} parent=0
    _
  %s7 = ssub.s32 1, %s5
  %s8 = scalar_select 0, %s7, %s5
  $region1: #{tpu_custom_call.1} parent=0
    #allocation2 [shape = 'u8[16384]{0}', space=vmem, size = 0x4000, scoped, tag = 'input window, operand 0, single buffered']
    #allocation3 [shape = 's32[1]{0}', space=sflag, size = 0x4, scoped, tag = 'scoped memory for tpu_custom_call.1']
    #allocation4 [shape = 's32[1]{0}', space=sflag, size = 0x4, scoped, tag = 'scoped memory for tpu_custom_call.1']
    #allocation5 [shape = 'u8[8192]{0}', space=vmem, size = 0x2000, scoped, tag = 'input window, operand 1, single buffered']
    #allocation6 [shape = 's32[1]{0}', space=sflag, size = 0x4, scoped, tag = 'scoped memory for tpu_custom_call.1']
    #allocation7 [shape = 'u8[155648]{0}', space=vmem, size = 0x26000, scoped, tag = 'input window, operand 2, single buffered']
    #allocation8 [shape = 'u8[16384]{0}', space=vmem, size = 0x4000, scoped, tag = 'input window, operand 3, single buffered']
    #allocation9 [shape = 's32[1]{0}', space=sflag, size = 0x4, scoped, tag = 'scoped memory for tpu_custom_call.1']
    #allocation10 [shape = 'u8[8192]{0}', space=vmem, size = 0x2000, scoped, tag = 'output window, operand 0, single buffered']
    %9 = vsyncpa [#allocation3], 0
    %10 = vsyncpa [#allocation6], 0
    %11 = vsyncpa [#allocation9], 0
    %12 = vsyncpa [#allocation4], 0
    // Predicated region
    $region2: #{tpu_custom_call.1} parent=1 // pred_check
      _
    $region3: #{tpu_custom_call.1} parent=1 // pred_check_branch
      %14 = sbr.rel (0) target = $region5
    $region4: #{tpu_custom_call.1} parent=1 // pred_region
      %s16 = ssub.s32 512, 512
      %17 = vsyncadd [#allocation3], %s16
      %s18 = sshll.u32 [#allocation2], 4
      %s19 = int_to_ptr.vmem [resolvable:$true] %s18
      %24 = dma.hbm_to_vmem [thread:$0]  %s0, 512, %s19, [#allocation3], 128, 128, 8
    $region5: #{tpu_custom_call.1} parent=1 // pred_fallthru
      _
    // Predicated region
    $region6: #{tpu_custom_call.1} parent=1 // pred_check
      _
    $region7: #{tpu_custom_call.1} parent=1 // pred_check_branch
      %26 = sbr.rel (0) target = $region9
    $region8: #{tpu_custom_call.1} parent=1 // pred_region
      %s28 = ssub.s32 256, 256
      %29 = vsyncadd [#allocation6], %s28
      %s30 = sshll.u32 [#allocation5], 4
      %s31 = int_to_ptr.vmem [resolvable:$true] %s30
      %36 = dma.hbm_to_vmem [thread:$0]  %s1, 256, %s31, [#allocation6], 128, 128, 8
    $region9: #{tpu_custom_call.1} parent=1 // pred_fallthru
      _
    // Predicated region
    $region10: #{tpu_custom_call.1} parent=1 // pred_check
      _
    $region11: #{tpu_custom_call.1} parent=1 // pred_check_branch
      %38 = sbr.rel (0) target = $region13
    $region12: #{tpu_custom_call.1} parent=1 // pred_region
      %s40 = ssub.s32 4864, 4864
      %41 = vsyncadd [#allocation6], %s40
      %s42 = sshll.u32 [#allocation7], 4
      %s43 = int_to_ptr.vmem [resolvable:$true] %s42
      %48 = dma.hbm_to_vmem [thread:$0]  %s2, 4864, %s43, [#allocation6], 64, 64, 4
    $region13: #{tpu_custom_call.1} parent=1 // pred_fallthru
      _
    // Predicated region
    $region14: #{tpu_custom_call.1} parent=1 // pred_check
      _
    $region15: #{tpu_custom_call.1} parent=1 // pred_check_branch
      %50 = sbr.rel (0) target = $region17
    $region16: #{tpu_custom_call.1} parent=1 // pred_region
      %s52 = ssub.s32 512, 512
      %53 = vsyncadd [#allocation9], %s52
      %s54 = sshll.u32 [#allocation8], 4
      %s55 = int_to_ptr.vmem [resolvable:$true] %s54
      %60 = dma.hbm_to_vmem [thread:$0]  %s3, 512, %s55, [#allocation9], 128, 128, 8
    $region17: #{tpu_custom_call.1} parent=1 // pred_fallthru
      _
    // Predicated region
    $region18: #{tpu_custom_call.1} parent=1 // pred_check
      _
    $region19: #{tpu_custom_call.1} parent=1 // pred_check_branch
      %62 = sbr.rel (0) target = $region21
    $region20: #{tpu_custom_call.1} parent=1 // pred_region
      %63 = dma.done [#allocation3], 512
    $region21: #{tpu_custom_call.1} parent=1 // pred_fallthru
      _
    // Predicated region
    $region22: #{tpu_custom_call.1} parent=1 // pred_check
      _
    $region23: #{tpu_custom_call.1} parent=1 // pred_check_branch
      %65 = sbr.rel (0) target = $region25
    $region24: #{tpu_custom_call.1} parent=1 // pred_region
      %66 = dma.done [#allocation6], 256
    $region25: #{tpu_custom_call.1} parent=1 // pred_fallthru
      _
    // Predicated region
    $region26: #{tpu_custom_call.1} parent=1 // pred_check
      _
    $region27: #{tpu_custom_call.1} parent=1 // pred_check_branch
      %68 = sbr.rel (0) target = $region29
    $region28: #{tpu_custom_call.1} parent=1 // pred_region
      %69 = dma.done [#allocation6], 4864
    $region29: #{tpu_custom_call.1} parent=1 // pred_fallthru
      _
    // Predicated region
    $region30: #{tpu_custom_call.1} parent=1 // pred_check
      _
    $region31: #{tpu_custom_call.1} parent=1 // pred_check_branch
      %71 = sbr.rel (0) target = $region33
    $region32: #{tpu_custom_call.1} parent=1 // pred_region
      %72 = dma.done [#allocation9], 512
    $region33: #{tpu_custom_call.1} parent=1 // pred_fallthru
      _
    %v74 = vld [vmem:[#allocation2] sm:$0xff]
    %v75 = vld [vmem:[#allocation2 + $0x8] sm:$0xff]
    %v76 = vld [vmem:[#allocation2 + $0x10] sm:$0xff]
    %v77 = vld [vmem:[#allocation2 + $0x18] sm:$0xff]
    %v78 = vld [vmem:[#allocation5] sm:$0xff]
    %v79 = vld [vmem:[#allocation5 + $0x8] sm:$0xff]
    %v80 = vld [vmem:[#allocation7] sm:$0xf]
    %v81 = vld [vmem:[#allocation7 + $0x4] sm:$0xf]
    %v82 = vld [vmem:[#allocation7 + $0x8] sm:$0xf]
    %v83 = vld [vmem:[#allocation7 + $0xc] sm:$0xf]
    %v84 = vpack.c.bf16 %v75, %v74
    %v85 = vld [vmem:[#allocation8] sm:$0x1]
    %v86 = vlaneseq
    %v87 = vshrl.u32 %v86, 7
    %v88 = vsub.s32 0, %v87
    %v89 = vrot.slane %v85, %v88
    %v94 = vunpack.c.l.b16 %v80
    %v95 = vunpack.c.l.b16 %v81
    %v96 = vunpack.c.l.b16 %v82
    %v97 = vunpack.c.l.b16 %v83
    %v98 = vpack.c.b16 %v95, %v94
    %v99 = vpack.c.b16 %v97, %v96
    %vm102 = vcmask 261120
    %v104 = vsel %vm102, %v84, 0
    %106 = vmatprep.subr.bf16.mxu0 0
    %107 = vmatpush1.bf16.msra.mxu0 %v98
    %108 = vmatprep.subr.bf16.mxu0 0
    %109 = vmatpush1.bf16.msra.mxu0 %v99
    %110 = vmatprep.subr.bf16.mxu0 0
    %111 = vmatpush1.bf16.msra.mxu0 0
    %112 = vmatprep.subr.bf16.mxu0 0
    %113 = vmatpush1.bf16.msra.mxu0 0
    %114 = vmatprep.subr.bf16.mxu0 0
    %115 = vmatpush1.bf16.msra.mxu0 0
    %116 = vmatprep.subr.bf16.mxu0 0
    %117 = vmatpush1.bf16.msra.mxu0 0
    %118 = vmatprep.subr.bf16.mxu0 0
    %119 = vmatpush1.bf16.msra.mxu0 0
    %120 = vmatprep.subr.bf16.mxu0 0
    %121 = vmatpush1.bf16.msra.mxu0 0
    %122 = vmatprep.subr.bf16.mxu0 0
    %123 = vmatpush1.bf16.msra.mxu0 0
    %124 = vmatprep.subr.bf16.mxu0 0
    %125 = vmatpush1.bf16.msra.mxu0 0
    %126 = vmatprep.subr.bf16.mxu0 0
    %127 = vmatpush1.bf16.msra.mxu0 0
    %128 = vmatprep.subr.bf16.mxu0 0
    %129 = vmatpush1.bf16.msra.mxu0 0
    %130 = vmatprep.subr.bf16.mxu0 0
    %131 = vmatpush1.bf16.msra.mxu0 0
    %132 = vmatprep.subr.bf16.mxu0 0
    %133 = vmatpush1.bf16.msra.mxu0 0
    %134 = vmatprep.subr.bf16.mxu0 0
    %135 = vmatpush1.bf16.msra.mxu0 0
    %136 = vmatprep.subr.bf16.mxu0 0
    %137 = vmatpush1.bf16.msra.mxu0 0
    %138 = vmatprep.mubr.bf16.mxu0 0
    %139 = vmatmul.mubr.bf16.gmra.mrb[0].mxu0 %v104
    %v140 = vpop.f32.mrb[0].mxu0
    %v141 = vadd.f32 %v89, %v140
    %v142 = vpop.f32.mrb[0].mxu0
    %v143 = vpop.f32.mrb[0].mxu0
    %v144 = vadd.f32 %v89, %v143
    %v145 = vpop.f32.mrb[0].mxu0
    %146 = vdwg.mxu0
    %147 = vrot.lane.b32.xlu0 %v98, 96
    %v148 = vpop.permute.xlu0 %147
    %149 = vrot.lane.b32.xlu0 %v99, 96
    %v150 = vpop.permute.xlu0 %149
    %154 = vrot.lane.b32.xlu0 %v89, 96
    %v155 = vpop.permute.xlu0 %154
    %157 = vmatprep.subr.bf16.mxu0 0
    %158 = vmatpush1.bf16.msra.mxu0 %v148
    %159 = vmatprep.subr.bf16.mxu0 0
    %160 = vmatpush1.bf16.msra.mxu0 %v150
    %161 = vmatprep.subr.bf16.mxu0 0
    %162 = vmatpush1.bf16.msra.mxu0 0
    %163 = vmatprep.subr.bf16.mxu0 0
    %164 = vmatpush1.bf16.msra.mxu0 0
    %165 = vmatprep.subr.bf16.mxu0 0
    %166 = vmatpush1.bf16.msra.mxu0 0
    %167 = vmatprep.subr.bf16.mxu0 0
    %168 = vmatpush1.bf16.msra.mxu0 0
    %169 = vmatprep.subr.bf16.mxu0 0
    %170 = vmatpush1.bf16.msra.mxu0 0
    %171 = vmatprep.subr.bf16.mxu0 0
    %172 = vmatpush1.bf16.msra.mxu0 0
    %173 = vmatprep.subr.bf16.mxu0 0
    %174 = vmatpush1.bf16.msra.mxu0 0
    %175 = vmatprep.subr.bf16.mxu0 0
    %176 = vmatpush1.bf16.msra.mxu0 0
    %177 = vmatprep.subr.bf16.mxu0 0
    %178 = vmatpush1.bf16.msra.mxu0 0
    %179 = vmatprep.subr.bf16.mxu0 0
    %180 = vmatpush1.bf16.msra.mxu0 0
    %181 = vmatprep.subr.bf16.mxu0 0
    %182 = vmatpush1.bf16.msra.mxu0 0
    %183 = vmatprep.subr.bf16.mxu0 0
    %184 = vmatpush1.bf16.msra.mxu0 0
    %185 = vmatprep.subr.bf16.mxu0 0
    %186 = vmatpush1.bf16.msra.mxu0 0
    %187 = vmatprep.subr.bf16.mxu0 0
    %188 = vmatpush1.bf16.msra.mxu0 0
    %189 = vmatprep.mubr.bf16.mxu0 0
    %190 = vmatmul.mubr.bf16.gmra.mrb[0].mxu0 %v104
    %v191 = vpop.f32.mrb[0].mxu0
    %v192 = vadd.f32 %v155, %v191
    %v193 = vpop.f32.mrb[0].mxu0
    %v194 = vpop.f32.mrb[0].mxu0
    %v195 = vadd.f32 %v155, %v194
    %v196 = vpop.f32.mrb[0].mxu0
    %197 = vdwg.mxu0
    %v198 = vpack.c.bf16 %v144, %v141
    %v199 = vpack.c.bf16 %v195, %v192
    %vm200 = vcmask 64512
    %v202 = vsel %vm200, %v198, 0
    %v205 = vsel %vm200, %v199, 0
    %207 = vmatprep.subr.bf16.mxu0 0
    %208 = vmatpush1.bf16.xpose.msra.mxu0 %v205
    %209 = vmatprep.subr.bf16.mxu0 0
    %210 = vmatpush1.bf16.xpose.msra.mxu0 0
    %211 = vmatprep.subr.bf16.mxu0 0
    %212 = vmatpush1.bf16.xpose.msra.mxu0 0
    %213 = vmatprep.subr.bf16.mxu0 0
    %214 = vmatpush1.bf16.xpose.msra.mxu0 0
    %215 = vmatprep.subr.bf16.mxu0 0
    %216 = vmatpush1.bf16.xpose.msra.mxu0 0
    %217 = vmatprep.subr.bf16.mxu0 0
    %218 = vmatpush1.bf16.xpose.msra.mxu0 0
    %219 = vmatprep.subr.bf16.mxu0 0
    %220 = vmatpush1.bf16.xpose.msra.mxu0 0
    %221 = vmatprep.subr.bf16.mxu0 0
    %222 = vmatpush1.bf16.xpose.msra.mxu0 0
    %223 = vmatprep.subr.bf16.mxu0 0
    %224 = vmatpush1.bf16.xpose.msra.mxu0 0
    %225 = vmatprep.subr.bf16.mxu0 0
    %226 = vmatpush1.bf16.xpose.msra.mxu0 0
    %227 = vmatprep.subr.bf16.mxu0 0
    %228 = vmatpush1.bf16.xpose.msra.mxu0 0
    %229 = vmatprep.subr.bf16.mxu0 0
    %230 = vmatpush1.bf16.xpose.msra.mxu0 0
    %231 = vmatprep.subr.bf16.mxu0 0
    %232 = vmatpush1.bf16.xpose.msra.mxu0 0
    %233 = vmatprep.subr.bf16.mxu0 0
    %234 = vmatpush1.bf16.xpose.msra.mxu0 0
    %235 = vmatprep.subr.bf16.mxu0 0
    %236 = vmatpush1.bf16.xpose.msra.mxu0 0
    %237 = vmatprep.subr.bf16.mxu0 0
    %238 = vmatpush1.bf16.xpose.msra.mxu0 0
    %239 = vmatprep.mubr.bf16.mxu0 0
    %240 = vmatmul.mubr.bf16.gmra.mrb[0].mxu0 %v202
    %v241 = vpop.f32.mrb[0].mxu0
    %v242 = vadd.f32 %v78, %v241
    %v243 = vpop.f32.mrb[0].mxu0
    %v244 = vpop.f32.mrb[0].mxu0
    %v245 = vadd.f32 %v79, %v244
    %v246 = vpop.f32.mrb[0].mxu0
    %247 = vdwg.mxu0
    %vm248 = vcmask 130048
    %v249 = vsel %vm248, %v242, -inf
    %250 = vmax.xlane.f32.xlu0 %v249
    %v251 = vpop.xlane.xlu0 %250
    %v252 = vsel %vm248, %v245, -inf
    %253 = vmax.xlane.f32.xlu0 %v252
    %v254 = vpop.xlane.xlu0 %253
    %v255 = vsub.f32 %v242, %v251
    %v256 = vsub.f32 %v245, %v254
    %v257 = vmul.f32 %v255, 1.442695
    %v258 = vpow.pop %v257
    %v259 = vmul.f32 %v256, 1.442695
    %v260 = vpow.pop %v259
    %v261 = vsel %vm248, %v258, 0.0
    %262 = vadd.xlane.f32.xlu0 %v261
    %v263 = vpop.xlane.xlu0 %262
    %v264 = vsel %vm248, %v260, 0.0
    %265 = vadd.xlane.f32.xlu0 %v264
    %v266 = vpop.xlane.xlu0 %265
    %v267 = vrcp.pop %v263
    %v268 = vrcp.pop %v266
    %v269 = vmul.f32 %v258, %v267
    %v270 = vmul.f32 %v260, %v268
    %v271 = vpack.c.bf16 %v270, %v269
    %273 = vrot.lane.b32.xlu0 %v199, 96
    %v274 = vpop.permute.xlu0 %273
    %v277 = vsel %vm248, %v271, 0
    %279 = vmatprep.subr.bf16.mxu0 0
    %280 = vmatpush1.bf16.msra.mxu0 %v274
    %281 = vmatprep.subr.bf16.mxu0 0
    %282 = vmatpush1.bf16.msra.mxu0 0
    %283 = vmatprep.subr.bf16.mxu0 0
    %284 = vmatpush1.bf16.msra.mxu0 0
    %285 = vmatprep.subr.bf16.mxu0 0
    %286 = vmatpush1.bf16.msra.mxu0 0
    %287 = vmatprep.subr.bf16.mxu0 0
    %288 = vmatpush1.bf16.msra.mxu0 0
    %289 = vmatprep.subr.bf16.mxu0 0
    %290 = vmatpush1.bf16.msra.mxu0 0
    %291 = vmatprep.subr.bf16.mxu0 0
    %292 = vmatpush1.bf16.msra.mxu0 0
    %293 = vmatprep.subr.bf16.mxu0 0
    %294 = vmatpush1.bf16.msra.mxu0 0
    %295 = vmatprep.subr.bf16.mxu0 0
    %296 = vmatpush1.bf16.msra.mxu0 0
    %297 = vmatprep.subr.bf16.mxu0 0
    %298 = vmatpush1.bf16.msra.mxu0 0
    %299 = vmatprep.subr.bf16.mxu0 0
    %300 = vmatpush1.bf16.msra.mxu0 0
    %301 = vmatprep.subr.bf16.mxu0 0
    %302 = vmatpush1.bf16.msra.mxu0 0
    %303 = vmatprep.subr.bf16.mxu0 0
    %304 = vmatpush1.bf16.msra.mxu0 0
    %305 = vmatprep.subr.bf16.mxu0 0
    %306 = vmatpush1.bf16.msra.mxu0 0
    %307 = vmatprep.subr.bf16.mxu0 0
    %308 = vmatpush1.bf16.msra.mxu0 0
    %309 = vmatprep.subr.bf16.mxu0 0
    %310 = vmatpush1.bf16.msra.mxu0 0
    %311 = vmatprep.mubr.bf16.mxu0 0
    %312 = vmatmul.mubr.bf16.gmra.mrb[0].mxu0 %v277
    %v313 = vpop.f32.mrb[0].mxu0
    %v314 = vadd.f32 0.0, %v313
    %v315 = vpop.f32.mrb[0].mxu0
    %v316 = vpop.f32.mrb[0].mxu0
    %v317 = vadd.f32 0.0, %v316
    %v318 = vpop.f32.mrb[0].mxu0
    %319 = vdwg.mxu0
    %321 = vrot.lane.b32.xlu0 %v198, 120
    %v322 = vpop.permute.xlu0 %321
    %323 = vrot.lane.b32.xlu0 %v199, 120
    %v324 = vpop.permute.xlu0 %323
    %v326 = vsel %vm200, %v322, 0
    %v329 = vsel %vm200, %v324, 0
    %331 = vmatprep.subr.bf16.mxu0 0
    %332 = vmatpush1.bf16.xpose.msra.mxu0 %v329
    %333 = vmatprep.subr.bf16.mxu0 0
    %334 = vmatpush1.bf16.xpose.msra.mxu0 0
    %335 = vmatprep.subr.bf16.mxu0 0
    %336 = vmatpush1.bf16.xpose.msra.mxu0 0
    %337 = vmatprep.subr.bf16.mxu0 0
    %338 = vmatpush1.bf16.xpose.msra.mxu0 0
    %339 = vmatprep.subr.bf16.mxu0 0
    %340 = vmatpush1.bf16.xpose.msra.mxu0 0
    %341 = vmatprep.subr.bf16.mxu0 0
    %342 = vmatpush1.bf16.xpose.msra.mxu0 0
    %343 = vmatprep.subr.bf16.mxu0 0
    %344 = vmatpush1.bf16.xpose.msra.mxu0 0
    %345 = vmatprep.subr.bf16.mxu0 0
    %346 = vmatpush1.bf16.xpose.msra.mxu0 0
    %347 = vmatprep.subr.bf16.mxu0 0
    %348 = vmatpush1.bf16.xpose.msra.mxu0 0
    %349 = vmatprep.subr.bf16.mxu0 0
    %350 = vmatpush1.bf16.xpose.msra.mxu0 0
    %351 = vmatprep.subr.bf16.mxu0 0
    %352 = vmatpush1.bf16.xpose.msra.mxu0 0
    %353 = vmatprep.subr.bf16.mxu0 0
    %354 = vmatpush1.bf16.xpose.msra.mxu0 0
    %355 = vmatprep.subr.bf16.mxu0 0
    %356 = vmatpush1.bf16.xpose.msra.mxu0 0
    %357 = vmatprep.subr.bf16.mxu0 0
    %358 = vmatpush1.bf16.xpose.msra.mxu0 0
    %359 = vmatprep.subr.bf16.mxu0 0
    %360 = vmatpush1.bf16.xpose.msra.mxu0 0
    %361 = vmatprep.subr.bf16.mxu0 0
    %362 = vmatpush1.bf16.xpose.msra.mxu0 0
    %363 = vmatprep.mubr.bf16.mxu0 0
    %364 = vmatmul.mubr.bf16.gmra.mrb[0].mxu0 %v326
    %v365 = vpop.f32.mrb[0].mxu0
    %v366 = vadd.f32 %v78, %v365
    %v367 = vpop.f32.mrb[0].mxu0
    %v368 = vpop.f32.mrb[0].mxu0
    %v369 = vadd.f32 %v79, %v368
    %v370 = vpop.f32.mrb[0].mxu0
    %371 = vdwg.mxu0
    %v372 = vsel %vm248, %v366, -inf
    %373 = vmax.xlane.f32.xlu0 %v372
    %v374 = vpop.xlane.xlu0 %373
    %v375 = vsel %vm248, %v369, -inf
    %376 = vmax.xlane.f32.xlu0 %v375
    %v377 = vpop.xlane.xlu0 %376
    %v378 = vsub.f32 %v366, %v374
    %v379 = vsub.f32 %v369, %v377
    %v380 = vmul.f32 %v378, 1.442695
    %v381 = vpow.pop %v380
    %v382 = vmul.f32 %v379, 1.442695
    %v383 = vpow.pop %v382
    %v384 = vsel %vm248, %v381, 0.0
    %385 = vadd.xlane.f32.xlu0 %v384
    %v386 = vpop.xlane.xlu0 %385
    %v387 = vsel %vm248, %v383, 0.0
    %388 = vadd.xlane.f32.xlu0 %v387
    %v389 = vpop.xlane.xlu0 %388
    %v390 = vrcp.pop %v386
    %v391 = vrcp.pop %v389
    %v392 = vmul.f32 %v381, %v390
    %v393 = vmul.f32 %v383, %v391
    %v394 = vpack.c.bf16 %v393, %v392
    %395 = vrot.lane.b32.xlu0 %v199, 88
    %v396 = vpop.permute.xlu0 %395
    %v399 = vsel %vm248, %v394, 0
    %401 = vmatprep.subr.bf16.mxu0 0
    %402 = vmatpush1.bf16.msra.mxu0 %v396
    %403 = vmatprep.subr.bf16.mxu0 0
    %404 = vmatpush1.bf16.msra.mxu0 0
    %405 = vmatprep.subr.bf16.mxu0 0
    %406 = vmatpush1.bf16.msra.mxu0 0
    %407 = vmatprep.subr.bf16.mxu0 0
    %408 = vmatpush1.bf16.msra.mxu0 0
    %409 = vmatprep.subr.bf16.mxu0 0
    %410 = vmatpush1.bf16.msra.mxu0 0
    %411 = vmatprep.subr.bf16.mxu0 0
    %412 = vmatpush1.bf16.msra.mxu0 0
    %413 = vmatprep.subr.bf16.mxu0 0
    %414 = vmatpush1.bf16.msra.mxu0 0
    %415 = vmatprep.subr.bf16.mxu0 0
    %416 = vmatpush1.bf16.msra.mxu0 0
    %417 = vmatprep.subr.bf16.mxu0 0
    %418 = vmatpush1.bf16.msra.mxu0 0
    %419 = vmatprep.subr.bf16.mxu0 0
    %420 = vmatpush1.bf16.msra.mxu0 0
    %421 = vmatprep.subr.bf16.mxu0 0
    %422 = vmatpush1.bf16.msra.mxu0 0
    %423 = vmatprep.subr.bf16.mxu0 0
    %424 = vmatpush1.bf16.msra.mxu0 0
    %425 = vmatprep.subr.bf16.mxu0 0
    %426 = vmatpush1.bf16.msra.mxu0 0
    %427 = vmatprep.subr.bf16.mxu0 0
    %428 = vmatpush1.bf16.msra.mxu0 0
    %429 = vmatprep.subr.bf16.mxu0 0
    %430 = vmatpush1.bf16.msra.mxu0 0
    %431 = vmatprep.subr.bf16.mxu0 0
    %432 = vmatpush1.bf16.msra.mxu0 0
    %433 = vmatprep.mubr.bf16.mxu0 0
    %434 = vmatmul.mubr.bf16.gmra.mrb[0].mxu0 %v399
    %v435 = vpop.f32.mrb[0].mxu0
    %v436 = vadd.f32 0.0, %v435
    %v437 = vpop.f32.mrb[0].mxu0
    %v438 = vpop.f32.mrb[0].mxu0
    %v439 = vadd.f32 0.0, %v438
    %v440 = vpop.f32.mrb[0].mxu0
    %441 = vdwg.mxu0
    %442 = vrot.lane.b32.xlu0 %v198, 112
    %v443 = vpop.permute.xlu0 %442
    %444 = vrot.lane.b32.xlu0 %v199, 112
    %v445 = vpop.permute.xlu0 %444
    %v447 = vsel %vm200, %v443, 0
    %v450 = vsel %vm200, %v445, 0
    %452 = vmatprep.subr.bf16.mxu0 0
    %453 = vmatpush1.bf16.xpose.msra.mxu0 %v450
    %454 = vmatprep.subr.bf16.mxu0 0
    %455 = vmatpush1.bf16.xpose.msra.mxu0 0
    %456 = vmatprep.subr.bf16.mxu0 0
    %457 = vmatpush1.bf16.xpose.msra.mxu0 0
    %458 = vmatprep.subr.bf16.mxu0 0
    %459 = vmatpush1.bf16.xpose.msra.mxu0 0
    %460 = vmatprep.subr.bf16.mxu0 0
    %461 = vmatpush1.bf16.xpose.msra.mxu0 0
    %462 = vmatprep.subr.bf16.mxu0 0
    %463 = vmatpush1.bf16.xpose.msra.mxu0 0
    %464 = vmatprep.subr.bf16.mxu0 0
    %465 = vmatpush1.bf16.xpose.msra.mxu0 0
    %466 = vmatprep.subr.bf16.mxu0 0
    %467 = vmatpush1.bf16.xpose.msra.mxu0 0
    %468 = vmatprep.subr.bf16.mxu0 0
    %469 = vmatpush1.bf16.xpose.msra.mxu0 0
    %470 = vmatprep.subr.bf16.mxu0 0
    %471 = vmatpush1.bf16.xpose.msra.mxu0 0
    %472 = vmatprep.subr.bf16.mxu0 0
    %473 = vmatpush1.bf16.xpose.msra.mxu0 0
    %474 = vmatprep.subr.bf16.mxu0 0
    %475 = vmatpush1.bf16.xpose.msra.mxu0 0
    %476 = vmatprep.subr.bf16.mxu0 0
    %477 = vmatpush1.bf16.xpose.msra.mxu0 0
    %478 = vmatprep.subr.bf16.mxu0 0
    %479 = vmatpush1.bf16.xpose.msra.mxu0 0
    %480 = vmatprep.subr.bf16.mxu0 0
    %481 = vmatpush1.bf16.xpose.msra.mxu0 0
    %482 = vmatprep.subr.bf16.mxu0 0
    %483 = vmatpush1.bf16.xpose.msra.mxu0 0
    %484 = vmatprep.mubr.bf16.mxu0 0
    %485 = vmatmul.mubr.bf16.gmra.mrb[0].mxu0 %v447
    %v486 = vpop.f32.mrb[0].mxu0
    %v487 = vadd.f32 %v78, %v486
    %v488 = vpop.f32.mrb[0].mxu0
    %v489 = vpop.f32.mrb[0].mxu0
    %v490 = vadd.f32 %v79, %v489
    %v491 = vpop.f32.mrb[0].mxu0
    %492 = vdwg.mxu0
    %v493 = vsel %vm248, %v487, -inf
    %494 = vmax.xlane.f32.xlu0 %v493
    %v495 = vpop.xlane.xlu0 %494
    %v496 = vsel %vm248, %v490, -inf
    %497 = vmax.xlane.f32.xlu0 %v496
    %v498 = vpop.xlane.xlu0 %497
    %v499 = vsub.f32 %v487, %v495
    %v500 = vsub.f32 %v490, %v498
    %v501 = vmul.f32 %v499, 1.442695
    %v502 = vpow.pop %v501
    %v503 = vmul.f32 %v500, 1.442695
    %v504 = vpow.pop %v503
    %v505 = vsel %vm248, %v502, 0.0
    %506 = vadd.xlane.f32.xlu0 %v505
    %v507 = vpop.xlane.xlu0 %506
    %v508 = vsel %vm248, %v504, 0.0
    %509 = vadd.xlane.f32.xlu0 %v508
    %v510 = vpop.xlane.xlu0 %509
    %v511 = vrcp.pop %v507
    %v512 = vrcp.pop %v510
    %v513 = vmul.f32 %v502, %v511
    %v514 = vmul.f32 %v504, %v512
    %v515 = vpack.c.bf16 %v514, %v513
    %516 = vrot.lane.b32.xlu0 %v199, 80
    %v517 = vpop.permute.xlu0 %516
    %v520 = vsel %vm248, %v515, 0
    %522 = vmatprep.subr.bf16.mxu0 0
    %523 = vmatpush1.bf16.msra.mxu0 %v517
    %524 = vmatprep.subr.bf16.mxu0 0
    %525 = vmatpush1.bf16.msra.mxu0 0
    %526 = vmatprep.subr.bf16.mxu0 0
    %527 = vmatpush1.bf16.msra.mxu0 0
    %528 = vmatprep.subr.bf16.mxu0 0
    %529 = vmatpush1.bf16.msra.mxu0 0
    %530 = vmatprep.subr.bf16.mxu0 0
    %531 = vmatpush1.bf16.msra.mxu0 0
    %532 = vmatprep.subr.bf16.mxu0 0
    %533 = vmatpush1.bf16.msra.mxu0 0
    %534 = vmatprep.subr.bf16.mxu0 0
    %535 = vmatpush1.bf16.msra.mxu0 0
    %536 = vmatprep.subr.bf16.mxu0 0
    %537 = vmatpush1.bf16.msra.mxu0 0
    %538 = vmatprep.subr.bf16.mxu0 0
    %539 = vmatpush1.bf16.msra.mxu0 0
    %540 = vmatprep.subr.bf16.mxu0 0
    %541 = vmatpush1.bf16.msra.mxu0 0
    %542 = vmatprep.subr.bf16.mxu0 0
    %543 = vmatpush1.bf16.msra.mxu0 0
    %544 = vmatprep.subr.bf16.mxu0 0
    %545 = vmatpush1.bf16.msra.mxu0 0
    %546 = vmatprep.subr.bf16.mxu0 0
    %547 = vmatpush1.bf16.msra.mxu0 0
    %548 = vmatprep.subr.bf16.mxu0 0
    %549 = vmatpush1.bf16.msra.mxu0 0
    %550 = vmatprep.subr.bf16.mxu0 0
    %551 = vmatpush1.bf16.msra.mxu0 0
    %552 = vmatprep.subr.bf16.mxu0 0
    %553 = vmatpush1.bf16.msra.mxu0 0
    %554 = vmatprep.mubr.bf16.mxu0 0
    %555 = vmatmul.mubr.bf16.gmra.mrb[0].mxu0 %v520
    %v556 = vpop.f32.mrb[0].mxu0
    %v557 = vadd.f32 0.0, %v556
    %v558 = vpop.f32.mrb[0].mxu0
    %v559 = vpop.f32.mrb[0].mxu0
    %v560 = vadd.f32 0.0, %v559
    %v561 = vpop.f32.mrb[0].mxu0
    %562 = vdwg.mxu0
    %563 = vrot.lane.b32.xlu0 %v198, 104
    %v564 = vpop.permute.xlu0 %563
    %565 = vrot.lane.b32.xlu0 %v199, 104
    %v566 = vpop.permute.xlu0 %565
    %v568 = vsel %vm200, %v564, 0
    %v571 = vsel %vm200, %v566, 0
    %573 = vmatprep.subr.bf16.mxu0 0
    %574 = vmatpush1.bf16.xpose.msra.mxu0 %v571
    %575 = vmatprep.subr.bf16.mxu0 0
    %576 = vmatpush1.bf16.xpose.msra.mxu0 0
    %577 = vmatprep.subr.bf16.mxu0 0
    %578 = vmatpush1.bf16.xpose.msra.mxu0 0
    %579 = vmatprep.subr.bf16.mxu0 0
    %580 = vmatpush1.bf16.xpose.msra.mxu0 0
    %581 = vmatprep.subr.bf16.mxu0 0
    %582 = vmatpush1.bf16.xpose.msra.mxu0 0
    %583 = vmatprep.subr.bf16.mxu0 0
    %584 = vmatpush1.bf16.xpose.msra.mxu0 0
    %585 = vmatprep.subr.bf16.mxu0 0
    %586 = vmatpush1.bf16.xpose.msra.mxu0 0
    %587 = vmatprep.subr.bf16.mxu0 0
    %588 = vmatpush1.bf16.xpose.msra.mxu0 0
    %589 = vmatprep.subr.bf16.mxu0 0
    %590 = vmatpush1.bf16.xpose.msra.mxu0 0
    %591 = vmatprep.subr.bf16.mxu0 0
    %592 = vmatpush1.bf16.xpose.msra.mxu0 0
    %593 = vmatprep.subr.bf16.mxu0 0
    %594 = vmatpush1.bf16.xpose.msra.mxu0 0
    %595 = vmatprep.subr.bf16.mxu0 0
    %596 = vmatpush1.bf16.xpose.msra.mxu0 0
    %597 = vmatprep.subr.bf16.mxu0 0
    %598 = vmatpush1.bf16.xpose.msra.mxu0 0
    %599 = vmatprep.subr.bf16.mxu0 0
    %600 = vmatpush1.bf16.xpose.msra.mxu0 0
    %601 = vmatprep.subr.bf16.mxu0 0
    %602 = vmatpush1.bf16.xpose.msra.mxu0 0
    %603 = vmatprep.subr.bf16.mxu0 0
    %604 = vmatpush1.bf16.xpose.msra.mxu0 0
    %605 = vmatprep.mubr.bf16.mxu0 0
    %606 = vmatmul.mubr.bf16.gmra.mrb[0].mxu0 %v568
    %v607 = vpop.f32.mrb[0].mxu0
    %v608 = vadd.f32 %v78, %v607
    %v609 = vpop.f32.mrb[0].mxu0
    %v610 = vpop.f32.mrb[0].mxu0
    %v611 = vadd.f32 %v79, %v610
    %v612 = vpop.f32.mrb[0].mxu0
    %613 = vdwg.mxu0
    %v614 = vsel %vm248, %v608, -inf
    %615 = vmax.xlane.f32.xlu0 %v614
    %v616 = vpop.xlane.xlu0 %615
    %v617 = vsel %vm248, %v611, -inf
    %618 = vmax.xlane.f32.xlu0 %v617
    %v619 = vpop.xlane.xlu0 %618
    %v620 = vsub.f32 %v608, %v616
    %v621 = vsub.f32 %v611, %v619
    %v622 = vmul.f32 %v620, 1.442695
    %v623 = vpow.pop %v622
    %v624 = vmul.f32 %v621, 1.442695
    %v625 = vpow.pop %v624
    %v626 = vsel %vm248, %v623, 0.0
    %627 = vadd.xlane.f32.xlu0 %v626
    %v628 = vpop.xlane.xlu0 %627
    %v629 = vsel %vm248, %v625, 0.0
    %630 = vadd.xlane.f32.xlu0 %v629
    %v631 = vpop.xlane.xlu0 %630
    %v632 = vrcp.pop %v628
    %v633 = vrcp.pop %v631
    %v634 = vmul.f32 %v623, %v632
    %v635 = vmul.f32 %v625, %v633
    %v636 = vpack.c.bf16 %v635, %v634
    %637 = vrot.lane.b32.xlu0 %v199, 72
    %v638 = vpop.permute.xlu0 %637
    %v641 = vsel %vm248, %v636, 0
    %643 = vmatprep.subr.bf16.mxu0 0
    %644 = vmatpush1.bf16.msra.mxu0 %v638
    %645 = vmatprep.subr.bf16.mxu0 0
    %646 = vmatpush1.bf16.msra.mxu0 0
    %647 = vmatprep.subr.bf16.mxu0 0
    %648 = vmatpush1.bf16.msra.mxu0 0
    %649 = vmatprep.subr.bf16.mxu0 0
    %650 = vmatpush1.bf16.msra.mxu0 0
    %651 = vmatprep.subr.bf16.mxu0 0
    %652 = vmatpush1.bf16.msra.mxu0 0
    %653 = vmatprep.subr.bf16.mxu0 0
    %654 = vmatpush1.bf16.msra.mxu0 0
    %655 = vmatprep.subr.bf16.mxu0 0
    %656 = vmatpush1.bf16.msra.mxu0 0
    %657 = vmatprep.subr.bf16.mxu0 0
    %658 = vmatpush1.bf16.msra.mxu0 0
    %659 = vmatprep.subr.bf16.mxu0 0
    %660 = vmatpush1.bf16.msra.mxu0 0
    %661 = vmatprep.subr.bf16.mxu0 0
    %662 = vmatpush1.bf16.msra.mxu0 0
    %663 = vmatprep.subr.bf16.mxu0 0
    %664 = vmatpush1.bf16.msra.mxu0 0
    %665 = vmatprep.subr.bf16.mxu0 0
    %666 = vmatpush1.bf16.msra.mxu0 0
    %667 = vmatprep.subr.bf16.mxu0 0
    %668 = vmatpush1.bf16.msra.mxu0 0
    %669 = vmatprep.subr.bf16.mxu0 0
    %670 = vmatpush1.bf16.msra.mxu0 0
    %671 = vmatprep.subr.bf16.mxu0 0
    %672 = vmatpush1.bf16.msra.mxu0 0
    %673 = vmatprep.subr.bf16.mxu0 0
    %674 = vmatpush1.bf16.msra.mxu0 0
    %675 = vmatprep.mubr.bf16.mxu0 0
    %676 = vmatmul.mubr.bf16.gmra.mrb[0].mxu0 %v641
    %v677 = vpop.f32.mrb[0].mxu0
    %v678 = vadd.f32 0.0, %v677
    %v679 = vpop.f32.mrb[0].mxu0
    %v680 = vpop.f32.mrb[0].mxu0
    %v681 = vadd.f32 0.0, %v680
    %v682 = vpop.f32.mrb[0].mxu0
    %683 = vdwg.mxu0
    %686 = vrot.lane.b32.xlu0 %v436, 8
    %v687 = vpop.permute.xlu0 %686
    %688 = vrot.lane.b32.xlu0 %v439, 8
    %v689 = vpop.permute.xlu0 %688
    %694 = vrot.lane.b32.xlu0 %v557, 16
    %v695 = vpop.permute.xlu0 %694
    %696 = vrot.lane.b32.xlu0 %v560, 16
    %v697 = vpop.permute.xlu0 %696
    %702 = vrot.lane.b32.xlu0 %v678, 24
    %v703 = vpop.permute.xlu0 %702
    %704 = vrot.lane.b32.xlu0 %v681, 24
    %v705 = vpop.permute.xlu0 %704
    %v708 = vsel %vm200, %v314, %v687
    %v709 = vsel %vm200, %v317, %v689
    %v710 = vsel %vm248, %v708, %v695
    %v711 = vsel %vm248, %v709, %v697
    %vm712 = vcmask 195584
    %v713 = vsel %vm712, %v710, %v703
    %v714 = vsel %vm712, %v711, %v705
    %v715 = vld [vmem:[#allocation7 + $0x10] sm:$0xf]
    %v716 = vld [vmem:[#allocation7 + $0x14] sm:$0xf]
    %v717 = vld [vmem:[#allocation7 + $0x18] sm:$0xf]
    %v718 = vld [vmem:[#allocation7 + $0x1c] sm:$0xf]
    %v719 = vpack.c.bf16 %v714, %v713
    %v720 = vld [vmem:[#allocation8 + $0x1] sm:$0x1]
    %v721 = vlaneseq
    %v722 = vshrl.u32 %v721, 7
    %v723 = vsub.s32 0, %v722
    %v724 = vrot.slane %v720, %v723
    %v729 = vunpack.c.l.b16 %v715
    %v730 = vunpack.c.l.b16 %v716
    %v731 = vunpack.c.l.b16 %v717
    %v732 = vunpack.c.l.b16 %v718
    %v733 = vpack.c.b16 %v730, %v729
    %v734 = vpack.c.b16 %v732, %v731
    %v738 = vsel %vm102, %v719, 0
    %740 = vmatprep.subr.bf16.mxu0 0
    %741 = vmatpush1.bf16.msra.mxu0 %v733
    %742 = vmatprep.subr.bf16.mxu0 0
    %743 = vmatpush1.bf16.msra.mxu0 %v734
    %744 = vmatprep.subr.bf16.mxu0 0
    %745 = vmatpush1.bf16.msra.mxu0 0
    %746 = vmatprep.subr.bf16.mxu0 0
    %747 = vmatpush1.bf16.msra.mxu0 0
    %748 = vmatprep.subr.bf16.mxu0 0
    %749 = vmatpush1.bf16.msra.mxu0 0
    %750 = vmatprep.subr.bf16.mxu0 0
    %751 = vmatpush1.bf16.msra.mxu0 0
    %752 = vmatprep.subr.bf16.mxu0 0
    %753 = vmatpush1.bf16.msra.mxu0 0
    %754 = vmatprep.subr.bf16.mxu0 0
    %755 = vmatpush1.bf16.msra.mxu0 0
    %756 = vmatprep.subr.bf16.mxu0 0
    %757 = vmatpush1.bf16.msra.mxu0 0
    %758 = vmatprep.subr.bf16.mxu0 0
    %759 = vmatpush1.bf16.msra.mxu0 0
    %760 = vmatprep.subr.bf16.mxu0 0
    %761 = vmatpush1.bf16.msra.mxu0 0
    %762 = vmatprep.subr.bf16.mxu0 0
    %763 = vmatpush1.bf16.msra.mxu0 0
    %764 = vmatprep.subr.bf16.mxu0 0
    %765 = vmatpush1.bf16.msra.mxu0 0
    %766 = vmatprep.subr.bf16.mxu0 0
    %767 = vmatpush1.bf16.msra.mxu0 0
    %768 = vmatprep.subr.bf16.mxu0 0
    %769 = vmatpush1.bf16.msra.mxu0 0
    %770 = vmatprep.subr.bf16.mxu0 0
    %771 = vmatpush1.bf16.msra.mxu0 0
    %772 = vmatprep.mubr.bf16.mxu0 0
    %773 = vmatmul.mubr.bf16.gmra.mrb[0].mxu0 %v738
    %v774 = vpop.f32.mrb[0].mxu0
    %v775 = vadd.f32 %v724, %v774
    %v776 = vpop.f32.mrb[0].mxu0
    %v777 = vpop.f32.mrb[0].mxu0
    %v778 = vadd.f32 %v724, %v777
    %v779 = vpop.f32.mrb[0].mxu0
    %780 = vdwg.mxu0
    %v781 = vadd.f32 %v74, %v775
    %v782 = vadd.f32 %v75, %v778
    %v783 = vld [vmem:[#allocation8 + $0x6] sm:$0x1]
    %v784 = vld [vmem:[#allocation8 + $0x7] sm:$0x1]
    %v785 = vsel %vm102, %v781, 0.0
    %786 = vadd.xlane.f32.xlu0 %v785
    %v787 = vpop.xlane.xlu0 %786
    %v788 = vsel %vm102, %v782, 0.0
    %789 = vadd.xlane.f32.xlu0 %v788
    %v790 = vpop.xlane.xlu0 %789
    %v791 = vrcp.pop 32.0
    %v792 = vmul.f32 %v787, %v791
    %v793 = vmul.f32 %v790, %v791
    %v794 = vsub.f32 %v781, %v792
    %v795 = vsub.f32 %v782, %v793
    %v796 = vmul.f32 %v794, %v794
    %v797 = vmul.f32 %v795, %v795
    %v798 = vsel %vm102, %v796, 0.0
    %799 = vadd.xlane.f32.xlu0 %v798
    %v800 = vpop.xlane.xlu0 %799
    %v801 = vsel %vm102, %v797, 0.0
    %802 = vadd.xlane.f32.xlu0 %v801
    %v803 = vpop.xlane.xlu0 %802
    %v804 = vmul.f32 %v800, %v791
    %v805 = vmul.f32 %v803, %v791
    %v806 = vadd.f32 %v804, 1e-05
    %v807 = vadd.f32 %v805, 1e-05
    %v808 = vrsqrt.pop %v806
    %v809 = vrsqrt.pop %v807
    %v810 = vmul.f32 %v794, %v808
    %v811 = vmul.f32 %v795, %v809
    %v812 = vlaneseq
    %v813 = vshrl.u32 %v812, 7
    %v814 = vsub.s32 0, %v813
    %v815 = vrot.slane %v783, %v814
    %v816 = vmul.f32 %v810, %v815
    %v817 = vmul.f32 %v811, %v815
    %v818 = vlaneseq
    %v819 = vshrl.u32 %v818, 7
    %v820 = vsub.s32 0, %v819
    %v821 = vrot.slane %v784, %v820
    %v822 = vadd.f32 %v816, %v821
    %v823 = vadd.f32 %v817, %v821
    %v824 = vld [vmem:[#allocation7 + $0x20] sm:$0xf]
    %v825 = vld [vmem:[#allocation7 + $0x24] sm:$0xf]
    %v826 = vld [vmem:[#allocation7 + $0x28] sm:$0xf]
    %v827 = vld [vmem:[#allocation7 + $0x2c] sm:$0xf]
    %v828 = vpack.c.bf16 %v823, %v822
    %v829 = vld [vmem:[#allocation8 + $0x2] sm:$0x1]
    %v830 = vlaneseq
    %v831 = vshrl.u32 %v830, 7
    %v832 = vsub.s32 0, %v831
    %v833 = vrot.slane %v829, %v832
    %v838 = vunpack.c.l.b16 %v824
    %v839 = vunpack.c.l.b16 %v825
    %v840 = vunpack.c.l.b16 %v826
    %v841 = vunpack.c.l.b16 %v827
    %v842 = vpack.c.b16 %v839, %v838
    %v843 = vpack.c.b16 %v841, %v840
    %v847 = vsel %vm102, %v828, 0
    %849 = vmatprep.subr.bf16.mxu0 0
    %850 = vmatpush1.bf16.msra.mxu0 %v842
    %851 = vmatprep.subr.bf16.mxu0 0
    %852 = vmatpush1.bf16.msra.mxu0 %v843
    %853 = vmatprep.subr.bf16.mxu0 0
    %854 = vmatpush1.bf16.msra.mxu0 0
    %855 = vmatprep.subr.bf16.mxu0 0
    %856 = vmatpush1.bf16.msra.mxu0 0
    %857 = vmatprep.subr.bf16.mxu0 0
    %858 = vmatpush1.bf16.msra.mxu0 0
    %859 = vmatprep.subr.bf16.mxu0 0
    %860 = vmatpush1.bf16.msra.mxu0 0
    %861 = vmatprep.subr.bf16.mxu0 0
    %862 = vmatpush1.bf16.msra.mxu0 0
    %863 = vmatprep.subr.bf16.mxu0 0
    %864 = vmatpush1.bf16.msra.mxu0 0
    %865 = vmatprep.subr.bf16.mxu0 0
    %866 = vmatpush1.bf16.msra.mxu0 0
    %867 = vmatprep.subr.bf16.mxu0 0
    %868 = vmatpush1.bf16.msra.mxu0 0
    %869 = vmatprep.subr.bf16.mxu0 0
    %870 = vmatpush1.bf16.msra.mxu0 0
    %871 = vmatprep.subr.bf16.mxu0 0
    %872 = vmatpush1.bf16.msra.mxu0 0
    %873 = vmatprep.subr.bf16.mxu0 0
    %874 = vmatpush1.bf16.msra.mxu0 0
    %875 = vmatprep.subr.bf16.mxu0 0
    %876 = vmatpush1.bf16.msra.mxu0 0
    %877 = vmatprep.subr.bf16.mxu0 0
    %878 = vmatpush1.bf16.msra.mxu0 0
    %879 = vmatprep.subr.bf16.mxu0 0
    %880 = vmatpush1.bf16.msra.mxu0 0
    %881 = vmatprep.mubr.bf16.mxu0 0
    %882 = vmatmul.mubr.bf16.gmra.mrb[0].mxu0 %v847
    %v883 = vpop.f32.mrb[0].mxu0
    %v884 = vadd.f32 %v833, %v883
    %v885 = vpop.f32.mrb[0].mxu0
    %v886 = vpop.f32.mrb[0].mxu0
    %v887 = vadd.f32 %v833, %v886
    %v888 = vpop.f32.mrb[0].mxu0
    %889 = vdwg.mxu0
    %v890 = vpack.c.bf16 %v77, %v76
    %891 = vrot.lane.b32.xlu0 %v842, 96
    %v892 = vpop.permute.xlu0 %891
    %893 = vrot.lane.b32.xlu0 %v843, 96
    %v894 = vpop.permute.xlu0 %893
    %898 = vrot.lane.b32.xlu0 %v833, 96
    %v899 = vpop.permute.xlu0 %898
    %v902 = vsel %vm102, %v890, 0
    %904 = vmatprep.subr.bf16.mxu0 0
    %905 = vmatpush1.bf16.msra.mxu0 %v892
    %906 = vmatprep.subr.bf16.mxu0 0
    %907 = vmatpush1.bf16.msra.mxu0 %v894
    %908 = vmatprep.subr.bf16.mxu0 0
    %909 = vmatpush1.bf16.msra.mxu0 0
    %910 = vmatprep.subr.bf16.mxu0 0
    %911 = vmatpush1.bf16.msra.mxu0 0
    %912 = vmatprep.subr.bf16.mxu0 0
    %913 = vmatpush1.bf16.msra.mxu0 0
    %914 = vmatprep.subr.bf16.mxu0 0
    %915 = vmatpush1.bf16.msra.mxu0 0
    %916 = vmatprep.subr.bf16.mxu0 0
    %917 = vmatpush1.bf16.msra.mxu0 0
    %918 = vmatprep.subr.bf16.mxu0 0
    %919 = vmatpush1.bf16.msra.mxu0 0
    %920 = vmatprep.subr.bf16.mxu0 0
    %921 = vmatpush1.bf16.msra.mxu0 0
    %922 = vmatprep.subr.bf16.mxu0 0
    %923 = vmatpush1.bf16.msra.mxu0 0
    %924 = vmatprep.subr.bf16.mxu0 0
    %925 = vmatpush1.bf16.msra.mxu0 0
    %926 = vmatprep.subr.bf16.mxu0 0
    %927 = vmatpush1.bf16.msra.mxu0 0
    %928 = vmatprep.subr.bf16.mxu0 0
    %929 = vmatpush1.bf16.msra.mxu0 0
    %930 = vmatprep.subr.bf16.mxu0 0
    %931 = vmatpush1.bf16.msra.mxu0 0
    %932 = vmatprep.subr.bf16.mxu0 0
    %933 = vmatpush1.bf16.msra.mxu0 0
    %934 = vmatprep.subr.bf16.mxu0 0
    %935 = vmatpush1.bf16.msra.mxu0 0
    %936 = vmatprep.mubr.bf16.mxu0 0
    %937 = vmatmul.mubr.bf16.gmra.mrb[0].mxu0 %v902
    %v938 = vpop.f32.mrb[0].mxu0
    %v939 = vadd.f32 %v899, %v938
    %v940 = vpop.f32.mrb[0].mxu0
    %v941 = vpop.f32.mrb[0].mxu0
    %v942 = vadd.f32 %v899, %v941
    %v943 = vpop.f32.mrb[0].mxu0
    %944 = vdwg.mxu0
    %v945 = vpack.c.bf16 %v887, %v884
    %v946 = vpack.c.bf16 %v942, %v939
    %949 = vrot.lane.b32.xlu0 %v78, 112
    %v950 = vpop.permute.xlu0 %949
    %951 = vrot.lane.b32.xlu0 %v79, 112
    %v952 = vpop.permute.xlu0 %951
    %v956 = vsel %vm200, %v945, 0
    %v959 = vsel %vm200, %v946, 0
    %961 = vmatprep.subr.bf16.mxu0 0
    %962 = vmatpush1.bf16.xpose.msra.mxu0 %v959
    %963 = vmatprep.subr.bf16.mxu0 0
    %964 = vmatpush1.bf16.xpose.msra.mxu0 0
    %965 = vmatprep.subr.bf16.mxu0 0
    %966 = vmatpush1.bf16.xpose.msra.mxu0 0
    %967 = vmatprep.subr.bf16.mxu0 0
    %968 = vmatpush1.bf16.xpose.msra.mxu0 0
    %969 = vmatprep.subr.bf16.mxu0 0
    %970 = vmatpush1.bf16.xpose.msra.mxu0 0
    %971 = vmatprep.subr.bf16.mxu0 0
    %972 = vmatpush1.bf16.xpose.msra.mxu0 0
    %973 = vmatprep.subr.bf16.mxu0 0
    %974 = vmatpush1.bf16.xpose.msra.mxu0 0
    %975 = vmatprep.subr.bf16.mxu0 0
    %976 = vmatpush1.bf16.xpose.msra.mxu0 0
    %977 = vmatprep.subr.bf16.mxu0 0
    %978 = vmatpush1.bf16.xpose.msra.mxu0 0
    %979 = vmatprep.subr.bf16.mxu0 0
    %980 = vmatpush1.bf16.xpose.msra.mxu0 0
    %981 = vmatprep.subr.bf16.mxu0 0
    %982 = vmatpush1.bf16.xpose.msra.mxu0 0
    %983 = vmatprep.subr.bf16.mxu0 0
    %984 = vmatpush1.bf16.xpose.msra.mxu0 0
    %985 = vmatprep.subr.bf16.mxu0 0
    %986 = vmatpush1.bf16.xpose.msra.mxu0 0
    %987 = vmatprep.subr.bf16.mxu0 0
    %988 = vmatpush1.bf16.xpose.msra.mxu0 0
    %989 = vmatprep.subr.bf16.mxu0 0
    %990 = vmatpush1.bf16.xpose.msra.mxu0 0
    %991 = vmatprep.subr.bf16.mxu0 0
    %992 = vmatpush1.bf16.xpose.msra.mxu0 0
    %993 = vmatprep.mubr.bf16.mxu0 0
    %994 = vmatmul.mubr.bf16.gmra.mrb[0].mxu0 %v956
    %v995 = vpop.f32.mrb[0].mxu0
    %v996 = vadd.f32 %v950, %v995
    %v997 = vpop.f32.mrb[0].mxu0
    %v998 = vpop.f32.mrb[0].mxu0
    %v999 = vadd.f32 %v952, %v998
    %v1000 = vpop.f32.mrb[0].mxu0
    %1001 = vdwg.mxu0
    %v1002 = vsel %vm248, %v996, -inf
    %1003 = vmax.xlane.f32.xlu0 %v1002
    %v1004 = vpop.xlane.xlu0 %1003
    %v1005 = vsel %vm248, %v999, -inf
    %1006 = vmax.xlane.f32.xlu0 %v1005
    %v1007 = vpop.xlane.xlu0 %1006
    %v1008 = vsub.f32 %v996, %v1004
    %v1009 = vsub.f32 %v999, %v1007
    %v1010 = vmul.f32 %v1008, 1.442695
    %v1011 = vpow.pop %v1010
    %v1012 = vmul.f32 %v1009, 1.442695
    %v1013 = vpow.pop %v1012
    %v1014 = vsel %vm248, %v1011, 0.0
    %1015 = vadd.xlane.f32.xlu0 %v1014
    %v1016 = vpop.xlane.xlu0 %1015
    %v1017 = vsel %vm248, %v1013, 0.0
    %1018 = vadd.xlane.f32.xlu0 %v1017
    %v1019 = vpop.xlane.xlu0 %1018
    %v1020 = vrcp.pop %v1016
    %v1021 = vrcp.pop %v1019
    %v1022 = vmul.f32 %v1011, %v1020
    %v1023 = vmul.f32 %v1013, %v1021
    %v1024 = vpack.c.bf16 %v1023, %v1022
    %1026 = vrot.lane.b32.xlu0 %v946, 96
    %v1027 = vpop.permute.xlu0 %1026
    %v1030 = vsel %vm248, %v1024, 0
    %1032 = vmatprep.subr.bf16.mxu0 0
    %1033 = vmatpush1.bf16.msra.mxu0 %v1027
    %1034 = vmatprep.subr.bf16.mxu0 0
    %1035 = vmatpush1.bf16.msra.mxu0 0
    %1036 = vmatprep.subr.bf16.mxu0 0
    %1037 = vmatpush1.bf16.msra.mxu0 0
    %1038 = vmatprep.subr.bf16.mxu0 0
    %1039 = vmatpush1.bf16.msra.mxu0 0
    %1040 = vmatprep.subr.bf16.mxu0 0
    %1041 = vmatpush1.bf16.msra.mxu0 0
    %1042 = vmatprep.subr.bf16.mxu0 0
    %1043 = vmatpush1.bf16.msra.mxu0 0
    %1044 = vmatprep.subr.bf16.mxu0 0
    %1045 = vmatpush1.bf16.msra.mxu0 0
    %1046 = vmatprep.subr.bf16.mxu0 0
    %1047 = vmatpush1.bf16.msra.mxu0 0
    %1048 = vmatprep.subr.bf16.mxu0 0
    %1049 = vmatpush1.bf16.msra.mxu0 0
    %1050 = vmatprep.subr.bf16.mxu0 0
    %1051 = vmatpush1.bf16.msra.mxu0 0
    %1052 = vmatprep.subr.bf16.mxu0 0
    %1053 = vmatpush1.bf16.msra.mxu0 0
    %1054 = vmatprep.subr.bf16.mxu0 0
    %1055 = vmatpush1.bf16.msra.mxu0 0
    %1056 = vmatprep.subr.bf16.mxu0 0
    %1057 = vmatpush1.bf16.msra.mxu0 0
    %1058 = vmatprep.subr.bf16.mxu0 0
    %1059 = vmatpush1.bf16.msra.mxu0 0
    %1060 = vmatprep.subr.bf16.mxu0 0
    %1061 = vmatpush1.bf16.msra.mxu0 0
    %1062 = vmatprep.subr.bf16.mxu0 0
    %1063 = vmatpush1.bf16.msra.mxu0 0
    %1064 = vmatprep.mubr.bf16.mxu0 0
    %1065 = vmatmul.mubr.bf16.gmra.mrb[0].mxu0 %v1030
    %v1066 = vpop.f32.mrb[0].mxu0
    %v1067 = vadd.f32 0.0, %v1066
    %v1068 = vpop.f32.mrb[0].mxu0
    %v1069 = vpop.f32.mrb[0].mxu0
    %v1070 = vadd.f32 0.0, %v1069
    %v1071 = vpop.f32.mrb[0].mxu0
    %1072 = vdwg.mxu0
    %1074 = vrot.lane.b32.xlu0 %v945, 120
    %v1075 = vpop.permute.xlu0 %1074
    %1076 = vrot.lane.b32.xlu0 %v946, 120
    %v1077 = vpop.permute.xlu0 %1076
    %v1079 = vsel %vm200, %v1075, 0
    %v1082 = vsel %vm200, %v1077, 0
    %1084 = vmatprep.subr.bf16.mxu0 0
    %1085 = vmatpush1.bf16.xpose.msra.mxu0 %v1082
    %1086 = vmatprep.subr.bf16.mxu0 0
    %1087 = vmatpush1.bf16.xpose.msra.mxu0 0
    %1088 = vmatprep.subr.bf16.mxu0 0
    %1089 = vmatpush1.bf16.xpose.msra.mxu0 0
    %1090 = vmatprep.subr.bf16.mxu0 0
    %1091 = vmatpush1.bf16.xpose.msra.mxu0 0
    %1092 = vmatprep.subr.bf16.mxu0 0
    %1093 = vmatpush1.bf16.xpose.msra.mxu0 0
    %1094 = vmatprep.subr.bf16.mxu0 0
    %1095 = vmatpush1.bf16.xpose.msra.mxu0 0
    %1096 = vmatprep.subr.bf16.mxu0 0
    %1097 = vmatpush1.bf16.xpose.msra.mxu0 0
    %1098 = vmatprep.subr.bf16.mxu0 0
    %1099 = vmatpush1.bf16.xpose.msra.mxu0 0
    %1100 = vmatprep.subr.bf16.mxu0 0
    %1101 = vmatpush1.bf16.xpose.msra.mxu0 0
    %1102 = vmatprep.subr.bf16.mxu0 0
    %1103 = vmatpush1.bf16.xpose.msra.mxu0 0
    %1104 = vmatprep.subr.bf16.mxu0 0
    %1105 = vmatpush1.bf16.xpose.msra.mxu0 0
    %1106 = vmatprep.subr.bf16.mxu0 0
    %1107 = vmatpush1.bf16.xpose.msra.mxu0 0
    %1108 = vmatprep.subr.bf16.mxu0 0
    %1109 = vmatpush1.bf16.xpose.msra.mxu0 0
    %1110 = vmatprep.subr.bf16.mxu0 0
    %1111 = vmatpush1.bf16.xpose.msra.mxu0 0
    %1112 = vmatprep.subr.bf16.mxu0 0
    %1113 = vmatpush1.bf16.xpose.msra.mxu0 0
    %1114 = vmatprep.subr.bf16.mxu0 0
    %1115 = vmatpush1.bf16.xpose.msra.mxu0 0
    %1116 = vmatprep.mubr.bf16.mxu0 0
    %1117 = vmatmul.mubr.bf16.gmra.mrb[0].mxu0 %v1079
    %v1118 = vpop.f32.mrb[0].mxu0
    %v1119 = vadd.f32 %v950, %v1118
    %v1120 = vpop.f32.mrb[0].mxu0
    %v1121 = vpop.f32.mrb[0].mxu0
    %v1122 = vadd.f32 %v952, %v1121
    %v1123 = vpop.f32.mrb[0].mxu0
    %1124 = vdwg.mxu0
    %v1125 = vsel %vm248, %v1119, -inf
    %1126 = vmax.xlane.f32.xlu0 %v1125
    %v1127 = vpop.xlane.xlu0 %1126
    %v1128 = vsel %vm248, %v1122, -inf
    %1129 = vmax.xlane.f32.xlu0 %v1128
    %v1130 = vpop.xlane.xlu0 %1129
    %v1131 = vsub.f32 %v1119, %v1127
    %v1132 = vsub.f32 %v1122, %v1130
    %v1133 = vmul.f32 %v1131, 1.442695
    %v1134 = vpow.pop %v1133
    %v1135 = vmul.f32 %v1132, 1.442695
    %v1136 = vpow.pop %v1135
    %v1137 = vsel %vm248, %v1134, 0.0
    %1138 = vadd.xlane.f32.xlu0 %v1137
    %v1139 = vpop.xlane.xlu0 %1138
    %v1140 = vsel %vm248, %v1136, 0.0
    %1141 = vadd.xlane.f32.xlu0 %v1140
    %v1142 = vpop.xlane.xlu0 %1141
    %v1143 = vrcp.pop %v1139
    %v1144 = vrcp.pop %v1142
    %v1145 = vmul.f32 %v1134, %v1143
    %v1146 = vmul.f32 %v1136, %v1144
    %v1147 = vpack.c.bf16 %v1146, %v1145
    %1148 = vrot.lane.b32.xlu0 %v946, 88
    %v1149 = vpop.permute.xlu0 %1148
    %v1152 = vsel %vm248, %v1147, 0
    %1154 = vmatprep.subr.bf16.mxu0 0
    %1155 = vmatpush1.bf16.msra.mxu0 %v1149
    %1156 = vmatprep.subr.bf16.mxu0 0
    %1157 = vmatpush1.bf16.msra.mxu0 0
    %1158 = vmatprep.subr.bf16.mxu0 0
    %1159 = vmatpush1.bf16.msra.mxu0 0
    %1160 = vmatprep.subr.bf16.mxu0 0
    %1161 = vmatpush1.bf16.msra.mxu0 0
    %1162 = vmatprep.subr.bf16.mxu0 0
    %1163 = vmatpush1.bf16.msra.mxu0 0
    %1164 = vmatprep.subr.bf16.mxu0 0
    %1165 = vmatpush1.bf16.msra.mxu0 0
    %1166 = vmatprep.subr.bf16.mxu0 0
    %1167 = vmatpush1.bf16.msra.mxu0 0
    %1168 = vmatprep.subr.bf16.mxu0 0
    %1169 = vmatpush1.bf16.msra.mxu0 0
    %1170 = vmatprep.subr.bf16.mxu0 0
    %1171 = vmatpush1.bf16.msra.mxu0 0
    %1172 = vmatprep.subr.bf16.mxu0 0
    %1173 = vmatpush1.bf16.msra.mxu0 0
    %1174 = vmatprep.subr.bf16.mxu0 0
    %1175 = vmatpush1.bf16.msra.mxu0 0
    %1176 = vmatprep.subr.bf16.mxu0 0
    %1177 = vmatpush1.bf16.msra.mxu0 0
    %1178 = vmatprep.subr.bf16.mxu0 0
    %1179 = vmatpush1.bf16.msra.mxu0 0
    %1180 = vmatprep.subr.bf16.mxu0 0
    %1181 = vmatpush1.bf16.msra.mxu0 0
    %1182 = vmatprep.subr.bf16.mxu0 0
    %1183 = vmatpush1.bf16.msra.mxu0 0
    %1184 = vmatprep.subr.bf16.mxu0 0
    %1185 = vmatpush1.bf16.msra.mxu0 0
    %1186 = vmatprep.mubr.bf16.mxu0 0
    %1187 = vmatmul.mubr.bf16.gmra.mrb[0].mxu0 %v1152
    %v1188 = vpop.f32.mrb[0].mxu0
    %v1189 = vadd.f32 0.0, %v1188
    %v1190 = vpop.f32.mrb[0].mxu0
    %v1191 = vpop.f32.mrb[0].mxu0
    %v1192 = vadd.f32 0.0, %v1191
    %v1193 = vpop.f32.mrb[0].mxu0
    %1194 = vdwg.mxu0
    %1195 = vrot.lane.b32.xlu0 %v945, 112
    %v1196 = vpop.permute.xlu0 %1195
    %1197 = vrot.lane.b32.xlu0 %v946, 112
    %v1198 = vpop.permute.xlu0 %1197
    %v1200 = vsel %vm200, %v1196, 0
    %v1203 = vsel %vm200, %v1198, 0
    %1205 = vmatprep.subr.bf16.mxu0 0
    %1206 = vmatpush1.bf16.xpose.msra.mxu0 %v1203
    %1207 = vmatprep.subr.bf16.mxu0 0
    %1208 = vmatpush1.bf16.xpose.msra.mxu0 0
    %1209 = vmatprep.subr.bf16.mxu0 0
    %1210 = vmatpush1.bf16.xpose.msra.mxu0 0
    %1211 = vmatprep.subr.bf16.mxu0 0
    %1212 = vmatpush1.bf16.xpose.msra.mxu0 0
    %1213 = vmatprep.subr.bf16.mxu0 0
    %1214 = vmatpush1.bf16.xpose.msra.mxu0 0
    %1215 = vmatprep.subr.bf16.mxu0 0
    %1216 = vmatpush1.bf16.xpose.msra.mxu0 0
    %1217 = vmatprep.subr.bf16.mxu0 0
    %1218 = vmatpush1.bf16.xpose.msra.mxu0 0
    %1219 = vmatprep.subr.bf16.mxu0 0
    %1220 = vmatpush1.bf16.xpose.msra.mxu0 0
    %1221 = vmatprep.subr.bf16.mxu0 0
    %1222 = vmatpush1.bf16.xpose.msra.mxu0 0
    %1223 = vmatprep.subr.bf16.mxu0 0
    %1224 = vmatpush1.bf16.xpose.msra.mxu0 0
    %1225 = vmatprep.subr.bf16.mxu0 0
    %1226 = vmatpush1.bf16.xpose.msra.mxu0 0
    %1227 = vmatprep.subr.bf16.mxu0 0
    %1228 = vmatpush1.bf16.xpose.msra.mxu0 0
    %1229 = vmatprep.subr.bf16.mxu0 0
    %1230 = vmatpush1.bf16.xpose.msra.mxu0 0
    %1231 = vmatprep.subr.bf16.mxu0 0
    %1232 = vmatpush1.bf16.xpose.msra.mxu0 0
    %1233 = vmatprep.subr.bf16.mxu0 0
    %1234 = vmatpush1.bf16.xpose.msra.mxu0 0
    %1235 = vmatprep.subr.bf16.mxu0 0
    %1236 = vmatpush1.bf16.xpose.msra.mxu0 0
    %1237 = vmatprep.mubr.bf16.mxu0 0
    %1238 = vmatmul.mubr.bf16.gmra.mrb[0].mxu0 %v1200
    %v1239 = vpop.f32.mrb[0].mxu0
    %v1240 = vadd.f32 %v950, %v1239
    %v1241 = vpop.f32.mrb[0].mxu0
    %v1242 = vpop.f32.mrb[0].mxu0
    %v1243 = vadd.f32 %v952, %v1242
    %v1244 = vpop.f32.mrb[0].mxu0
    %1245 = vdwg.mxu0
    %v1246 = vsel %vm248, %v1240, -inf
    %1247 = vmax.xlane.f32.xlu0 %v1246
    %v1248 = vpop.xlane.xlu0 %1247
    %v1249 = vsel %vm248, %v1243, -inf
    %1250 = vmax.xlane.f32.xlu0 %v1249
    %v1251 = vpop.xlane.xlu0 %1250
    %v1252 = vsub.f32 %v1240, %v1248
    %v1253 = vsub.f32 %v1243, %v1251
    %v1254 = vmul.f32 %v1252, 1.442695
    %v1255 = vpow.pop %v1254
    %v1256 = vmul.f32 %v1253, 1.442695
    %v1257 = vpow.pop %v1256
    %v1258 = vsel %vm248, %v1255, 0.0
    %1259 = vadd.xlane.f32.xlu0 %v1258
    %v1260 = vpop.xlane.xlu0 %1259
    %v1261 = vsel %vm248, %v1257, 0.0
    %1262 = vadd.xlane.f32.xlu0 %v1261
    %v1263 = vpop.xlane.xlu0 %1262
    %v1264 = vrcp.pop %v1260
    %v1265 = vrcp.pop %v1263
    %v1266 = vmul.f32 %v1255, %v1264
    %v1267 = vmul.f32 %v1257, %v1265
    %v1268 = vpack.c.bf16 %v1267, %v1266
    %1269 = vrot.lane.b32.xlu0 %v946, 80
    %v1270 = vpop.permute.xlu0 %1269
    %v1273 = vsel %vm248, %v1268, 0
    %1275 = vmatprep.subr.bf16.mxu0 0
    %1276 = vmatpush1.bf16.msra.mxu0 %v1270
    %1277 = vmatprep.subr.bf16.mxu0 0
    %1278 = vmatpush1.bf16.msra.mxu0 0
    %1279 = vmatprep.subr.bf16.mxu0 0
    %1280 = vmatpush1.bf16.msra.mxu0 0
    %1281 = vmatprep.subr.bf16.mxu0 0
    %1282 = vmatpush1.bf16.msra.mxu0 0
    %1283 = vmatprep.subr.bf16.mxu0 0
    %1284 = vmatpush1.bf16.msra.mxu0 0
    %1285 = vmatprep.subr.bf16.mxu0 0
    %1286 = vmatpush1.bf16.msra.mxu0 0
    %1287 = vmatprep.subr.bf16.mxu0 0
    %1288 = vmatpush1.bf16.msra.mxu0 0
    %1289 = vmatprep.subr.bf16.mxu0 0
    %1290 = vmatpush1.bf16.msra.mxu0 0
    %1291 = vmatprep.subr.bf16.mxu0 0
    %1292 = vmatpush1.bf16.msra.mxu0 0
    %1293 = vmatprep.subr.bf16.mxu0 0
    %1294 = vmatpush1.bf16.msra.mxu0 0
    %1295 = vmatprep.subr.bf16.mxu0 0
    %1296 = vmatpush1.bf16.msra.mxu0 0
    %1297 = vmatprep.subr.bf16.mxu0 0
    %1298 = vmatpush1.bf16.msra.mxu0 0
    %1299 = vmatprep.subr.bf16.mxu0 0
    %1300 = vmatpush1.bf16.msra.mxu0 0
    %1301 = vmatprep.subr.bf16.mxu0 0
    %1302 = vmatpush1.bf16.msra.mxu0 0
    %1303 = vmatprep.subr.bf16.mxu0 0
    %1304 = vmatpush1.bf16.msra.mxu0 0
    %1305 = vmatprep.subr.bf16.mxu0 0
    %1306 = vmatpush1.bf16.msra.mxu0 0
    %1307 = vmatprep.mubr.bf16.mxu0 0
    %1308 = vmatmul.mubr.bf16.gmra.mrb[0].mxu0 %v1273
    %v1309 = vpop.f32.mrb[0].mxu0
    %v1310 = vadd.f32 0.0, %v1309
    %v1311 = vpop.f32.mrb[0].mxu0
    %v1312 = vpop.f32.mrb[0].mxu0
    %v1313 = vadd.f32 0.0, %v1312
    %v1314 = vpop.f32.mrb[0].mxu0
    %1315 = vdwg.mxu0
    %1316 = vrot.lane.b32.xlu0 %v945, 104
    %v1317 = vpop.permute.xlu0 %1316
    %1318 = vrot.lane.b32.xlu0 %v946, 104
    %v1319 = vpop.permute.xlu0 %1318
    %v1321 = vsel %vm200, %v1317, 0
    %v1324 = vsel %vm200, %v1319, 0
    %1326 = vmatprep.subr.bf16.mxu0 0
    %1327 = vmatpush1.bf16.xpose.msra.mxu0 %v1324
    %1328 = vmatprep.subr.bf16.mxu0 0
    %1329 = vmatpush1.bf16.xpose.msra.mxu0 0
    %1330 = vmatprep.subr.bf16.mxu0 0
    %1331 = vmatpush1.bf16.xpose.msra.mxu0 0
    %1332 = vmatprep.subr.bf16.mxu0 0
    %1333 = vmatpush1.bf16.xpose.msra.mxu0 0
    %1334 = vmatprep.subr.bf16.mxu0 0
    %1335 = vmatpush1.bf16.xpose.msra.mxu0 0
    %1336 = vmatprep.subr.bf16.mxu0 0
    %1337 = vmatpush1.bf16.xpose.msra.mxu0 0
    %1338 = vmatprep.subr.bf16.mxu0 0
    %1339 = vmatpush1.bf16.xpose.msra.mxu0 0
    %1340 = vmatprep.subr.bf16.mxu0 0
    %1341 = vmatpush1.bf16.xpose.msra.mxu0 0
    %1342 = vmatprep.subr.bf16.mxu0 0
    %1343 = vmatpush1.bf16.xpose.msra.mxu0 0
    %1344 = vmatprep.subr.bf16.mxu0 0
    %1345 = vmatpush1.bf16.xpose.msra.mxu0 0
    %1346 = vmatprep.subr.bf16.mxu0 0
    %1347 = vmatpush1.bf16.xpose.msra.mxu0 0
    %1348 = vmatprep.subr.bf16.mxu0 0
    %1349 = vmatpush1.bf16.xpose.msra.mxu0 0
    %1350 = vmatprep.subr.bf16.mxu0 0
    %1351 = vmatpush1.bf16.xpose.msra.mxu0 0
    %1352 = vmatprep.subr.bf16.mxu0 0
    %1353 = vmatpush1.bf16.xpose.msra.mxu0 0
    %1354 = vmatprep.subr.bf16.mxu0 0
    %1355 = vmatpush1.bf16.xpose.msra.mxu0 0
    %1356 = vmatprep.subr.bf16.mxu0 0
    %1357 = vmatpush1.bf16.xpose.msra.mxu0 0
    %1358 = vmatprep.mubr.bf16.mxu0 0
    %1359 = vmatmul.mubr.bf16.gmra.mrb[0].mxu0 %v1321
    %v1360 = vpop.f32.mrb[0].mxu0
    %v1361 = vadd.f32 %v950, %v1360
    %v1362 = vpop.f32.mrb[0].mxu0
    %v1363 = vpop.f32.mrb[0].mxu0
    %v1364 = vadd.f32 %v952, %v1363
    %v1365 = vpop.f32.mrb[0].mxu0
    %1366 = vdwg.mxu0
    %v1367 = vsel %vm248, %v1361, -inf
    %1368 = vmax.xlane.f32.xlu0 %v1367
    %v1369 = vpop.xlane.xlu0 %1368
    %v1370 = vsel %vm248, %v1364, -inf
    %1371 = vmax.xlane.f32.xlu0 %v1370
    %v1372 = vpop.xlane.xlu0 %1371
    %v1373 = vsub.f32 %v1361, %v1369
    %v1374 = vsub.f32 %v1364, %v1372
    %v1375 = vmul.f32 %v1373, 1.442695
    %v1376 = vpow.pop %v1375
    %v1377 = vmul.f32 %v1374, 1.442695
    %v1378 = vpow.pop %v1377
    %v1379 = vsel %vm248, %v1376, 0.0
    %1380 = vadd.xlane.f32.xlu0 %v1379
    %v1381 = vpop.xlane.xlu0 %1380
    %v1382 = vsel %vm248, %v1378, 0.0
    %1383 = vadd.xlane.f32.xlu0 %v1382
    %v1384 = vpop.xlane.xlu0 %1383
    %v1385 = vrcp.pop %v1381
    %v1386 = vrcp.pop %v1384
    %v1387 = vmul.f32 %v1376, %v1385
    %v1388 = vmul.f32 %v1378, %v1386
    %v1389 = vpack.c.bf16 %v1388, %v1387
    %1390 = vrot.lane.b32.xlu0 %v946, 72
    %v1391 = vpop.permute.xlu0 %1390
    %v1394 = vsel %vm248, %v1389, 0
    %1396 = vmatprep.subr.bf16.mxu0 0
    %1397 = vmatpush1.bf16.msra.mxu0 %v1391
    %1398 = vmatprep.subr.bf16.mxu0 0
    %1399 = vmatpush1.bf16.msra.mxu0 0
    %1400 = vmatprep.subr.bf16.mxu0 0
    %1401 = vmatpush1.bf16.msra.mxu0 0
    %1402 = vmatprep.subr.bf16.mxu0 0
    %1403 = vmatpush1.bf16.msra.mxu0 0
    %1404 = vmatprep.subr.bf16.mxu0 0
    %1405 = vmatpush1.bf16.msra.mxu0 0
    %1406 = vmatprep.subr.bf16.mxu0 0
    %1407 = vmatpush1.bf16.msra.mxu0 0
    %1408 = vmatprep.subr.bf16.mxu0 0
    %1409 = vmatpush1.bf16.msra.mxu0 0
    %1410 = vmatprep.subr.bf16.mxu0 0
    %1411 = vmatpush1.bf16.msra.mxu0 0
    %1412 = vmatprep.subr.bf16.mxu0 0
    %1413 = vmatpush1.bf16.msra.mxu0 0
    %1414 = vmatprep.subr.bf16.mxu0 0
    %1415 = vmatpush1.bf16.msra.mxu0 0
    %1416 = vmatprep.subr.bf16.mxu0 0
    %1417 = vmatpush1.bf16.msra.mxu0 0
    %1418 = vmatprep.subr.bf16.mxu0 0
    %1419 = vmatpush1.bf16.msra.mxu0 0
    %1420 = vmatprep.subr.bf16.mxu0 0
    %1421 = vmatpush1.bf16.msra.mxu0 0
    %1422 = vmatprep.subr.bf16.mxu0 0
    %1423 = vmatpush1.bf16.msra.mxu0 0
    %1424 = vmatprep.subr.bf16.mxu0 0
    %1425 = vmatpush1.bf16.msra.mxu0 0
    %1426 = vmatprep.subr.bf16.mxu0 0
    %1427 = vmatpush1.bf16.msra.mxu0 0
    %1428 = vmatprep.mubr.bf16.mxu0 0
    %1429 = vmatmul.mubr.bf16.gmra.mrb[0].mxu0 %v1394
    %v1430 = vpop.f32.mrb[0].mxu0
    %v1431 = vadd.f32 0.0, %v1430
    %v1432 = vpop.f32.mrb[0].mxu0
    %v1433 = vpop.f32.mrb[0].mxu0
    %v1434 = vadd.f32 0.0, %v1433
    %v1435 = vpop.f32.mrb[0].mxu0
    %1436 = vdwg.mxu0
    %1439 = vrot.lane.b32.xlu0 %v1189, 8
    %v1440 = vpop.permute.xlu0 %1439
    %1441 = vrot.lane.b32.xlu0 %v1192, 8
    %v1442 = vpop.permute.xlu0 %1441
    %1447 = vrot.lane.b32.xlu0 %v1310, 16
    %v1448 = vpop.permute.xlu0 %1447
    %1449 = vrot.lane.b32.xlu0 %v1313, 16
    %v1450 = vpop.permute.xlu0 %1449
    %1455 = vrot.lane.b32.xlu0 %v1431, 24
    %v1456 = vpop.permute.xlu0 %1455
    %1457 = vrot.lane.b32.xlu0 %v1434, 24
    %v1458 = vpop.permute.xlu0 %1457
    %v1461 = vsel %vm200, %v1067, %v1440
    %v1462 = vsel %vm200, %v1070, %v1442
    %v1463 = vsel %vm248, %v1461, %v1448
    %v1464 = vsel %vm248, %v1462, %v1450
    %v1465 = vsel %vm712, %v1463, %v1456
    %v1466 = vsel %vm712, %v1464, %v1458
    %v1467 = vld [vmem:[#allocation7 + $0x30] sm:$0xf]
    %v1468 = vld [vmem:[#allocation7 + $0x34] sm:$0xf]
    %v1469 = vld [vmem:[#allocation7 + $0x38] sm:$0xf]
    %v1470 = vld [vmem:[#allocation7 + $0x3c] sm:$0xf]
    %v1471 = vpack.c.bf16 %v1466, %v1465
    %v1472 = vld [vmem:[#allocation8 + $0x3] sm:$0x1]
    %v1473 = vlaneseq
    %v1474 = vshrl.u32 %v1473, 7
    %v1475 = vsub.s32 0, %v1474
    %v1476 = vrot.slane %v1472, %v1475
    %v1481 = vunpack.c.l.b16 %v1467
    %v1482 = vunpack.c.l.b16 %v1468
    %v1483 = vunpack.c.l.b16 %v1469
    %v1484 = vunpack.c.l.b16 %v1470
    %v1485 = vpack.c.b16 %v1482, %v1481
    %v1486 = vpack.c.b16 %v1484, %v1483
    %v1490 = vsel %vm102, %v1471, 0
    %1492 = vmatprep.subr.bf16.mxu0 0
    %1493 = vmatpush1.bf16.msra.mxu0 %v1485
    %1494 = vmatprep.subr.bf16.mxu0 0
    %1495 = vmatpush1.bf16.msra.mxu0 %v1486
    %1496 = vmatprep.subr.bf16.mxu0 0
    %1497 = vmatpush1.bf16.msra.mxu0 0
    %1498 = vmatprep.subr.bf16.mxu0 0
    %1499 = vmatpush1.bf16.msra.mxu0 0
    %1500 = vmatprep.subr.bf16.mxu0 0
    %1501 = vmatpush1.bf16.msra.mxu0 0
    %1502 = vmatprep.subr.bf16.mxu0 0
    %1503 = vmatpush1.bf16.msra.mxu0 0
    %1504 = vmatprep.subr.bf16.mxu0 0
    %1505 = vmatpush1.bf16.msra.mxu0 0
    %1506 = vmatprep.subr.bf16.mxu0 0
    %1507 = vmatpush1.bf16.msra.mxu0 0
    %1508 = vmatprep.subr.bf16.mxu0 0
    %1509 = vmatpush1.bf16.msra.mxu0 0
    %1510 = vmatprep.subr.bf16.mxu0 0
    %1511 = vmatpush1.bf16.msra.mxu0 0
    %1512 = vmatprep.subr.bf16.mxu0 0
    %1513 = vmatpush1.bf16.msra.mxu0 0
    %1514 = vmatprep.subr.bf16.mxu0 0
    %1515 = vmatpush1.bf16.msra.mxu0 0
    %1516 = vmatprep.subr.bf16.mxu0 0
    %1517 = vmatpush1.bf16.msra.mxu0 0
    %1518 = vmatprep.subr.bf16.mxu0 0
    %1519 = vmatpush1.bf16.msra.mxu0 0
    %1520 = vmatprep.subr.bf16.mxu0 0
    %1521 = vmatpush1.bf16.msra.mxu0 0
    %1522 = vmatprep.subr.bf16.mxu0 0
    %1523 = vmatpush1.bf16.msra.mxu0 0
    %1524 = vmatprep.mubr.bf16.mxu0 0
    %1525 = vmatmul.mubr.bf16.gmra.mrb[0].mxu0 %v1490
    %v1526 = vpop.f32.mrb[0].mxu0
    %v1527 = vadd.f32 %v1476, %v1526
    %v1528 = vpop.f32.mrb[0].mxu0
    %v1529 = vpop.f32.mrb[0].mxu0
    %v1530 = vadd.f32 %v1476, %v1529
    %v1531 = vpop.f32.mrb[0].mxu0
    %1532 = vdwg.mxu0
    %v1533 = vadd.f32 %v822, %v1527
    %v1534 = vadd.f32 %v823, %v1530
    %v1535 = vld [vmem:[#allocation8 + $0x8] sm:$0x1]
    %v1536 = vld [vmem:[#allocation8 + $0x9] sm:$0x1]
    %v1537 = vsel %vm102, %v1533, 0.0
    %1538 = vadd.xlane.f32.xlu0 %v1537
    %v1539 = vpop.xlane.xlu0 %1538
    %v1540 = vsel %vm102, %v1534, 0.0
    %1541 = vadd.xlane.f32.xlu0 %v1540
    %v1542 = vpop.xlane.xlu0 %1541
    %v1543 = vmul.f32 %v1539, %v791
    %v1544 = vmul.f32 %v1542, %v791
    %v1545 = vsub.f32 %v1533, %v1543
    %v1546 = vsub.f32 %v1534, %v1544
    %v1547 = vmul.f32 %v1545, %v1545
    %v1548 = vmul.f32 %v1546, %v1546
    %v1549 = vsel %vm102, %v1547, 0.0
    %1550 = vadd.xlane.f32.xlu0 %v1549
    %v1551 = vpop.xlane.xlu0 %1550
    %v1552 = vsel %vm102, %v1548, 0.0
    %1553 = vadd.xlane.f32.xlu0 %v1552
    %v1554 = vpop.xlane.xlu0 %1553
    %v1555 = vmul.f32 %v1551, %v791
    %v1556 = vmul.f32 %v1554, %v791
    %v1557 = vadd.f32 %v1555, 1e-05
    %v1558 = vadd.f32 %v1556, 1e-05
    %v1559 = vrsqrt.pop %v1557
    %v1560 = vrsqrt.pop %v1558
    %v1561 = vmul.f32 %v1545, %v1559
    %v1562 = vmul.f32 %v1546, %v1560
    %v1563 = vlaneseq
    %v1564 = vshrl.u32 %v1563, 7
    %v1565 = vsub.s32 0, %v1564
    %v1566 = vrot.slane %v1535, %v1565
    %v1567 = vmul.f32 %v1561, %v1566
    %v1568 = vmul.f32 %v1562, %v1566
    %v1569 = vlaneseq
    %v1570 = vshrl.u32 %v1569, 7
    %v1571 = vsub.s32 0, %v1570
    %v1572 = vrot.slane %v1536, %v1571
    %v1573 = vadd.f32 %v1567, %v1572
    %v1574 = vadd.f32 %v1568, %v1572
    %v1575 = vld [vmem:[#allocation7 + $0x40] sm:$0xf]
    %v1576 = vld [vmem:[#allocation7 + $0x44] sm:$0xf]
    %v1577 = vld [vmem:[#allocation7 + $0x48] sm:$0xf]
    %v1578 = vld [vmem:[#allocation7 + $0x4c] sm:$0xf]
    %v1579 = vpack.c.bf16 %v1574, %v1573
    %v1580 = vld [vmem:[#allocation8 + $0x4] sm:$0x1]
    %v1581 = vlaneseq
    %v1582 = vshrl.u32 %v1581, 7
    %v1583 = vsub.s32 0, %v1582
    %v1584 = vrot.slane %v1580, %v1583
    %v1589 = vunpack.c.l.b16 %v1575
    %v1590 = vunpack.c.l.b16 %v1576
    %v1591 = vunpack.c.l.b16 %v1577
    %v1592 = vunpack.c.l.b16 %v1578
    %v1593 = vpack.c.b16 %v1590, %v1589
    %v1594 = vpack.c.b16 %v1592, %v1591
    %v1598 = vsel %vm102, %v1579, 0
    %1600 = vmatprep.subr.bf16.mxu0 0
    %1601 = vmatpush1.bf16.msra.mxu0 %v1593
    %1602 = vmatprep.subr.bf16.mxu0 0
    %1603 = vmatpush1.bf16.msra.mxu0 %v1594
    %1604 = vmatprep.subr.bf16.mxu0 0
    %1605 = vmatpush1.bf16.msra.mxu0 0
    %1606 = vmatprep.subr.bf16.mxu0 0
    %1607 = vmatpush1.bf16.msra.mxu0 0
    %1608 = vmatprep.subr.bf16.mxu0 0
    %1609 = vmatpush1.bf16.msra.mxu0 0
    %1610 = vmatprep.subr.bf16.mxu0 0
    %1611 = vmatpush1.bf16.msra.mxu0 0
    %1612 = vmatprep.subr.bf16.mxu0 0
    %1613 = vmatpush1.bf16.msra.mxu0 0
    %1614 = vmatprep.subr.bf16.mxu0 0
    %1615 = vmatpush1.bf16.msra.mxu0 0
    %1616 = vmatprep.subr.bf16.mxu0 0
    %1617 = vmatpush1.bf16.msra.mxu0 0
    %1618 = vmatprep.subr.bf16.mxu0 0
    %1619 = vmatpush1.bf16.msra.mxu0 0
    %1620 = vmatprep.subr.bf16.mxu0 0
    %1621 = vmatpush1.bf16.msra.mxu0 0
    %1622 = vmatprep.subr.bf16.mxu0 0
    %1623 = vmatpush1.bf16.msra.mxu0 0
    %1624 = vmatprep.subr.bf16.mxu0 0
    %1625 = vmatpush1.bf16.msra.mxu0 0
    %1626 = vmatprep.subr.bf16.mxu0 0
    %1627 = vmatpush1.bf16.msra.mxu0 0
    %1628 = vmatprep.subr.bf16.mxu0 0
    %1629 = vmatpush1.bf16.msra.mxu0 0
    %1630 = vmatprep.subr.bf16.mxu0 0
    %1631 = vmatpush1.bf16.msra.mxu0 0
    %1632 = vmatprep.mubr.bf16.mxu0 0
    %1633 = vmatmul.mubr.bf16.gmra.mrb[0].mxu0 %v1598
    %v1634 = vpop.f32.mrb[0].mxu0
    %v1635 = vadd.f32 %v1584, %v1634
    %v1636 = vpop.f32.mrb[0].mxu0
    %v1637 = vpop.f32.mrb[0].mxu0
    %v1638 = vadd.f32 %v1584, %v1637
    %v1639 = vpop.f32.mrb[0].mxu0
    %1640 = vdwg.mxu0
    %v1641 = vmax.f32 %v1635, 0.0
    %v1642 = vmax.f32 %v1638, 0.0
    %v1643 = vld [vmem:[#allocation7 + $0x50] sm:$0xf]
    %v1644 = vld [vmem:[#allocation7 + $0x54] sm:$0xf]
    %v1645 = vld [vmem:[#allocation7 + $0x58] sm:$0xf]
    %v1646 = vld [vmem:[#allocation7 + $0x5c] sm:$0xf]
    %v1647 = vld [vmem:[#allocation7 + $0x60] sm:$0xf]
    %v1648 = vld [vmem:[#allocation7 + $0x64] sm:$0xf]
    %v1649 = vld [vmem:[#allocation7 + $0x68] sm:$0xf]
    %v1650 = vld [vmem:[#allocation7 + $0x6c] sm:$0xf]
    %v1651 = vld [vmem:[#allocation7 + $0x70] sm:$0xf]
    %v1652 = vld [vmem:[#allocation7 + $0x74] sm:$0xf]
    %v1653 = vld [vmem:[#allocation7 + $0x78] sm:$0xf]
    %v1654 = vld [vmem:[#allocation7 + $0x7c] sm:$0xf]
    %v1655 = vld [vmem:[#allocation7 + $0x80] sm:$0xf]
    %v1656 = vld [vmem:[#allocation7 + $0x84] sm:$0xf]
    %v1657 = vld [vmem:[#allocation7 + $0x88] sm:$0xf]
    %v1658 = vld [vmem:[#allocation7 + $0x8c] sm:$0xf]
    %v1659 = vpack.c.bf16 %v1642, %v1641
    %v1660 = vld [vmem:[#allocation8 + $0x5] sm:$0x1]
    %v1661 = vlaneseq
    %v1662 = vshrl.u32 %v1661, 7
    %v1663 = vsub.s32 0, %v1662
    %v1664 = vrot.slane %v1660, %v1663
    %v1681 = vunpack.c.l.b16 %v1643
    %v1682 = vunpack.c.l.b16 %v1644
    %v1683 = vunpack.c.l.b16 %v1645
    %v1684 = vunpack.c.l.b16 %v1646
    %v1685 = vunpack.c.l.b16 %v1647
    %v1686 = vunpack.c.l.b16 %v1648
    %v1687 = vunpack.c.l.b16 %v1649
    %v1688 = vunpack.c.l.b16 %v1650
    %v1689 = vunpack.c.l.b16 %v1651
    %v1690 = vunpack.c.l.b16 %v1652
    %v1691 = vunpack.c.l.b16 %v1653
    %v1692 = vunpack.c.l.b16 %v1654
    %v1693 = vunpack.c.l.b16 %v1655
    %v1694 = vunpack.c.l.b16 %v1656
    %v1695 = vunpack.c.l.b16 %v1657
    %v1696 = vunpack.c.l.b16 %v1658
    %v1697 = vpack.c.b16 %v1682, %v1681
    %v1698 = vpack.c.b16 %v1684, %v1683
    %v1699 = vpack.c.b16 %v1686, %v1685
    %v1700 = vpack.c.b16 %v1688, %v1687
    %v1701 = vpack.c.b16 %v1690, %v1689
    %v1702 = vpack.c.b16 %v1692, %v1691
    %v1703 = vpack.c.b16 %v1694, %v1693
    %v1704 = vpack.c.b16 %v1696, %v1695
    %1713 = vmatprep.subr.bf16.mxu0 0
    %1714 = vmatpush1.bf16.msra.mxu0 %v1697
    %1715 = vmatprep.subr.bf16.mxu0 0
    %1716 = vmatpush1.bf16.msra.mxu0 %v1698
    %1717 = vmatprep.subr.bf16.mxu0 0
    %1718 = vmatpush1.bf16.msra.mxu0 %v1699
    %1719 = vmatprep.subr.bf16.mxu0 0
    %1720 = vmatpush1.bf16.msra.mxu0 %v1700
    %1721 = vmatprep.subr.bf16.mxu0 0
    %1722 = vmatpush1.bf16.msra.mxu0 %v1701
    %1723 = vmatprep.subr.bf16.mxu0 0
    %1724 = vmatpush1.bf16.msra.mxu0 %v1702
    %1725 = vmatprep.subr.bf16.mxu0 0
    %1726 = vmatpush1.bf16.msra.mxu0 %v1703
    %1727 = vmatprep.subr.bf16.mxu0 0
    %1728 = vmatpush1.bf16.msra.mxu0 %v1704
    %1729 = vmatprep.subr.bf16.mxu0 0
    %1730 = vmatpush1.bf16.msra.mxu0 0
    %1731 = vmatprep.subr.bf16.mxu0 0
    %1732 = vmatpush1.bf16.msra.mxu0 0
    %1733 = vmatprep.subr.bf16.mxu0 0
    %1734 = vmatpush1.bf16.msra.mxu0 0
    %1735 = vmatprep.subr.bf16.mxu0 0
    %1736 = vmatpush1.bf16.msra.mxu0 0
    %1737 = vmatprep.subr.bf16.mxu0 0
    %1738 = vmatpush1.bf16.msra.mxu0 0
    %1739 = vmatprep.subr.bf16.mxu0 0
    %1740 = vmatpush1.bf16.msra.mxu0 0
    %1741 = vmatprep.subr.bf16.mxu0 0
    %1742 = vmatpush1.bf16.msra.mxu0 0
    %1743 = vmatprep.subr.bf16.mxu0 0
    %1744 = vmatpush1.bf16.msra.mxu0 0
    %1745 = vmatprep.mubr.bf16.mxu0 0
    %1746 = vmatmul.mubr.bf16.gmra.mrb[0].mxu0 %v1659
    %v1747 = vpop.f32.mrb[0].mxu0
    %v1748 = vadd.f32 %v1664, %v1747
    %v1749 = vpop.f32.mrb[0].mxu0
    %v1750 = vpop.f32.mrb[0].mxu0
    %v1751 = vadd.f32 %v1664, %v1750
    %v1752 = vpop.f32.mrb[0].mxu0
    %1753 = vdwg.mxu0
    %v1754 = vadd.f32 %v1573, %v1748
    %v1755 = vadd.f32 %v1574, %v1751
    %v1756 = vld [vmem:[#allocation8 + $0xa] sm:$0x1]
    %v1757 = vld [vmem:[#allocation8 + $0xb] sm:$0x1]
    %v1758 = vsel %vm102, %v1754, 0.0
    %1759 = vadd.xlane.f32.xlu0 %v1758
    %v1760 = vpop.xlane.xlu0 %1759
    %v1761 = vsel %vm102, %v1755, 0.0
    %1762 = vadd.xlane.f32.xlu0 %v1761
    %v1763 = vpop.xlane.xlu0 %1762
    %v1764 = vmul.f32 %v1760, %v791
    %v1765 = vmul.f32 %v1763, %v791
    %v1766 = vsub.f32 %v1754, %v1764
    %v1767 = vsub.f32 %v1755, %v1765
    %v1768 = vmul.f32 %v1766, %v1766
    %v1769 = vmul.f32 %v1767, %v1767
    %v1770 = vsel %vm102, %v1768, 0.0
    %1771 = vadd.xlane.f32.xlu0 %v1770
    %v1772 = vpop.xlane.xlu0 %1771
    %v1773 = vsel %vm102, %v1769, 0.0
    %1774 = vadd.xlane.f32.xlu0 %v1773
    %v1775 = vpop.xlane.xlu0 %1774
    %v1776 = vmul.f32 %v1772, %v791
    %v1777 = vmul.f32 %v1775, %v791
    %v1778 = vadd.f32 %v1776, 1e-05
    %v1779 = vadd.f32 %v1777, 1e-05
    %v1780 = vrsqrt.pop %v1778
    %v1781 = vrsqrt.pop %v1779
    %v1782 = vmul.f32 %v1766, %v1780
    %v1783 = vmul.f32 %v1767, %v1781
    %v1784 = vlaneseq
    %v1785 = vshrl.u32 %v1784, 7
    %v1786 = vsub.s32 0, %v1785
    %v1787 = vrot.slane %v1756, %v1786
    %v1788 = vmul.f32 %v1782, %v1787
    %v1789 = vmul.f32 %v1783, %v1787
    %v1790 = vlaneseq
    %v1791 = vshrl.u32 %v1790, 7
    %v1792 = vsub.s32 0, %v1791
    %v1793 = vrot.slane %v1757, %v1792
    %v1794 = vadd.f32 %v1788, %v1793
    %v1795 = vadd.f32 %v1789, %v1793
    %v1796 = vld [vmem:[#allocation7 + $0x90] sm:$0xf]
    %v1797 = vld [vmem:[#allocation7 + $0x94] sm:$0xf]
    %v1798 = vld [vmem:[#allocation7 + $0x98] sm:$0xf]
    %v1799 = vld [vmem:[#allocation7 + $0x9c] sm:$0xf]
    %v1800 = vpack.c.bf16 %v1795, %v1794
    %v1801 = vld [vmem:[#allocation8 + $0xc] sm:$0x1]
    %v1802 = vlaneseq
    %v1803 = vshrl.u32 %v1802, 7
    %v1804 = vsub.s32 0, %v1803
    %v1805 = vrot.slane %v1801, %v1804
    %v1810 = vunpack.c.l.b16 %v1796
    %v1811 = vunpack.c.l.b16 %v1797
    %v1812 = vunpack.c.l.b16 %v1798
    %v1813 = vunpack.c.l.b16 %v1799
    %v1814 = vpack.c.b16 %v1811, %v1810
    %v1815 = vpack.c.b16 %v1813, %v1812
    %v1819 = vsel %vm102, %v1800, 0
    %1821 = vmatprep.subr.bf16.mxu0 0
    %1822 = vmatpush1.bf16.msra.mxu0 %v1814
    %1823 = vmatprep.subr.bf16.mxu0 0
    %1824 = vmatpush1.bf16.msra.mxu0 %v1815
    %1825 = vmatprep.subr.bf16.mxu0 0
    %1826 = vmatpush1.bf16.msra.mxu0 0
    %1827 = vmatprep.subr.bf16.mxu0 0
    %1828 = vmatpush1.bf16.msra.mxu0 0
    %1829 = vmatprep.subr.bf16.mxu0 0
    %1830 = vmatpush1.bf16.msra.mxu0 0
    %1831 = vmatprep.subr.bf16.mxu0 0
    %1832 = vmatpush1.bf16.msra.mxu0 0
    %1833 = vmatprep.subr.bf16.mxu0 0
    %1834 = vmatpush1.bf16.msra.mxu0 0
    %1835 = vmatprep.subr.bf16.mxu0 0
    %1836 = vmatpush1.bf16.msra.mxu0 0
    %1837 = vmatprep.subr.bf16.mxu0 0
    %1838 = vmatpush1.bf16.msra.mxu0 0
    %1839 = vmatprep.subr.bf16.mxu0 0
    %1840 = vmatpush1.bf16.msra.mxu0 0
    %1841 = vmatprep.subr.bf16.mxu0 0
    %1842 = vmatpush1.bf16.msra.mxu0 0
    %1843 = vmatprep.subr.bf16.mxu0 0
    %1844 = vmatpush1.bf16.msra.mxu0 0
    %1845 = vmatprep.subr.bf16.mxu0 0
    %1846 = vmatpush1.bf16.msra.mxu0 0
    %1847 = vmatprep.subr.bf16.mxu0 0
    %1848 = vmatpush1.bf16.msra.mxu0 0
    %1849 = vmatprep.subr.bf16.mxu0 0
    %1850 = vmatpush1.bf16.msra.mxu0 0
    %1851 = vmatprep.subr.bf16.mxu0 0
    %1852 = vmatpush1.bf16.msra.mxu0 0
    %1853 = vmatprep.mubr.bf16.mxu0 0
    %1854 = vmatmul.mubr.bf16.gmra.mrb[0].mxu0 %v1819
    %v1855 = vpop.f32.mrb[0].mxu0
    %v1856 = vadd.f32 %v1805, %v1855
    %v1857 = vpop.f32.mrb[0].mxu0
    %v1858 = vpop.f32.mrb[0].mxu0
    %v1859 = vadd.f32 %v1805, %v1858
    %v1860 = vpop.f32.mrb[0].mxu0
    %1861 = vdwg.mxu0
    %1862 = vrot.lane.b32.xlu0 %v1814, 96
    %v1863 = vpop.permute.xlu0 %1862
    %1864 = vrot.lane.b32.xlu0 %v1815, 96
    %v1865 = vpop.permute.xlu0 %1864
    %1869 = vrot.lane.b32.xlu0 %v1805, 96
    %v1870 = vpop.permute.xlu0 %1869
    %1872 = vmatprep.subr.bf16.mxu0 0
    %1873 = vmatpush1.bf16.msra.mxu0 %v1863
    %1874 = vmatprep.subr.bf16.mxu0 0
    %1875 = vmatpush1.bf16.msra.mxu0 %v1865
    %1876 = vmatprep.subr.bf16.mxu0 0
    %1877 = vmatpush1.bf16.msra.mxu0 0
    %1878 = vmatprep.subr.bf16.mxu0 0
    %1879 = vmatpush1.bf16.msra.mxu0 0
    %1880 = vmatprep.subr.bf16.mxu0 0
    %1881 = vmatpush1.bf16.msra.mxu0 0
    %1882 = vmatprep.subr.bf16.mxu0 0
    %1883 = vmatpush1.bf16.msra.mxu0 0
    %1884 = vmatprep.subr.bf16.mxu0 0
    %1885 = vmatpush1.bf16.msra.mxu0 0
    %1886 = vmatprep.subr.bf16.mxu0 0
    %1887 = vmatpush1.bf16.msra.mxu0 0
    %1888 = vmatprep.subr.bf16.mxu0 0
    %1889 = vmatpush1.bf16.msra.mxu0 0
    %1890 = vmatprep.subr.bf16.mxu0 0
    %1891 = vmatpush1.bf16.msra.mxu0 0
    %1892 = vmatprep.subr.bf16.mxu0 0
    %1893 = vmatpush1.bf16.msra.mxu0 0
    %1894 = vmatprep.subr.bf16.mxu0 0
    %1895 = vmatpush1.bf16.msra.mxu0 0
    %1896 = vmatprep.subr.bf16.mxu0 0
    %1897 = vmatpush1.bf16.msra.mxu0 0
    %1898 = vmatprep.subr.bf16.mxu0 0
    %1899 = vmatpush1.bf16.msra.mxu0 0
    %1900 = vmatprep.subr.bf16.mxu0 0
    %1901 = vmatpush1.bf16.msra.mxu0 0
    %1902 = vmatprep.subr.bf16.mxu0 0
    %1903 = vmatpush1.bf16.msra.mxu0 0
    %1904 = vmatprep.mubr.bf16.mxu0 0
    %1905 = vmatmul.mubr.bf16.gmra.mrb[0].mxu0 %v1819
    %v1906 = vpop.f32.mrb[0].mxu0
    %v1907 = vadd.f32 %v1870, %v1906
    %v1908 = vpop.f32.mrb[0].mxu0
    %v1909 = vpop.f32.mrb[0].mxu0
    %v1910 = vadd.f32 %v1870, %v1909
    %v1911 = vpop.f32.mrb[0].mxu0
    %1912 = vdwg.mxu0
    %v1913 = vpack.c.bf16 %v1859, %v1856
    %v1914 = vpack.c.bf16 %v1910, %v1907
    %v1916 = vsel %vm200, %v1913, 0
    %v1919 = vsel %vm200, %v1914, 0
    %1921 = vmatprep.subr.bf16.mxu0 0
    %1922 = vmatpush1.bf16.xpose.msra.mxu0 %v1919
    %1923 = vmatprep.subr.bf16.mxu0 0
    %1924 = vmatpush1.bf16.xpose.msra.mxu0 0
    %1925 = vmatprep.subr.bf16.mxu0 0
    %1926 = vmatpush1.bf16.xpose.msra.mxu0 0
    %1927 = vmatprep.subr.bf16.mxu0 0
    %1928 = vmatpush1.bf16.xpose.msra.mxu0 0
    %1929 = vmatprep.subr.bf16.mxu0 0
    %1930 = vmatpush1.bf16.xpose.msra.mxu0 0
    %1931 = vmatprep.subr.bf16.mxu0 0
    %1932 = vmatpush1.bf16.xpose.msra.mxu0 0
    %1933 = vmatprep.subr.bf16.mxu0 0
    %1934 = vmatpush1.bf16.xpose.msra.mxu0 0
    %1935 = vmatprep.subr.bf16.mxu0 0
    %1936 = vmatpush1.bf16.xpose.msra.mxu0 0
    %1937 = vmatprep.subr.bf16.mxu0 0
    %1938 = vmatpush1.bf16.xpose.msra.mxu0 0
    %1939 = vmatprep.subr.bf16.mxu0 0
    %1940 = vmatpush1.bf16.xpose.msra.mxu0 0
    %1941 = vmatprep.subr.bf16.mxu0 0
    %1942 = vmatpush1.bf16.xpose.msra.mxu0 0
    %1943 = vmatprep.subr.bf16.mxu0 0
    %1944 = vmatpush1.bf16.xpose.msra.mxu0 0
    %1945 = vmatprep.subr.bf16.mxu0 0
    %1946 = vmatpush1.bf16.xpose.msra.mxu0 0
    %1947 = vmatprep.subr.bf16.mxu0 0
    %1948 = vmatpush1.bf16.xpose.msra.mxu0 0
    %1949 = vmatprep.subr.bf16.mxu0 0
    %1950 = vmatpush1.bf16.xpose.msra.mxu0 0
    %1951 = vmatprep.subr.bf16.mxu0 0
    %1952 = vmatpush1.bf16.xpose.msra.mxu0 0
    %1953 = vmatprep.mubr.bf16.mxu0 0
    %1954 = vmatmul.mubr.bf16.gmra.mrb[0].mxu0 %v1916
    %v1955 = vpop.f32.mrb[0].mxu0
    %v1956 = vadd.f32 %v78, %v1955
    %v1957 = vpop.f32.mrb[0].mxu0
    %v1958 = vpop.f32.mrb[0].mxu0
    %v1959 = vadd.f32 %v79, %v1958
    %v1960 = vpop.f32.mrb[0].mxu0
    %1961 = vdwg.mxu0
    %v1962 = vsel %vm248, %v1956, -inf
    %1963 = vmax.xlane.f32.xlu0 %v1962
    %v1964 = vpop.xlane.xlu0 %1963
    %v1965 = vsel %vm248, %v1959, -inf
    %1966 = vmax.xlane.f32.xlu0 %v1965
    %v1967 = vpop.xlane.xlu0 %1966
    %v1968 = vsub.f32 %v1956, %v1964
    %v1969 = vsub.f32 %v1959, %v1967
    %v1970 = vmul.f32 %v1968, 1.442695
    %v1971 = vpow.pop %v1970
    %v1972 = vmul.f32 %v1969, 1.442695
    %v1973 = vpow.pop %v1972
    %v1974 = vsel %vm248, %v1971, 0.0
    %1975 = vadd.xlane.f32.xlu0 %v1974
    %v1976 = vpop.xlane.xlu0 %1975
    %v1977 = vsel %vm248, %v1973, 0.0
    %1978 = vadd.xlane.f32.xlu0 %v1977
    %v1979 = vpop.xlane.xlu0 %1978
    %v1980 = vrcp.pop %v1976
    %v1981 = vrcp.pop %v1979
    %v1982 = vmul.f32 %v1971, %v1980
    %v1983 = vmul.f32 %v1973, %v1981
    %v1984 = vpack.c.bf16 %v1983, %v1982
    %1986 = vrot.lane.b32.xlu0 %v1914, 96
    %v1987 = vpop.permute.xlu0 %1986
    %v1990 = vsel %vm248, %v1984, 0
    %1992 = vmatprep.subr.bf16.mxu0 0
    %1993 = vmatpush1.bf16.msra.mxu0 %v1987
    %1994 = vmatprep.subr.bf16.mxu0 0
    %1995 = vmatpush1.bf16.msra.mxu0 0
    %1996 = vmatprep.subr.bf16.mxu0 0
    %1997 = vmatpush1.bf16.msra.mxu0 0
    %1998 = vmatprep.subr.bf16.mxu0 0
    %1999 = vmatpush1.bf16.msra.mxu0 0
    %2000 = vmatprep.subr.bf16.mxu0 0
    %2001 = vmatpush1.bf16.msra.mxu0 0
    %2002 = vmatprep.subr.bf16.mxu0 0
    %2003 = vmatpush1.bf16.msra.mxu0 0
    %2004 = vmatprep.subr.bf16.mxu0 0
    %2005 = vmatpush1.bf16.msra.mxu0 0
    %2006 = vmatprep.subr.bf16.mxu0 0
    %2007 = vmatpush1.bf16.msra.mxu0 0
    %2008 = vmatprep.subr.bf16.mxu0 0
    %2009 = vmatpush1.bf16.msra.mxu0 0
    %2010 = vmatprep.subr.bf16.mxu0 0
    %2011 = vmatpush1.bf16.msra.mxu0 0
    %2012 = vmatprep.subr.bf16.mxu0 0
    %2013 = vmatpush1.bf16.msra.mxu0 0
    %2014 = vmatprep.subr.bf16.mxu0 0
    %2015 = vmatpush1.bf16.msra.mxu0 0
    %2016 = vmatprep.subr.bf16.mxu0 0
    %2017 = vmatpush1.bf16.msra.mxu0 0
    %2018 = vmatprep.subr.bf16.mxu0 0
    %2019 = vmatpush1.bf16.msra.mxu0 0
    %2020 = vmatprep.subr.bf16.mxu0 0
    %2021 = vmatpush1.bf16.msra.mxu0 0
    %2022 = vmatprep.subr.bf16.mxu0 0
    %2023 = vmatpush1.bf16.msra.mxu0 0
    %2024 = vmatprep.mubr.bf16.mxu0 0
    %2025 = vmatmul.mubr.bf16.gmra.mrb[0].mxu0 %v1990
    %v2026 = vpop.f32.mrb[0].mxu0
    %v2027 = vadd.f32 0.0, %v2026
    %v2028 = vpop.f32.mrb[0].mxu0
    %v2029 = vpop.f32.mrb[0].mxu0
    %v2030 = vadd.f32 0.0, %v2029
    %v2031 = vpop.f32.mrb[0].mxu0
    %2032 = vdwg.mxu0
    %2034 = vrot.lane.b32.xlu0 %v1913, 120
    %v2035 = vpop.permute.xlu0 %2034
    %2036 = vrot.lane.b32.xlu0 %v1914, 120
    %v2037 = vpop.permute.xlu0 %2036
    %v2039 = vsel %vm200, %v2035, 0
    %v2042 = vsel %vm200, %v2037, 0
    %2044 = vmatprep.subr.bf16.mxu0 0
    %2045 = vmatpush1.bf16.xpose.msra.mxu0 %v2042
    %2046 = vmatprep.subr.bf16.mxu0 0
    %2047 = vmatpush1.bf16.xpose.msra.mxu0 0
    %2048 = vmatprep.subr.bf16.mxu0 0
    %2049 = vmatpush1.bf16.xpose.msra.mxu0 0
    %2050 = vmatprep.subr.bf16.mxu0 0
    %2051 = vmatpush1.bf16.xpose.msra.mxu0 0
    %2052 = vmatprep.subr.bf16.mxu0 0
    %2053 = vmatpush1.bf16.xpose.msra.mxu0 0
    %2054 = vmatprep.subr.bf16.mxu0 0
    %2055 = vmatpush1.bf16.xpose.msra.mxu0 0
    %2056 = vmatprep.subr.bf16.mxu0 0
    %2057 = vmatpush1.bf16.xpose.msra.mxu0 0
    %2058 = vmatprep.subr.bf16.mxu0 0
    %2059 = vmatpush1.bf16.xpose.msra.mxu0 0
    %2060 = vmatprep.subr.bf16.mxu0 0
    %2061 = vmatpush1.bf16.xpose.msra.mxu0 0
    %2062 = vmatprep.subr.bf16.mxu0 0
    %2063 = vmatpush1.bf16.xpose.msra.mxu0 0
    %2064 = vmatprep.subr.bf16.mxu0 0
    %2065 = vmatpush1.bf16.xpose.msra.mxu0 0
    %2066 = vmatprep.subr.bf16.mxu0 0
    %2067 = vmatpush1.bf16.xpose.msra.mxu0 0
    %2068 = vmatprep.subr.bf16.mxu0 0
    %2069 = vmatpush1.bf16.xpose.msra.mxu0 0
    %2070 = vmatprep.subr.bf16.mxu0 0
    %2071 = vmatpush1.bf16.xpose.msra.mxu0 0
    %2072 = vmatprep.subr.bf16.mxu0 0
    %2073 = vmatpush1.bf16.xpose.msra.mxu0 0
    %2074 = vmatprep.subr.bf16.mxu0 0
    %2075 = vmatpush1.bf16.xpose.msra.mxu0 0
    %2076 = vmatprep.mubr.bf16.mxu0 0
    %2077 = vmatmul.mubr.bf16.gmra.mrb[0].mxu0 %v2039
    %v2078 = vpop.f32.mrb[0].mxu0
    %v2079 = vadd.f32 %v78, %v2078
    %v2080 = vpop.f32.mrb[0].mxu0
    %v2081 = vpop.f32.mrb[0].mxu0
    %v2082 = vadd.f32 %v79, %v2081
    %v2083 = vpop.f32.mrb[0].mxu0
    %2084 = vdwg.mxu0
    %v2085 = vsel %vm248, %v2079, -inf
    %2086 = vmax.xlane.f32.xlu0 %v2085
    %v2087 = vpop.xlane.xlu0 %2086
    %v2088 = vsel %vm248, %v2082, -inf
    %2089 = vmax.xlane.f32.xlu0 %v2088
    %v2090 = vpop.xlane.xlu0 %2089
    %v2091 = vsub.f32 %v2079, %v2087
    %v2092 = vsub.f32 %v2082, %v2090
    %v2093 = vmul.f32 %v2091, 1.442695
    %v2094 = vpow.pop %v2093
    %v2095 = vmul.f32 %v2092, 1.442695
    %v2096 = vpow.pop %v2095
    %v2097 = vsel %vm248, %v2094, 0.0
    %2098 = vadd.xlane.f32.xlu0 %v2097
    %v2099 = vpop.xlane.xlu0 %2098
    %v2100 = vsel %vm248, %v2096, 0.0
    %2101 = vadd.xlane.f32.xlu0 %v2100
    %v2102 = vpop.xlane.xlu0 %2101
    %v2103 = vrcp.pop %v2099
    %v2104 = vrcp.pop %v2102
    %v2105 = vmul.f32 %v2094, %v2103
    %v2106 = vmul.f32 %v2096, %v2104
    %v2107 = vpack.c.bf16 %v2106, %v2105
    %2108 = vrot.lane.b32.xlu0 %v1914, 88
    %v2109 = vpop.permute.xlu0 %2108
    %v2112 = vsel %vm248, %v2107, 0
    %2114 = vmatprep.subr.bf16.mxu0 0
    %2115 = vmatpush1.bf16.msra.mxu0 %v2109
    %2116 = vmatprep.subr.bf16.mxu0 0
    %2117 = vmatpush1.bf16.msra.mxu0 0
    %2118 = vmatprep.subr.bf16.mxu0 0
    %2119 = vmatpush1.bf16.msra.mxu0 0
    %2120 = vmatprep.subr.bf16.mxu0 0
    %2121 = vmatpush1.bf16.msra.mxu0 0
    %2122 = vmatprep.subr.bf16.mxu0 0
    %2123 = vmatpush1.bf16.msra.mxu0 0
    %2124 = vmatprep.subr.bf16.mxu0 0
    %2125 = vmatpush1.bf16.msra.mxu0 0
    %2126 = vmatprep.subr.bf16.mxu0 0
    %2127 = vmatpush1.bf16.msra.mxu0 0
    %2128 = vmatprep.subr.bf16.mxu0 0
    %2129 = vmatpush1.bf16.msra.mxu0 0
    %2130 = vmatprep.subr.bf16.mxu0 0
    %2131 = vmatpush1.bf16.msra.mxu0 0
    %2132 = vmatprep.subr.bf16.mxu0 0
    %2133 = vmatpush1.bf16.msra.mxu0 0
    %2134 = vmatprep.subr.bf16.mxu0 0
    %2135 = vmatpush1.bf16.msra.mxu0 0
    %2136 = vmatprep.subr.bf16.mxu0 0
    %2137 = vmatpush1.bf16.msra.mxu0 0
    %2138 = vmatprep.subr.bf16.mxu0 0
    %2139 = vmatpush1.bf16.msra.mxu0 0
    %2140 = vmatprep.subr.bf16.mxu0 0
    %2141 = vmatpush1.bf16.msra.mxu0 0
    %2142 = vmatprep.subr.bf16.mxu0 0
    %2143 = vmatpush1.bf16.msra.mxu0 0
    %2144 = vmatprep.subr.bf16.mxu0 0
    %2145 = vmatpush1.bf16.msra.mxu0 0
    %2146 = vmatprep.mubr.bf16.mxu0 0
    %2147 = vmatmul.mubr.bf16.gmra.mrb[0].mxu0 %v2112
    %v2148 = vpop.f32.mrb[0].mxu0
    %v2149 = vadd.f32 0.0, %v2148
    %v2150 = vpop.f32.mrb[0].mxu0
    %v2151 = vpop.f32.mrb[0].mxu0
    %v2152 = vadd.f32 0.0, %v2151
    %v2153 = vpop.f32.mrb[0].mxu0
    %2154 = vdwg.mxu0
    %2155 = vrot.lane.b32.xlu0 %v1913, 112
    %v2156 = vpop.permute.xlu0 %2155
    %2157 = vrot.lane.b32.xlu0 %v1914, 112
    %v2158 = vpop.permute.xlu0 %2157
    %v2160 = vsel %vm200, %v2156, 0
    %v2163 = vsel %vm200, %v2158, 0
    %2165 = vmatprep.subr.bf16.mxu0 0
    %2166 = vmatpush1.bf16.xpose.msra.mxu0 %v2163
    %2167 = vmatprep.subr.bf16.mxu0 0
    %2168 = vmatpush1.bf16.xpose.msra.mxu0 0
    %2169 = vmatprep.subr.bf16.mxu0 0
    %2170 = vmatpush1.bf16.xpose.msra.mxu0 0
    %2171 = vmatprep.subr.bf16.mxu0 0
    %2172 = vmatpush1.bf16.xpose.msra.mxu0 0
    %2173 = vmatprep.subr.bf16.mxu0 0
    %2174 = vmatpush1.bf16.xpose.msra.mxu0 0
    %2175 = vmatprep.subr.bf16.mxu0 0
    %2176 = vmatpush1.bf16.xpose.msra.mxu0 0
    %2177 = vmatprep.subr.bf16.mxu0 0
    %2178 = vmatpush1.bf16.xpose.msra.mxu0 0
    %2179 = vmatprep.subr.bf16.mxu0 0
    %2180 = vmatpush1.bf16.xpose.msra.mxu0 0
    %2181 = vmatprep.subr.bf16.mxu0 0
    %2182 = vmatpush1.bf16.xpose.msra.mxu0 0
    %2183 = vmatprep.subr.bf16.mxu0 0
    %2184 = vmatpush1.bf16.xpose.msra.mxu0 0
    %2185 = vmatprep.subr.bf16.mxu0 0
    %2186 = vmatpush1.bf16.xpose.msra.mxu0 0
    %2187 = vmatprep.subr.bf16.mxu0 0
    %2188 = vmatpush1.bf16.xpose.msra.mxu0 0
    %2189 = vmatprep.subr.bf16.mxu0 0
    %2190 = vmatpush1.bf16.xpose.msra.mxu0 0
    %2191 = vmatprep.subr.bf16.mxu0 0
    %2192 = vmatpush1.bf16.xpose.msra.mxu0 0
    %2193 = vmatprep.subr.bf16.mxu0 0
    %2194 = vmatpush1.bf16.xpose.msra.mxu0 0
    %2195 = vmatprep.subr.bf16.mxu0 0
    %2196 = vmatpush1.bf16.xpose.msra.mxu0 0
    %2197 = vmatprep.mubr.bf16.mxu0 0
    %2198 = vmatmul.mubr.bf16.gmra.mrb[0].mxu0 %v2160
    %v2199 = vpop.f32.mrb[0].mxu0
    %v2200 = vadd.f32 %v78, %v2199
    %v2201 = vpop.f32.mrb[0].mxu0
    %v2202 = vpop.f32.mrb[0].mxu0
    %v2203 = vadd.f32 %v79, %v2202
    %v2204 = vpop.f32.mrb[0].mxu0
    %2205 = vdwg.mxu0
    %v2206 = vsel %vm248, %v2200, -inf
    %2207 = vmax.xlane.f32.xlu0 %v2206
    %v2208 = vpop.xlane.xlu0 %2207
    %v2209 = vsel %vm248, %v2203, -inf
    %2210 = vmax.xlane.f32.xlu0 %v2209
    %v2211 = vpop.xlane.xlu0 %2210
    %v2212 = vsub.f32 %v2200, %v2208
    %v2213 = vsub.f32 %v2203, %v2211
    %v2214 = vmul.f32 %v2212, 1.442695
    %v2215 = vpow.pop %v2214
    %v2216 = vmul.f32 %v2213, 1.442695
    %v2217 = vpow.pop %v2216
    %v2218 = vsel %vm248, %v2215, 0.0
    %2219 = vadd.xlane.f32.xlu0 %v2218
    %v2220 = vpop.xlane.xlu0 %2219
    %v2221 = vsel %vm248, %v2217, 0.0
    %2222 = vadd.xlane.f32.xlu0 %v2221
    %v2223 = vpop.xlane.xlu0 %2222
    %v2224 = vrcp.pop %v2220
    %v2225 = vrcp.pop %v2223
    %v2226 = vmul.f32 %v2215, %v2224
    %v2227 = vmul.f32 %v2217, %v2225
    %v2228 = vpack.c.bf16 %v2227, %v2226
    %2229 = vrot.lane.b32.xlu0 %v1914, 80
    %v2230 = vpop.permute.xlu0 %2229
    %v2233 = vsel %vm248, %v2228, 0
    %2235 = vmatprep.subr.bf16.mxu0 0
    %2236 = vmatpush1.bf16.msra.mxu0 %v2230
    %2237 = vmatprep.subr.bf16.mxu0 0
    %2238 = vmatpush1.bf16.msra.mxu0 0
    %2239 = vmatprep.subr.bf16.mxu0 0
    %2240 = vmatpush1.bf16.msra.mxu0 0
    %2241 = vmatprep.subr.bf16.mxu0 0
    %2242 = vmatpush1.bf16.msra.mxu0 0
    %2243 = vmatprep.subr.bf16.mxu0 0
    %2244 = vmatpush1.bf16.msra.mxu0 0
    %2245 = vmatprep.subr.bf16.mxu0 0
    %2246 = vmatpush1.bf16.msra.mxu0 0
    %2247 = vmatprep.subr.bf16.mxu0 0
    %2248 = vmatpush1.bf16.msra.mxu0 0
    %2249 = vmatprep.subr.bf16.mxu0 0
    %2250 = vmatpush1.bf16.msra.mxu0 0
    %2251 = vmatprep.subr.bf16.mxu0 0
    %2252 = vmatpush1.bf16.msra.mxu0 0
    %2253 = vmatprep.subr.bf16.mxu0 0
    %2254 = vmatpush1.bf16.msra.mxu0 0
    %2255 = vmatprep.subr.bf16.mxu0 0
    %2256 = vmatpush1.bf16.msra.mxu0 0
    %2257 = vmatprep.subr.bf16.mxu0 0
    %2258 = vmatpush1.bf16.msra.mxu0 0
    %2259 = vmatprep.subr.bf16.mxu0 0
    %2260 = vmatpush1.bf16.msra.mxu0 0
    %2261 = vmatprep.subr.bf16.mxu0 0
    %2262 = vmatpush1.bf16.msra.mxu0 0
    %2263 = vmatprep.subr.bf16.mxu0 0
    %2264 = vmatpush1.bf16.msra.mxu0 0
    %2265 = vmatprep.subr.bf16.mxu0 0
    %2266 = vmatpush1.bf16.msra.mxu0 0
    %2267 = vmatprep.mubr.bf16.mxu0 0
    %2268 = vmatmul.mubr.bf16.gmra.mrb[0].mxu0 %v2233
    %v2269 = vpop.f32.mrb[0].mxu0
    %v2270 = vadd.f32 0.0, %v2269
    %v2271 = vpop.f32.mrb[0].mxu0
    %v2272 = vpop.f32.mrb[0].mxu0
    %v2273 = vadd.f32 0.0, %v2272
    %v2274 = vpop.f32.mrb[0].mxu0
    %2275 = vdwg.mxu0
    %2276 = vrot.lane.b32.xlu0 %v1913, 104
    %v2277 = vpop.permute.xlu0 %2276
    %2278 = vrot.lane.b32.xlu0 %v1914, 104
    %v2279 = vpop.permute.xlu0 %2278
    %v2281 = vsel %vm200, %v2277, 0
    %v2284 = vsel %vm200, %v2279, 0
    %2286 = vmatprep.subr.bf16.mxu0 0
    %2287 = vmatpush1.bf16.xpose.msra.mxu0 %v2284
    %2288 = vmatprep.subr.bf16.mxu0 0
    %2289 = vmatpush1.bf16.xpose.msra.mxu0 0
    %2290 = vmatprep.subr.bf16.mxu0 0
    %2291 = vmatpush1.bf16.xpose.msra.mxu0 0
    %2292 = vmatprep.subr.bf16.mxu0 0
    %2293 = vmatpush1.bf16.xpose.msra.mxu0 0
    %2294 = vmatprep.subr.bf16.mxu0 0
    %2295 = vmatpush1.bf16.xpose.msra.mxu0 0
    %2296 = vmatprep.subr.bf16.mxu0 0
    %2297 = vmatpush1.bf16.xpose.msra.mxu0 0
    %2298 = vmatprep.subr.bf16.mxu0 0
    %2299 = vmatpush1.bf16.xpose.msra.mxu0 0
    %2300 = vmatprep.subr.bf16.mxu0 0
    %2301 = vmatpush1.bf16.xpose.msra.mxu0 0
    %2302 = vmatprep.subr.bf16.mxu0 0
    %2303 = vmatpush1.bf16.xpose.msra.mxu0 0
    %2304 = vmatprep.subr.bf16.mxu0 0
    %2305 = vmatpush1.bf16.xpose.msra.mxu0 0
    %2306 = vmatprep.subr.bf16.mxu0 0
    %2307 = vmatpush1.bf16.xpose.msra.mxu0 0
    %2308 = vmatprep.subr.bf16.mxu0 0
    %2309 = vmatpush1.bf16.xpose.msra.mxu0 0
    %2310 = vmatprep.subr.bf16.mxu0 0
    %2311 = vmatpush1.bf16.xpose.msra.mxu0 0
    %2312 = vmatprep.subr.bf16.mxu0 0
    %2313 = vmatpush1.bf16.xpose.msra.mxu0 0
    %2314 = vmatprep.subr.bf16.mxu0 0
    %2315 = vmatpush1.bf16.xpose.msra.mxu0 0
    %2316 = vmatprep.subr.bf16.mxu0 0
    %2317 = vmatpush1.bf16.xpose.msra.mxu0 0
    %2318 = vmatprep.mubr.bf16.mxu0 0
    %2319 = vmatmul.mubr.bf16.gmra.mrb[0].mxu0 %v2281
    %v2320 = vpop.f32.mrb[0].mxu0
    %v2321 = vadd.f32 %v78, %v2320
    %v2322 = vpop.f32.mrb[0].mxu0
    %v2323 = vpop.f32.mrb[0].mxu0
    %v2324 = vadd.f32 %v79, %v2323
    %v2325 = vpop.f32.mrb[0].mxu0
    %2326 = vdwg.mxu0
    %v2327 = vsel %vm248, %v2321, -inf
    %2328 = vmax.xlane.f32.xlu0 %v2327
    %v2329 = vpop.xlane.xlu0 %2328
    %v2330 = vsel %vm248, %v2324, -inf
    %2331 = vmax.xlane.f32.xlu0 %v2330
    %v2332 = vpop.xlane.xlu0 %2331
    %v2333 = vsub.f32 %v2321, %v2329
    %v2334 = vsub.f32 %v2324, %v2332
    %v2335 = vmul.f32 %v2333, 1.442695
    %v2336 = vpow.pop %v2335
    %v2337 = vmul.f32 %v2334, 1.442695
    %v2338 = vpow.pop %v2337
    %v2339 = vsel %vm248, %v2336, 0.0
    %2340 = vadd.xlane.f32.xlu0 %v2339
    %v2341 = vpop.xlane.xlu0 %2340
    %v2342 = vsel %vm248, %v2338, 0.0
    %2343 = vadd.xlane.f32.xlu0 %v2342
    %v2344 = vpop.xlane.xlu0 %2343
    %v2345 = vrcp.pop %v2341
    %v2346 = vrcp.pop %v2344
    %v2347 = vmul.f32 %v2336, %v2345
    %v2348 = vmul.f32 %v2338, %v2346
    %v2349 = vpack.c.bf16 %v2348, %v2347
    %2350 = vrot.lane.b32.xlu0 %v1914, 72
    %v2351 = vpop.permute.xlu0 %2350
    %v2354 = vsel %vm248, %v2349, 0
    %2356 = vmatprep.subr.bf16.mxu0 0
    %2357 = vmatpush1.bf16.msra.mxu0 %v2351
    %2358 = vmatprep.subr.bf16.mxu0 0
    %2359 = vmatpush1.bf16.msra.mxu0 0
    %2360 = vmatprep.subr.bf16.mxu0 0
    %2361 = vmatpush1.bf16.msra.mxu0 0
    %2362 = vmatprep.subr.bf16.mxu0 0
    %2363 = vmatpush1.bf16.msra.mxu0 0
    %2364 = vmatprep.subr.bf16.mxu0 0
    %2365 = vmatpush1.bf16.msra.mxu0 0
    %2366 = vmatprep.subr.bf16.mxu0 0
    %2367 = vmatpush1.bf16.msra.mxu0 0
    %2368 = vmatprep.subr.bf16.mxu0 0
    %2369 = vmatpush1.bf16.msra.mxu0 0
    %2370 = vmatprep.subr.bf16.mxu0 0
    %2371 = vmatpush1.bf16.msra.mxu0 0
    %2372 = vmatprep.subr.bf16.mxu0 0
    %2373 = vmatpush1.bf16.msra.mxu0 0
    %2374 = vmatprep.subr.bf16.mxu0 0
    %2375 = vmatpush1.bf16.msra.mxu0 0
    %2376 = vmatprep.subr.bf16.mxu0 0
    %2377 = vmatpush1.bf16.msra.mxu0 0
    %2378 = vmatprep.subr.bf16.mxu0 0
    %2379 = vmatpush1.bf16.msra.mxu0 0
    %2380 = vmatprep.subr.bf16.mxu0 0
    %2381 = vmatpush1.bf16.msra.mxu0 0
    %2382 = vmatprep.subr.bf16.mxu0 0
    %2383 = vmatpush1.bf16.msra.mxu0 0
    %2384 = vmatprep.subr.bf16.mxu0 0
    %2385 = vmatpush1.bf16.msra.mxu0 0
    %2386 = vmatprep.subr.bf16.mxu0 0
    %2387 = vmatpush1.bf16.msra.mxu0 0
    %2388 = vmatprep.mubr.bf16.mxu0 0
    %2389 = vmatmul.mubr.bf16.gmra.mrb[0].mxu0 %v2354
    %v2390 = vpop.f32.mrb[0].mxu0
    %v2391 = vadd.f32 0.0, %v2390
    %v2392 = vpop.f32.mrb[0].mxu0
    %v2393 = vpop.f32.mrb[0].mxu0
    %v2394 = vadd.f32 0.0, %v2393
    %v2395 = vpop.f32.mrb[0].mxu0
    %2396 = vdwg.mxu0
    %2399 = vrot.lane.b32.xlu0 %v2149, 8
    %v2400 = vpop.permute.xlu0 %2399
    %2401 = vrot.lane.b32.xlu0 %v2152, 8
    %v2402 = vpop.permute.xlu0 %2401
    %2407 = vrot.lane.b32.xlu0 %v2270, 16
    %v2408 = vpop.permute.xlu0 %2407
    %2409 = vrot.lane.b32.xlu0 %v2273, 16
    %v2410 = vpop.permute.xlu0 %2409
    %2415 = vrot.lane.b32.xlu0 %v2391, 24
    %v2416 = vpop.permute.xlu0 %2415
    %2417 = vrot.lane.b32.xlu0 %v2394, 24
    %v2418 = vpop.permute.xlu0 %2417
    %v2421 = vsel %vm200, %v2027, %v2400
    %v2422 = vsel %vm200, %v2030, %v2402
    %v2423 = vsel %vm248, %v2421, %v2408
    %v2424 = vsel %vm248, %v2422, %v2410
    %v2425 = vsel %vm712, %v2423, %v2416
    %v2426 = vsel %vm712, %v2424, %v2418
    %v2427 = vld [vmem:[#allocation7 + $0xa0] sm:$0xf]
    %v2428 = vld [vmem:[#allocation7 + $0xa4] sm:$0xf]
    %v2429 = vld [vmem:[#allocation7 + $0xa8] sm:$0xf]
    %v2430 = vld [vmem:[#allocation7 + $0xac] sm:$0xf]
    %v2431 = vpack.c.bf16 %v2426, %v2425
    %v2432 = vld [vmem:[#allocation8 + $0xd] sm:$0x1]
    %v2433 = vlaneseq
    %v2434 = vshrl.u32 %v2433, 7
    %v2435 = vsub.s32 0, %v2434
    %v2436 = vrot.slane %v2432, %v2435
    %v2441 = vunpack.c.l.b16 %v2427
    %v2442 = vunpack.c.l.b16 %v2428
    %v2443 = vunpack.c.l.b16 %v2429
    %v2444 = vunpack.c.l.b16 %v2430
    %v2445 = vpack.c.b16 %v2442, %v2441
    %v2446 = vpack.c.b16 %v2444, %v2443
    %v2450 = vsel %vm102, %v2431, 0
    %2452 = vmatprep.subr.bf16.mxu0 0
    %2453 = vmatpush1.bf16.msra.mxu0 %v2445
    %2454 = vmatprep.subr.bf16.mxu0 0
    %2455 = vmatpush1.bf16.msra.mxu0 %v2446
    %2456 = vmatprep.subr.bf16.mxu0 0
    %2457 = vmatpush1.bf16.msra.mxu0 0
    %2458 = vmatprep.subr.bf16.mxu0 0
    %2459 = vmatpush1.bf16.msra.mxu0 0
    %2460 = vmatprep.subr.bf16.mxu0 0
    %2461 = vmatpush1.bf16.msra.mxu0 0
    %2462 = vmatprep.subr.bf16.mxu0 0
    %2463 = vmatpush1.bf16.msra.mxu0 0
    %2464 = vmatprep.subr.bf16.mxu0 0
    %2465 = vmatpush1.bf16.msra.mxu0 0
    %2466 = vmatprep.subr.bf16.mxu0 0
    %2467 = vmatpush1.bf16.msra.mxu0 0
    %2468 = vmatprep.subr.bf16.mxu0 0
    %2469 = vmatpush1.bf16.msra.mxu0 0
    %2470 = vmatprep.subr.bf16.mxu0 0
    %2471 = vmatpush1.bf16.msra.mxu0 0
    %2472 = vmatprep.subr.bf16.mxu0 0
    %2473 = vmatpush1.bf16.msra.mxu0 0
    %2474 = vmatprep.subr.bf16.mxu0 0
    %2475 = vmatpush1.bf16.msra.mxu0 0
    %2476 = vmatprep.subr.bf16.mxu0 0
    %2477 = vmatpush1.bf16.msra.mxu0 0
    %2478 = vmatprep.subr.bf16.mxu0 0
    %2479 = vmatpush1.bf16.msra.mxu0 0
    %2480 = vmatprep.subr.bf16.mxu0 0
    %2481 = vmatpush1.bf16.msra.mxu0 0
    %2482 = vmatprep.subr.bf16.mxu0 0
    %2483 = vmatpush1.bf16.msra.mxu0 0
    %2484 = vmatprep.mubr.bf16.mxu0 0
    %2485 = vmatmul.mubr.bf16.gmra.mrb[0].mxu0 %v2450
    %v2486 = vpop.f32.mrb[0].mxu0
    %v2487 = vadd.f32 %v2436, %v2486
    %v2488 = vpop.f32.mrb[0].mxu0
    %v2489 = vpop.f32.mrb[0].mxu0
    %v2490 = vadd.f32 %v2436, %v2489
    %v2491 = vpop.f32.mrb[0].mxu0
    %2492 = vdwg.mxu0
    %v2493 = vadd.f32 %v1794, %v2487
    %v2494 = vadd.f32 %v1795, %v2490
    %v2495 = vld [vmem:[#allocation8 + $0x12] sm:$0x1]
    %v2496 = vld [vmem:[#allocation8 + $0x13] sm:$0x1]
    %v2497 = vsel %vm102, %v2493, 0.0
    %2498 = vadd.xlane.f32.xlu0 %v2497
    %v2499 = vpop.xlane.xlu0 %2498
    %v2500 = vsel %vm102, %v2494, 0.0
    %2501 = vadd.xlane.f32.xlu0 %v2500
    %v2502 = vpop.xlane.xlu0 %2501
    %v2503 = vmul.f32 %v2499, %v791
    %v2504 = vmul.f32 %v2502, %v791
    %v2505 = vsub.f32 %v2493, %v2503
    %v2506 = vsub.f32 %v2494, %v2504
    %v2507 = vmul.f32 %v2505, %v2505
    %v2508 = vmul.f32 %v2506, %v2506
    %v2509 = vsel %vm102, %v2507, 0.0
    %2510 = vadd.xlane.f32.xlu0 %v2509
    %v2511 = vpop.xlane.xlu0 %2510
    %v2512 = vsel %vm102, %v2508, 0.0
    %2513 = vadd.xlane.f32.xlu0 %v2512
    %v2514 = vpop.xlane.xlu0 %2513
    %v2515 = vmul.f32 %v2511, %v791
    %v2516 = vmul.f32 %v2514, %v791
    %v2517 = vadd.f32 %v2515, 1e-05
    %v2518 = vadd.f32 %v2516, 1e-05
    %v2519 = vrsqrt.pop %v2517
    %v2520 = vrsqrt.pop %v2518
    %v2521 = vmul.f32 %v2505, %v2519
    %v2522 = vmul.f32 %v2506, %v2520
    %v2523 = vlaneseq
    %v2524 = vshrl.u32 %v2523, 7
    %v2525 = vsub.s32 0, %v2524
    %v2526 = vrot.slane %v2495, %v2525
    %v2527 = vmul.f32 %v2521, %v2526
    %v2528 = vmul.f32 %v2522, %v2526
    %v2529 = vlaneseq
    %v2530 = vshrl.u32 %v2529, 7
    %v2531 = vsub.s32 0, %v2530
    %v2532 = vrot.slane %v2496, %v2531
    %v2533 = vadd.f32 %v2527, %v2532
    %v2534 = vadd.f32 %v2528, %v2532
    %v2535 = vld [vmem:[#allocation7 + $0xb0] sm:$0xf]
    %v2536 = vld [vmem:[#allocation7 + $0xb4] sm:$0xf]
    %v2537 = vld [vmem:[#allocation7 + $0xb8] sm:$0xf]
    %v2538 = vld [vmem:[#allocation7 + $0xbc] sm:$0xf]
    %v2539 = vpack.c.bf16 %v2534, %v2533
    %v2540 = vld [vmem:[#allocation8 + $0xe] sm:$0x1]
    %v2541 = vlaneseq
    %v2542 = vshrl.u32 %v2541, 7
    %v2543 = vsub.s32 0, %v2542
    %v2544 = vrot.slane %v2540, %v2543
    %v2549 = vunpack.c.l.b16 %v2535
    %v2550 = vunpack.c.l.b16 %v2536
    %v2551 = vunpack.c.l.b16 %v2537
    %v2552 = vunpack.c.l.b16 %v2538
    %v2553 = vpack.c.b16 %v2550, %v2549
    %v2554 = vpack.c.b16 %v2552, %v2551
    %v2558 = vsel %vm102, %v2539, 0
    %2560 = vmatprep.subr.bf16.mxu0 0
    %2561 = vmatpush1.bf16.msra.mxu0 %v2553
    %2562 = vmatprep.subr.bf16.mxu0 0
    %2563 = vmatpush1.bf16.msra.mxu0 %v2554
    %2564 = vmatprep.subr.bf16.mxu0 0
    %2565 = vmatpush1.bf16.msra.mxu0 0
    %2566 = vmatprep.subr.bf16.mxu0 0
    %2567 = vmatpush1.bf16.msra.mxu0 0
    %2568 = vmatprep.subr.bf16.mxu0 0
    %2569 = vmatpush1.bf16.msra.mxu0 0
    %2570 = vmatprep.subr.bf16.mxu0 0
    %2571 = vmatpush1.bf16.msra.mxu0 0
    %2572 = vmatprep.subr.bf16.mxu0 0
    %2573 = vmatpush1.bf16.msra.mxu0 0
    %2574 = vmatprep.subr.bf16.mxu0 0
    %2575 = vmatpush1.bf16.msra.mxu0 0
    %2576 = vmatprep.subr.bf16.mxu0 0
    %2577 = vmatpush1.bf16.msra.mxu0 0
    %2578 = vmatprep.subr.bf16.mxu0 0
    %2579 = vmatpush1.bf16.msra.mxu0 0
    %2580 = vmatprep.subr.bf16.mxu0 0
    %2581 = vmatpush1.bf16.msra.mxu0 0
    %2582 = vmatprep.subr.bf16.mxu0 0
    %2583 = vmatpush1.bf16.msra.mxu0 0
    %2584 = vmatprep.subr.bf16.mxu0 0
    %2585 = vmatpush1.bf16.msra.mxu0 0
    %2586 = vmatprep.subr.bf16.mxu0 0
    %2587 = vmatpush1.bf16.msra.mxu0 0
    %2588 = vmatprep.subr.bf16.mxu0 0
    %2589 = vmatpush1.bf16.msra.mxu0 0
    %2590 = vmatprep.subr.bf16.mxu0 0
    %2591 = vmatpush1.bf16.msra.mxu0 0
    %2592 = vmatprep.mubr.bf16.mxu0 0
    %2593 = vmatmul.mubr.bf16.gmra.mrb[0].mxu0 %v2558
    %v2594 = vpop.f32.mrb[0].mxu0
    %v2595 = vadd.f32 %v2544, %v2594
    %v2596 = vpop.f32.mrb[0].mxu0
    %v2597 = vpop.f32.mrb[0].mxu0
    %v2598 = vadd.f32 %v2544, %v2597
    %v2599 = vpop.f32.mrb[0].mxu0
    %2600 = vdwg.mxu0
    %2601 = vrot.lane.b32.xlu0 %v2553, 96
    %v2602 = vpop.permute.xlu0 %2601
    %2603 = vrot.lane.b32.xlu0 %v2554, 96
    %v2604 = vpop.permute.xlu0 %2603
    %2608 = vrot.lane.b32.xlu0 %v2544, 96
    %v2609 = vpop.permute.xlu0 %2608
    %2611 = vmatprep.subr.bf16.mxu0 0
    %2612 = vmatpush1.bf16.msra.mxu0 %v2602
    %2613 = vmatprep.subr.bf16.mxu0 0
    %2614 = vmatpush1.bf16.msra.mxu0 %v2604
    %2615 = vmatprep.subr.bf16.mxu0 0
    %2616 = vmatpush1.bf16.msra.mxu0 0
    %2617 = vmatprep.subr.bf16.mxu0 0
    %2618 = vmatpush1.bf16.msra.mxu0 0
    %2619 = vmatprep.subr.bf16.mxu0 0
    %2620 = vmatpush1.bf16.msra.mxu0 0
    %2621 = vmatprep.subr.bf16.mxu0 0
    %2622 = vmatpush1.bf16.msra.mxu0 0
    %2623 = vmatprep.subr.bf16.mxu0 0
    %2624 = vmatpush1.bf16.msra.mxu0 0
    %2625 = vmatprep.subr.bf16.mxu0 0
    %2626 = vmatpush1.bf16.msra.mxu0 0
    %2627 = vmatprep.subr.bf16.mxu0 0
    %2628 = vmatpush1.bf16.msra.mxu0 0
    %2629 = vmatprep.subr.bf16.mxu0 0
    %2630 = vmatpush1.bf16.msra.mxu0 0
    %2631 = vmatprep.subr.bf16.mxu0 0
    %2632 = vmatpush1.bf16.msra.mxu0 0
    %2633 = vmatprep.subr.bf16.mxu0 0
    %2634 = vmatpush1.bf16.msra.mxu0 0
    %2635 = vmatprep.subr.bf16.mxu0 0
    %2636 = vmatpush1.bf16.msra.mxu0 0
    %2637 = vmatprep.subr.bf16.mxu0 0
    %2638 = vmatpush1.bf16.msra.mxu0 0
    %2639 = vmatprep.subr.bf16.mxu0 0
    %2640 = vmatpush1.bf16.msra.mxu0 0
    %2641 = vmatprep.subr.bf16.mxu0 0
    %2642 = vmatpush1.bf16.msra.mxu0 0
    %2643 = vmatprep.mubr.bf16.mxu0 0
    %2644 = vmatmul.mubr.bf16.gmra.mrb[0].mxu0 %v902
    %v2645 = vpop.f32.mrb[0].mxu0
    %v2646 = vadd.f32 %v2609, %v2645
    %v2647 = vpop.f32.mrb[0].mxu0
    %v2648 = vpop.f32.mrb[0].mxu0
    %v2649 = vadd.f32 %v2609, %v2648
    %v2650 = vpop.f32.mrb[0].mxu0
    %2651 = vdwg.mxu0
    %v2652 = vpack.c.bf16 %v2598, %v2595
    %v2653 = vpack.c.bf16 %v2649, %v2646
    %v2655 = vsel %vm200, %v2652, 0
    %v2658 = vsel %vm200, %v2653, 0
    %2660 = vmatprep.subr.bf16.mxu0 0
    %2661 = vmatpush1.bf16.xpose.msra.mxu0 %v2658
    %2662 = vmatprep.subr.bf16.mxu0 0
    %2663 = vmatpush1.bf16.xpose.msra.mxu0 0
    %2664 = vmatprep.subr.bf16.mxu0 0
    %2665 = vmatpush1.bf16.xpose.msra.mxu0 0
    %2666 = vmatprep.subr.bf16.mxu0 0
    %2667 = vmatpush1.bf16.xpose.msra.mxu0 0
    %2668 = vmatprep.subr.bf16.mxu0 0
    %2669 = vmatpush1.bf16.xpose.msra.mxu0 0
    %2670 = vmatprep.subr.bf16.mxu0 0
    %2671 = vmatpush1.bf16.xpose.msra.mxu0 0
    %2672 = vmatprep.subr.bf16.mxu0 0
    %2673 = vmatpush1.bf16.xpose.msra.mxu0 0
    %2674 = vmatprep.subr.bf16.mxu0 0
    %2675 = vmatpush1.bf16.xpose.msra.mxu0 0
    %2676 = vmatprep.subr.bf16.mxu0 0
    %2677 = vmatpush1.bf16.xpose.msra.mxu0 0
    %2678 = vmatprep.subr.bf16.mxu0 0
    %2679 = vmatpush1.bf16.xpose.msra.mxu0 0
    %2680 = vmatprep.subr.bf16.mxu0 0
    %2681 = vmatpush1.bf16.xpose.msra.mxu0 0
    %2682 = vmatprep.subr.bf16.mxu0 0
    %2683 = vmatpush1.bf16.xpose.msra.mxu0 0
    %2684 = vmatprep.subr.bf16.mxu0 0
    %2685 = vmatpush1.bf16.xpose.msra.mxu0 0
    %2686 = vmatprep.subr.bf16.mxu0 0
    %2687 = vmatpush1.bf16.xpose.msra.mxu0 0
    %2688 = vmatprep.subr.bf16.mxu0 0
    %2689 = vmatpush1.bf16.xpose.msra.mxu0 0
    %2690 = vmatprep.subr.bf16.mxu0 0
    %2691 = vmatpush1.bf16.xpose.msra.mxu0 0
    %2692 = vmatprep.mubr.bf16.mxu0 0
    %2693 = vmatmul.mubr.bf16.gmra.mrb[0].mxu0 %v2655
    %v2694 = vpop.f32.mrb[0].mxu0
    %v2695 = vadd.f32 %v950, %v2694
    %v2696 = vpop.f32.mrb[0].mxu0
    %v2697 = vpop.f32.mrb[0].mxu0
    %v2698 = vadd.f32 %v952, %v2697
    %v2699 = vpop.f32.mrb[0].mxu0
    %2700 = vdwg.mxu0
    %v2701 = vsel %vm248, %v2695, -inf
    %2702 = vmax.xlane.f32.xlu0 %v2701
    %v2703 = vpop.xlane.xlu0 %2702
    %v2704 = vsel %vm248, %v2698, -inf
    %2705 = vmax.xlane.f32.xlu0 %v2704
    %v2706 = vpop.xlane.xlu0 %2705
    %v2707 = vsub.f32 %v2695, %v2703
    %v2708 = vsub.f32 %v2698, %v2706
    %v2709 = vmul.f32 %v2707, 1.442695
    %v2710 = vpow.pop %v2709
    %v2711 = vmul.f32 %v2708, 1.442695
    %v2712 = vpow.pop %v2711
    %v2713 = vsel %vm248, %v2710, 0.0
    %2714 = vadd.xlane.f32.xlu0 %v2713
    %v2715 = vpop.xlane.xlu0 %2714
    %v2716 = vsel %vm248, %v2712, 0.0
    %2717 = vadd.xlane.f32.xlu0 %v2716
    %v2718 = vpop.xlane.xlu0 %2717
    %v2719 = vrcp.pop %v2715
    %v2720 = vrcp.pop %v2718
    %v2721 = vmul.f32 %v2710, %v2719
    %v2722 = vmul.f32 %v2712, %v2720
    %v2723 = vpack.c.bf16 %v2722, %v2721
    %2725 = vrot.lane.b32.xlu0 %v2653, 96
    %v2726 = vpop.permute.xlu0 %2725
    %v2729 = vsel %vm248, %v2723, 0
    %2731 = vmatprep.subr.bf16.mxu0 0
    %2732 = vmatpush1.bf16.msra.mxu0 %v2726
    %2733 = vmatprep.subr.bf16.mxu0 0
    %2734 = vmatpush1.bf16.msra.mxu0 0
    %2735 = vmatprep.subr.bf16.mxu0 0
    %2736 = vmatpush1.bf16.msra.mxu0 0
    %2737 = vmatprep.subr.bf16.mxu0 0
    %2738 = vmatpush1.bf16.msra.mxu0 0
    %2739 = vmatprep.subr.bf16.mxu0 0
    %2740 = vmatpush1.bf16.msra.mxu0 0
    %2741 = vmatprep.subr.bf16.mxu0 0
    %2742 = vmatpush1.bf16.msra.mxu0 0
    %2743 = vmatprep.subr.bf16.mxu0 0
    %2744 = vmatpush1.bf16.msra.mxu0 0
    %2745 = vmatprep.subr.bf16.mxu0 0
    %2746 = vmatpush1.bf16.msra.mxu0 0
    %2747 = vmatprep.subr.bf16.mxu0 0
    %2748 = vmatpush1.bf16.msra.mxu0 0
    %2749 = vmatprep.subr.bf16.mxu0 0
    %2750 = vmatpush1.bf16.msra.mxu0 0
    %2751 = vmatprep.subr.bf16.mxu0 0
    %2752 = vmatpush1.bf16.msra.mxu0 0
    %2753 = vmatprep.subr.bf16.mxu0 0
    %2754 = vmatpush1.bf16.msra.mxu0 0
    %2755 = vmatprep.subr.bf16.mxu0 0
    %2756 = vmatpush1.bf16.msra.mxu0 0
    %2757 = vmatprep.subr.bf16.mxu0 0
    %2758 = vmatpush1.bf16.msra.mxu0 0
    %2759 = vmatprep.subr.bf16.mxu0 0
    %2760 = vmatpush1.bf16.msra.mxu0 0
    %2761 = vmatprep.subr.bf16.mxu0 0
    %2762 = vmatpush1.bf16.msra.mxu0 0
    %2763 = vmatprep.mubr.bf16.mxu0 0
    %2764 = vmatmul.mubr.bf16.gmra.mrb[0].mxu0 %v2729
    %v2765 = vpop.f32.mrb[0].mxu0
    %v2766 = vadd.f32 0.0, %v2765
    %v2767 = vpop.f32.mrb[0].mxu0
    %v2768 = vpop.f32.mrb[0].mxu0
    %v2769 = vadd.f32 0.0, %v2768
    %v2770 = vpop.f32.mrb[0].mxu0
    %2771 = vdwg.mxu0
    %2773 = vrot.lane.b32.xlu0 %v2652, 120
    %v2774 = vpop.permute.xlu0 %2773
    %2775 = vrot.lane.b32.xlu0 %v2653, 120
    %v2776 = vpop.permute.xlu0 %2775
    %v2778 = vsel %vm200, %v2774, 0
    %v2781 = vsel %vm200, %v2776, 0
    %2783 = vmatprep.subr.bf16.mxu0 0
    %2784 = vmatpush1.bf16.xpose.msra.mxu0 %v2781
    %2785 = vmatprep.subr.bf16.mxu0 0
    %2786 = vmatpush1.bf16.xpose.msra.mxu0 0
    %2787 = vmatprep.subr.bf16.mxu0 0
    %2788 = vmatpush1.bf16.xpose.msra.mxu0 0
    %2789 = vmatprep.subr.bf16.mxu0 0
    %2790 = vmatpush1.bf16.xpose.msra.mxu0 0
    %2791 = vmatprep.subr.bf16.mxu0 0
    %2792 = vmatpush1.bf16.xpose.msra.mxu0 0
    %2793 = vmatprep.subr.bf16.mxu0 0
    %2794 = vmatpush1.bf16.xpose.msra.mxu0 0
    %2795 = vmatprep.subr.bf16.mxu0 0
    %2796 = vmatpush1.bf16.xpose.msra.mxu0 0
    %2797 = vmatprep.subr.bf16.mxu0 0
    %2798 = vmatpush1.bf16.xpose.msra.mxu0 0
    %2799 = vmatprep.subr.bf16.mxu0 0
    %2800 = vmatpush1.bf16.xpose.msra.mxu0 0
    %2801 = vmatprep.subr.bf16.mxu0 0
    %2802 = vmatpush1.bf16.xpose.msra.mxu0 0
    %2803 = vmatprep.subr.bf16.mxu0 0
    %2804 = vmatpush1.bf16.xpose.msra.mxu0 0
    %2805 = vmatprep.subr.bf16.mxu0 0
    %2806 = vmatpush1.bf16.xpose.msra.mxu0 0
    %2807 = vmatprep.subr.bf16.mxu0 0
    %2808 = vmatpush1.bf16.xpose.msra.mxu0 0
    %2809 = vmatprep.subr.bf16.mxu0 0
    %2810 = vmatpush1.bf16.xpose.msra.mxu0 0
    %2811 = vmatprep.subr.bf16.mxu0 0
    %2812 = vmatpush1.bf16.xpose.msra.mxu0 0
    %2813 = vmatprep.subr.bf16.mxu0 0
    %2814 = vmatpush1.bf16.xpose.msra.mxu0 0
    %2815 = vmatprep.mubr.bf16.mxu0 0
    %2816 = vmatmul.mubr.bf16.gmra.mrb[0].mxu0 %v2778
    %v2817 = vpop.f32.mrb[0].mxu0
    %v2818 = vadd.f32 %v950, %v2817
    %v2819 = vpop.f32.mrb[0].mxu0
    %v2820 = vpop.f32.mrb[0].mxu0
    %v2821 = vadd.f32 %v952, %v2820
    %v2822 = vpop.f32.mrb[0].mxu0
    %2823 = vdwg.mxu0
    %v2824 = vsel %vm248, %v2818, -inf
    %2825 = vmax.xlane.f32.xlu0 %v2824
    %v2826 = vpop.xlane.xlu0 %2825
    %v2827 = vsel %vm248, %v2821, -inf
    %2828 = vmax.xlane.f32.xlu0 %v2827
    %v2829 = vpop.xlane.xlu0 %2828
    %v2830 = vsub.f32 %v2818, %v2826
    %v2831 = vsub.f32 %v2821, %v2829
    %v2832 = vmul.f32 %v2830, 1.442695
    %v2833 = vpow.pop %v2832
    %v2834 = vmul.f32 %v2831, 1.442695
    %v2835 = vpow.pop %v2834
    %v2836 = vsel %vm248, %v2833, 0.0
    %2837 = vadd.xlane.f32.xlu0 %v2836
    %v2838 = vpop.xlane.xlu0 %2837
    %v2839 = vsel %vm248, %v2835, 0.0
    %2840 = vadd.xlane.f32.xlu0 %v2839
    %v2841 = vpop.xlane.xlu0 %2840
    %v2842 = vrcp.pop %v2838
    %v2843 = vrcp.pop %v2841
    %v2844 = vmul.f32 %v2833, %v2842
    %v2845 = vmul.f32 %v2835, %v2843
    %v2846 = vpack.c.bf16 %v2845, %v2844
    %2847 = vrot.lane.b32.xlu0 %v2653, 88
    %v2848 = vpop.permute.xlu0 %2847
    %v2851 = vsel %vm248, %v2846, 0
    %2853 = vmatprep.subr.bf16.mxu0 0
    %2854 = vmatpush1.bf16.msra.mxu0 %v2848
    %2855 = vmatprep.subr.bf16.mxu0 0
    %2856 = vmatpush1.bf16.msra.mxu0 0
    %2857 = vmatprep.subr.bf16.mxu0 0
    %2858 = vmatpush1.bf16.msra.mxu0 0
    %2859 = vmatprep.subr.bf16.mxu0 0
    %2860 = vmatpush1.bf16.msra.mxu0 0
    %2861 = vmatprep.subr.bf16.mxu0 0
    %2862 = vmatpush1.bf16.msra.mxu0 0
    %2863 = vmatprep.subr.bf16.mxu0 0
    %2864 = vmatpush1.bf16.msra.mxu0 0
    %2865 = vmatprep.subr.bf16.mxu0 0
    %2866 = vmatpush1.bf16.msra.mxu0 0
    %2867 = vmatprep.subr.bf16.mxu0 0
    %2868 = vmatpush1.bf16.msra.mxu0 0
    %2869 = vmatprep.subr.bf16.mxu0 0
    %2870 = vmatpush1.bf16.msra.mxu0 0
    %2871 = vmatprep.subr.bf16.mxu0 0
    %2872 = vmatpush1.bf16.msra.mxu0 0
    %2873 = vmatprep.subr.bf16.mxu0 0
    %2874 = vmatpush1.bf16.msra.mxu0 0
    %2875 = vmatprep.subr.bf16.mxu0 0
    %2876 = vmatpush1.bf16.msra.mxu0 0
    %2877 = vmatprep.subr.bf16.mxu0 0
    %2878 = vmatpush1.bf16.msra.mxu0 0
    %2879 = vmatprep.subr.bf16.mxu0 0
    %2880 = vmatpush1.bf16.msra.mxu0 0
    %2881 = vmatprep.subr.bf16.mxu0 0
    %2882 = vmatpush1.bf16.msra.mxu0 0
    %2883 = vmatprep.subr.bf16.mxu0 0
    %2884 = vmatpush1.bf16.msra.mxu0 0
    %2885 = vmatprep.mubr.bf16.mxu0 0
    %2886 = vmatmul.mubr.bf16.gmra.mrb[0].mxu0 %v2851
    %v2887 = vpop.f32.mrb[0].mxu0
    %v2888 = vadd.f32 0.0, %v2887
    %v2889 = vpop.f32.mrb[0].mxu0
    %v2890 = vpop.f32.mrb[0].mxu0
    %v2891 = vadd.f32 0.0, %v2890
    %v2892 = vpop.f32.mrb[0].mxu0
    %2893 = vdwg.mxu0
    %2894 = vrot.lane.b32.xlu0 %v2652, 112
    %v2895 = vpop.permute.xlu0 %2894
    %2896 = vrot.lane.b32.xlu0 %v2653, 112
    %v2897 = vpop.permute.xlu0 %2896
    %v2899 = vsel %vm200, %v2895, 0
    %v2902 = vsel %vm200, %v2897, 0
    %2904 = vmatprep.subr.bf16.mxu0 0
    %2905 = vmatpush1.bf16.xpose.msra.mxu0 %v2902
    %2906 = vmatprep.subr.bf16.mxu0 0
    %2907 = vmatpush1.bf16.xpose.msra.mxu0 0
    %2908 = vmatprep.subr.bf16.mxu0 0
    %2909 = vmatpush1.bf16.xpose.msra.mxu0 0
    %2910 = vmatprep.subr.bf16.mxu0 0
    %2911 = vmatpush1.bf16.xpose.msra.mxu0 0
    %2912 = vmatprep.subr.bf16.mxu0 0
    %2913 = vmatpush1.bf16.xpose.msra.mxu0 0
    %2914 = vmatprep.subr.bf16.mxu0 0
    %2915 = vmatpush1.bf16.xpose.msra.mxu0 0
    %2916 = vmatprep.subr.bf16.mxu0 0
    %2917 = vmatpush1.bf16.xpose.msra.mxu0 0
    %2918 = vmatprep.subr.bf16.mxu0 0
    %2919 = vmatpush1.bf16.xpose.msra.mxu0 0
    %2920 = vmatprep.subr.bf16.mxu0 0
    %2921 = vmatpush1.bf16.xpose.msra.mxu0 0
    %2922 = vmatprep.subr.bf16.mxu0 0
    %2923 = vmatpush1.bf16.xpose.msra.mxu0 0
    %2924 = vmatprep.subr.bf16.mxu0 0
    %2925 = vmatpush1.bf16.xpose.msra.mxu0 0
    %2926 = vmatprep.subr.bf16.mxu0 0
    %2927 = vmatpush1.bf16.xpose.msra.mxu0 0
    %2928 = vmatprep.subr.bf16.mxu0 0
    %2929 = vmatpush1.bf16.xpose.msra.mxu0 0
    %2930 = vmatprep.subr.bf16.mxu0 0
    %2931 = vmatpush1.bf16.xpose.msra.mxu0 0
    %2932 = vmatprep.subr.bf16.mxu0 0
    %2933 = vmatpush1.bf16.xpose.msra.mxu0 0
    %2934 = vmatprep.subr.bf16.mxu0 0
    %2935 = vmatpush1.bf16.xpose.msra.mxu0 0
    %2936 = vmatprep.mubr.bf16.mxu0 0
    %2937 = vmatmul.mubr.bf16.gmra.mrb[0].mxu0 %v2899
    %v2938 = vpop.f32.mrb[0].mxu0
    %v2939 = vadd.f32 %v950, %v2938
    %v2940 = vpop.f32.mrb[0].mxu0
    %v2941 = vpop.f32.mrb[0].mxu0
    %v2942 = vadd.f32 %v952, %v2941
    %v2943 = vpop.f32.mrb[0].mxu0
    %2944 = vdwg.mxu0
    %v2945 = vsel %vm248, %v2939, -inf
    %2946 = vmax.xlane.f32.xlu0 %v2945
    %v2947 = vpop.xlane.xlu0 %2946
    %v2948 = vsel %vm248, %v2942, -inf
    %2949 = vmax.xlane.f32.xlu0 %v2948
    %v2950 = vpop.xlane.xlu0 %2949
    %v2951 = vsub.f32 %v2939, %v2947
    %v2952 = vsub.f32 %v2942, %v2950
    %v2953 = vmul.f32 %v2951, 1.442695
    %v2954 = vpow.pop %v2953
    %v2955 = vmul.f32 %v2952, 1.442695
    %v2956 = vpow.pop %v2955
    %v2957 = vsel %vm248, %v2954, 0.0
    %2958 = vadd.xlane.f32.xlu0 %v2957
    %v2959 = vpop.xlane.xlu0 %2958
    %v2960 = vsel %vm248, %v2956, 0.0
    %2961 = vadd.xlane.f32.xlu0 %v2960
    %v2962 = vpop.xlane.xlu0 %2961
    %v2963 = vrcp.pop %v2959
    %v2964 = vrcp.pop %v2962
    %v2965 = vmul.f32 %v2954, %v2963
    %v2966 = vmul.f32 %v2956, %v2964
    %v2967 = vpack.c.bf16 %v2966, %v2965
    %2968 = vrot.lane.b32.xlu0 %v2653, 80
    %v2969 = vpop.permute.xlu0 %2968
    %v2972 = vsel %vm248, %v2967, 0
    %2974 = vmatprep.subr.bf16.mxu0 0
    %2975 = vmatpush1.bf16.msra.mxu0 %v2969
    %2976 = vmatprep.subr.bf16.mxu0 0
    %2977 = vmatpush1.bf16.msra.mxu0 0
    %2978 = vmatprep.subr.bf16.mxu0 0
    %2979 = vmatpush1.bf16.msra.mxu0 0
    %2980 = vmatprep.subr.bf16.mxu0 0
    %2981 = vmatpush1.bf16.msra.mxu0 0
    %2982 = vmatprep.subr.bf16.mxu0 0
    %2983 = vmatpush1.bf16.msra.mxu0 0
    %2984 = vmatprep.subr.bf16.mxu0 0
    %2985 = vmatpush1.bf16.msra.mxu0 0
    %2986 = vmatprep.subr.bf16.mxu0 0
    %2987 = vmatpush1.bf16.msra.mxu0 0
    %2988 = vmatprep.subr.bf16.mxu0 0
    %2989 = vmatpush1.bf16.msra.mxu0 0
    %2990 = vmatprep.subr.bf16.mxu0 0
    %2991 = vmatpush1.bf16.msra.mxu0 0
    %2992 = vmatprep.subr.bf16.mxu0 0
    %2993 = vmatpush1.bf16.msra.mxu0 0
    %2994 = vmatprep.subr.bf16.mxu0 0
    %2995 = vmatpush1.bf16.msra.mxu0 0
    %2996 = vmatprep.subr.bf16.mxu0 0
    %2997 = vmatpush1.bf16.msra.mxu0 0
    %2998 = vmatprep.subr.bf16.mxu0 0
    %2999 = vmatpush1.bf16.msra.mxu0 0
    %3000 = vmatprep.subr.bf16.mxu0 0
    %3001 = vmatpush1.bf16.msra.mxu0 0
    %3002 = vmatprep.subr.bf16.mxu0 0
    %3003 = vmatpush1.bf16.msra.mxu0 0
    %3004 = vmatprep.subr.bf16.mxu0 0
    %3005 = vmatpush1.bf16.msra.mxu0 0
    %3006 = vmatprep.mubr.bf16.mxu0 0
    %3007 = vmatmul.mubr.bf16.gmra.mrb[0].mxu0 %v2972
    %v3008 = vpop.f32.mrb[0].mxu0
    %v3009 = vadd.f32 0.0, %v3008
    %v3010 = vpop.f32.mrb[0].mxu0
    %v3011 = vpop.f32.mrb[0].mxu0
    %v3012 = vadd.f32 0.0, %v3011
    %v3013 = vpop.f32.mrb[0].mxu0
    %3014 = vdwg.mxu0
    %3015 = vrot.lane.b32.xlu0 %v2652, 104
    %v3016 = vpop.permute.xlu0 %3015
    %3017 = vrot.lane.b32.xlu0 %v2653, 104
    %v3018 = vpop.permute.xlu0 %3017
    %v3020 = vsel %vm200, %v3016, 0
    %v3023 = vsel %vm200, %v3018, 0
    %3025 = vmatprep.subr.bf16.mxu0 0
    %3026 = vmatpush1.bf16.xpose.msra.mxu0 %v3023
    %3027 = vmatprep.subr.bf16.mxu0 0
    %3028 = vmatpush1.bf16.xpose.msra.mxu0 0
    %3029 = vmatprep.subr.bf16.mxu0 0
    %3030 = vmatpush1.bf16.xpose.msra.mxu0 0
    %3031 = vmatprep.subr.bf16.mxu0 0
    %3032 = vmatpush1.bf16.xpose.msra.mxu0 0
    %3033 = vmatprep.subr.bf16.mxu0 0
    %3034 = vmatpush1.bf16.xpose.msra.mxu0 0
    %3035 = vmatprep.subr.bf16.mxu0 0
    %3036 = vmatpush1.bf16.xpose.msra.mxu0 0
    %3037 = vmatprep.subr.bf16.mxu0 0
    %3038 = vmatpush1.bf16.xpose.msra.mxu0 0
    %3039 = vmatprep.subr.bf16.mxu0 0
    %3040 = vmatpush1.bf16.xpose.msra.mxu0 0
    %3041 = vmatprep.subr.bf16.mxu0 0
    %3042 = vmatpush1.bf16.xpose.msra.mxu0 0
    %3043 = vmatprep.subr.bf16.mxu0 0
    %3044 = vmatpush1.bf16.xpose.msra.mxu0 0
    %3045 = vmatprep.subr.bf16.mxu0 0
    %3046 = vmatpush1.bf16.xpose.msra.mxu0 0
    %3047 = vmatprep.subr.bf16.mxu0 0
    %3048 = vmatpush1.bf16.xpose.msra.mxu0 0
    %3049 = vmatprep.subr.bf16.mxu0 0
    %3050 = vmatpush1.bf16.xpose.msra.mxu0 0
    %3051 = vmatprep.subr.bf16.mxu0 0
    %3052 = vmatpush1.bf16.xpose.msra.mxu0 0
    %3053 = vmatprep.subr.bf16.mxu0 0
    %3054 = vmatpush1.bf16.xpose.msra.mxu0 0
    %3055 = vmatprep.subr.bf16.mxu0 0
    %3056 = vmatpush1.bf16.xpose.msra.mxu0 0
    %3057 = vmatprep.mubr.bf16.mxu0 0
    %3058 = vmatmul.mubr.bf16.gmra.mrb[0].mxu0 %v3020
    %v3059 = vpop.f32.mrb[0].mxu0
    %v3060 = vadd.f32 %v950, %v3059
    %v3061 = vpop.f32.mrb[0].mxu0
    %v3062 = vpop.f32.mrb[0].mxu0
    %v3063 = vadd.f32 %v952, %v3062
    %v3064 = vpop.f32.mrb[0].mxu0
    %3065 = vdwg.mxu0
    %v3066 = vsel %vm248, %v3060, -inf
    %3067 = vmax.xlane.f32.xlu0 %v3066
    %v3068 = vpop.xlane.xlu0 %3067
    %v3069 = vsel %vm248, %v3063, -inf
    %3070 = vmax.xlane.f32.xlu0 %v3069
    %v3071 = vpop.xlane.xlu0 %3070
    %v3072 = vsub.f32 %v3060, %v3068
    %v3073 = vsub.f32 %v3063, %v3071
    %v3074 = vmul.f32 %v3072, 1.442695
    %v3075 = vpow.pop %v3074
    %v3076 = vmul.f32 %v3073, 1.442695
    %v3077 = vpow.pop %v3076
    %v3078 = vsel %vm248, %v3075, 0.0
    %3079 = vadd.xlane.f32.xlu0 %v3078
    %v3080 = vpop.xlane.xlu0 %3079
    %v3081 = vsel %vm248, %v3077, 0.0
    %3082 = vadd.xlane.f32.xlu0 %v3081
    %v3083 = vpop.xlane.xlu0 %3082
    %v3084 = vrcp.pop %v3080
    %v3085 = vrcp.pop %v3083
    %v3086 = vmul.f32 %v3075, %v3084
    %v3087 = vmul.f32 %v3077, %v3085
    %v3088 = vpack.c.bf16 %v3087, %v3086
    %3089 = vrot.lane.b32.xlu0 %v2653, 72
    %v3090 = vpop.permute.xlu0 %3089
    %v3093 = vsel %vm248, %v3088, 0
    %3095 = vmatprep.subr.bf16.mxu0 0
    %3096 = vmatpush1.bf16.msra.mxu0 %v3090
    %3097 = vmatprep.subr.bf16.mxu0 0
    %3098 = vmatpush1.bf16.msra.mxu0 0
    %3099 = vmatprep.subr.bf16.mxu0 0
    %3100 = vmatpush1.bf16.msra.mxu0 0
    %3101 = vmatprep.subr.bf16.mxu0 0
    %3102 = vmatpush1.bf16.msra.mxu0 0
    %3103 = vmatprep.subr.bf16.mxu0 0
    %3104 = vmatpush1.bf16.msra.mxu0 0
    %3105 = vmatprep.subr.bf16.mxu0 0
    %3106 = vmatpush1.bf16.msra.mxu0 0
    %3107 = vmatprep.subr.bf16.mxu0 0
    %3108 = vmatpush1.bf16.msra.mxu0 0
    %3109 = vmatprep.subr.bf16.mxu0 0
    %3110 = vmatpush1.bf16.msra.mxu0 0
    %3111 = vmatprep.subr.bf16.mxu0 0
    %3112 = vmatpush1.bf16.msra.mxu0 0
    %3113 = vmatprep.subr.bf16.mxu0 0
    %3114 = vmatpush1.bf16.msra.mxu0 0
    %3115 = vmatprep.subr.bf16.mxu0 0
    %3116 = vmatpush1.bf16.msra.mxu0 0
    %3117 = vmatprep.subr.bf16.mxu0 0
    %3118 = vmatpush1.bf16.msra.mxu0 0
    %3119 = vmatprep.subr.bf16.mxu0 0
    %3120 = vmatpush1.bf16.msra.mxu0 0
    %3121 = vmatprep.subr.bf16.mxu0 0
    %3122 = vmatpush1.bf16.msra.mxu0 0
    %3123 = vmatprep.subr.bf16.mxu0 0
    %3124 = vmatpush1.bf16.msra.mxu0 0
    %3125 = vmatprep.subr.bf16.mxu0 0
    %3126 = vmatpush1.bf16.msra.mxu0 0
    %3127 = vmatprep.mubr.bf16.mxu0 0
    %3128 = vmatmul.mubr.bf16.gmra.mrb[0].mxu0 %v3093
    %v3129 = vpop.f32.mrb[0].mxu0
    %v3130 = vadd.f32 0.0, %v3129
    %v3131 = vpop.f32.mrb[0].mxu0
    %v3132 = vpop.f32.mrb[0].mxu0
    %v3133 = vadd.f32 0.0, %v3132
    %v3134 = vpop.f32.mrb[0].mxu0
    %3135 = vdwg.mxu0
    %3138 = vrot.lane.b32.xlu0 %v2888, 8
    %v3139 = vpop.permute.xlu0 %3138
    %3140 = vrot.lane.b32.xlu0 %v2891, 8
    %v3141 = vpop.permute.xlu0 %3140
    %3146 = vrot.lane.b32.xlu0 %v3009, 16
    %v3147 = vpop.permute.xlu0 %3146
    %3148 = vrot.lane.b32.xlu0 %v3012, 16
    %v3149 = vpop.permute.xlu0 %3148
    %3154 = vrot.lane.b32.xlu0 %v3130, 24
    %v3155 = vpop.permute.xlu0 %3154
    %3156 = vrot.lane.b32.xlu0 %v3133, 24
    %v3157 = vpop.permute.xlu0 %3156
    %v3160 = vsel %vm200, %v2766, %v3139
    %v3161 = vsel %vm200, %v2769, %v3141
    %v3162 = vsel %vm248, %v3160, %v3147
    %v3163 = vsel %vm248, %v3161, %v3149
    %v3164 = vsel %vm712, %v3162, %v3155
    %v3165 = vsel %vm712, %v3163, %v3157
    %v3166 = vld [vmem:[#allocation7 + $0xc0] sm:$0xf]
    %v3167 = vld [vmem:[#allocation7 + $0xc4] sm:$0xf]
    %v3168 = vld [vmem:[#allocation7 + $0xc8] sm:$0xf]
    %v3169 = vld [vmem:[#allocation7 + $0xcc] sm:$0xf]
    %v3170 = vpack.c.bf16 %v3165, %v3164
    %v3171 = vld [vmem:[#allocation8 + $0xf] sm:$0x1]
    %v3172 = vlaneseq
    %v3173 = vshrl.u32 %v3172, 7
    %v3174 = vsub.s32 0, %v3173
    %v3175 = vrot.slane %v3171, %v3174
    %v3180 = vunpack.c.l.b16 %v3166
    %v3181 = vunpack.c.l.b16 %v3167
    %v3182 = vunpack.c.l.b16 %v3168
    %v3183 = vunpack.c.l.b16 %v3169
    %v3184 = vpack.c.b16 %v3181, %v3180
    %v3185 = vpack.c.b16 %v3183, %v3182
    %v3189 = vsel %vm102, %v3170, 0
    %3191 = vmatprep.subr.bf16.mxu0 0
    %3192 = vmatpush1.bf16.msra.mxu0 %v3184
    %3193 = vmatprep.subr.bf16.mxu0 0
    %3194 = vmatpush1.bf16.msra.mxu0 %v3185
    %3195 = vmatprep.subr.bf16.mxu0 0
    %3196 = vmatpush1.bf16.msra.mxu0 0
    %3197 = vmatprep.subr.bf16.mxu0 0
    %3198 = vmatpush1.bf16.msra.mxu0 0
    %3199 = vmatprep.subr.bf16.mxu0 0
    %3200 = vmatpush1.bf16.msra.mxu0 0
    %3201 = vmatprep.subr.bf16.mxu0 0
    %3202 = vmatpush1.bf16.msra.mxu0 0
    %3203 = vmatprep.subr.bf16.mxu0 0
    %3204 = vmatpush1.bf16.msra.mxu0 0
    %3205 = vmatprep.subr.bf16.mxu0 0
    %3206 = vmatpush1.bf16.msra.mxu0 0
    %3207 = vmatprep.subr.bf16.mxu0 0
    %3208 = vmatpush1.bf16.msra.mxu0 0
    %3209 = vmatprep.subr.bf16.mxu0 0
    %3210 = vmatpush1.bf16.msra.mxu0 0
    %3211 = vmatprep.subr.bf16.mxu0 0
    %3212 = vmatpush1.bf16.msra.mxu0 0
    %3213 = vmatprep.subr.bf16.mxu0 0
    %3214 = vmatpush1.bf16.msra.mxu0 0
    %3215 = vmatprep.subr.bf16.mxu0 0
    %3216 = vmatpush1.bf16.msra.mxu0 0
    %3217 = vmatprep.subr.bf16.mxu0 0
    %3218 = vmatpush1.bf16.msra.mxu0 0
    %3219 = vmatprep.subr.bf16.mxu0 0
    %3220 = vmatpush1.bf16.msra.mxu0 0
    %3221 = vmatprep.subr.bf16.mxu0 0
    %3222 = vmatpush1.bf16.msra.mxu0 0
    %3223 = vmatprep.mubr.bf16.mxu0 0
    %3224 = vmatmul.mubr.bf16.gmra.mrb[0].mxu0 %v3189
    %v3225 = vpop.f32.mrb[0].mxu0
    %v3226 = vadd.f32 %v3175, %v3225
    %v3227 = vpop.f32.mrb[0].mxu0
    %v3228 = vpop.f32.mrb[0].mxu0
    %v3229 = vadd.f32 %v3175, %v3228
    %v3230 = vpop.f32.mrb[0].mxu0
    %3231 = vdwg.mxu0
    %v3232 = vadd.f32 %v2533, %v3226
    %v3233 = vadd.f32 %v2534, %v3229
    %v3234 = vld [vmem:[#allocation8 + $0x14] sm:$0x1]
    %v3235 = vld [vmem:[#allocation8 + $0x15] sm:$0x1]
    %v3236 = vsel %vm102, %v3232, 0.0
    %3237 = vadd.xlane.f32.xlu0 %v3236
    %v3238 = vpop.xlane.xlu0 %3237
    %v3239 = vsel %vm102, %v3233, 0.0
    %3240 = vadd.xlane.f32.xlu0 %v3239
    %v3241 = vpop.xlane.xlu0 %3240
    %v3242 = vmul.f32 %v3238, %v791
    %v3243 = vmul.f32 %v3241, %v791
    %v3244 = vsub.f32 %v3232, %v3242
    %v3245 = vsub.f32 %v3233, %v3243
    %v3246 = vmul.f32 %v3244, %v3244
    %v3247 = vmul.f32 %v3245, %v3245
    %v3248 = vsel %vm102, %v3246, 0.0
    %3249 = vadd.xlane.f32.xlu0 %v3248
    %v3250 = vpop.xlane.xlu0 %3249
    %v3251 = vsel %vm102, %v3247, 0.0
    %3252 = vadd.xlane.f32.xlu0 %v3251
    %v3253 = vpop.xlane.xlu0 %3252
    %v3254 = vmul.f32 %v3250, %v791
    %v3255 = vmul.f32 %v3253, %v791
    %v3256 = vadd.f32 %v3254, 1e-05
    %v3257 = vadd.f32 %v3255, 1e-05
    %v3258 = vrsqrt.pop %v3256
    %v3259 = vrsqrt.pop %v3257
    %v3260 = vmul.f32 %v3244, %v3258
    %v3261 = vmul.f32 %v3245, %v3259
    %v3262 = vlaneseq
    %v3263 = vshrl.u32 %v3262, 7
    %v3264 = vsub.s32 0, %v3263
    %v3265 = vrot.slane %v3234, %v3264
    %v3266 = vmul.f32 %v3260, %v3265
    %v3267 = vmul.f32 %v3261, %v3265
    %v3268 = vlaneseq
    %v3269 = vshrl.u32 %v3268, 7
    %v3270 = vsub.s32 0, %v3269
    %v3271 = vrot.slane %v3235, %v3270
    %v3272 = vadd.f32 %v3266, %v3271
    %v3273 = vadd.f32 %v3267, %v3271
    %v3274 = vld [vmem:[#allocation7 + $0xd0] sm:$0xf]
    %v3275 = vld [vmem:[#allocation7 + $0xd4] sm:$0xf]
    %v3276 = vld [vmem:[#allocation7 + $0xd8] sm:$0xf]
    %v3277 = vld [vmem:[#allocation7 + $0xdc] sm:$0xf]
    %v3278 = vpack.c.bf16 %v3273, %v3272
    %v3279 = vld [vmem:[#allocation8 + $0x10] sm:$0x1]
    %v3280 = vlaneseq
    %v3281 = vshrl.u32 %v3280, 7
    %v3282 = vsub.s32 0, %v3281
    %v3283 = vrot.slane %v3279, %v3282
    %v3288 = vunpack.c.l.b16 %v3274
    %v3289 = vunpack.c.l.b16 %v3275
    %v3290 = vunpack.c.l.b16 %v3276
    %v3291 = vunpack.c.l.b16 %v3277
    %v3292 = vpack.c.b16 %v3289, %v3288
    %v3293 = vpack.c.b16 %v3291, %v3290
    %v3297 = vsel %vm102, %v3278, 0
    %3299 = vmatprep.subr.bf16.mxu0 0
    %3300 = vmatpush1.bf16.msra.mxu0 %v3292
    %3301 = vmatprep.subr.bf16.mxu0 0
    %3302 = vmatpush1.bf16.msra.mxu0 %v3293
    %3303 = vmatprep.subr.bf16.mxu0 0
    %3304 = vmatpush1.bf16.msra.mxu0 0
    %3305 = vmatprep.subr.bf16.mxu0 0
    %3306 = vmatpush1.bf16.msra.mxu0 0
    %3307 = vmatprep.subr.bf16.mxu0 0
    %3308 = vmatpush1.bf16.msra.mxu0 0
    %3309 = vmatprep.subr.bf16.mxu0 0
    %3310 = vmatpush1.bf16.msra.mxu0 0
    %3311 = vmatprep.subr.bf16.mxu0 0
    %3312 = vmatpush1.bf16.msra.mxu0 0
    %3313 = vmatprep.subr.bf16.mxu0 0
    %3314 = vmatpush1.bf16.msra.mxu0 0
    %3315 = vmatprep.subr.bf16.mxu0 0
    %3316 = vmatpush1.bf16.msra.mxu0 0
    %3317 = vmatprep.subr.bf16.mxu0 0
    %3318 = vmatpush1.bf16.msra.mxu0 0
    %3319 = vmatprep.subr.bf16.mxu0 0
    %3320 = vmatpush1.bf16.msra.mxu0 0
    %3321 = vmatprep.subr.bf16.mxu0 0
    %3322 = vmatpush1.bf16.msra.mxu0 0
    %3323 = vmatprep.subr.bf16.mxu0 0
    %3324 = vmatpush1.bf16.msra.mxu0 0
    %3325 = vmatprep.subr.bf16.mxu0 0
    %3326 = vmatpush1.bf16.msra.mxu0 0
    %3327 = vmatprep.subr.bf16.mxu0 0
    %3328 = vmatpush1.bf16.msra.mxu0 0
    %3329 = vmatprep.subr.bf16.mxu0 0
    %3330 = vmatpush1.bf16.msra.mxu0 0
    %3331 = vmatprep.mubr.bf16.mxu0 0
    %3332 = vmatmul.mubr.bf16.gmra.mrb[0].mxu0 %v3297
    %v3333 = vpop.f32.mrb[0].mxu0
    %v3334 = vadd.f32 %v3283, %v3333
    %v3335 = vpop.f32.mrb[0].mxu0
    %v3336 = vpop.f32.mrb[0].mxu0
    %v3337 = vadd.f32 %v3283, %v3336
    %v3338 = vpop.f32.mrb[0].mxu0
    %3339 = vdwg.mxu0
    %v3340 = vmax.f32 %v3334, 0.0
    %v3341 = vmax.f32 %v3337, 0.0
    %v3342 = vld [vmem:[#allocation7 + $0xe0] sm:$0xf]
    %v3343 = vld [vmem:[#allocation7 + $0xe4] sm:$0xf]
    %v3344 = vld [vmem:[#allocation7 + $0xe8] sm:$0xf]
    %v3345 = vld [vmem:[#allocation7 + $0xec] sm:$0xf]
    %v3346 = vld [vmem:[#allocation7 + $0xf0] sm:$0xf]
    %v3347 = vld [vmem:[#allocation7 + $0xf4] sm:$0xf]
    %v3348 = vld [vmem:[#allocation7 + $0xf8] sm:$0xf]
    %v3349 = vld [vmem:[#allocation7 + $0xfc] sm:$0xf]
    %v3350 = vld [vmem:[#allocation7 + $0x100] sm:$0xf]
    %v3351 = vld [vmem:[#allocation7 + $0x104] sm:$0xf]
    %v3352 = vld [vmem:[#allocation7 + $0x108] sm:$0xf]
    %v3353 = vld [vmem:[#allocation7 + $0x10c] sm:$0xf]
    %v3354 = vld [vmem:[#allocation7 + $0x110] sm:$0xf]
    %v3355 = vld [vmem:[#allocation7 + $0x114] sm:$0xf]
    %v3356 = vld [vmem:[#allocation7 + $0x118] sm:$0xf]
    %v3357 = vld [vmem:[#allocation7 + $0x11c] sm:$0xf]
    %v3358 = vpack.c.bf16 %v3341, %v3340
    %v3359 = vld [vmem:[#allocation8 + $0x11] sm:$0x1]
    %v3360 = vlaneseq
    %v3361 = vshrl.u32 %v3360, 7
    %v3362 = vsub.s32 0, %v3361
    %v3363 = vrot.slane %v3359, %v3362
    %v3380 = vunpack.c.l.b16 %v3342
    %v3381 = vunpack.c.l.b16 %v3343
    %v3382 = vunpack.c.l.b16 %v3344
    %v3383 = vunpack.c.l.b16 %v3345
    %v3384 = vunpack.c.l.b16 %v3346
    %v3385 = vunpack.c.l.b16 %v3347
    %v3386 = vunpack.c.l.b16 %v3348
    %v3387 = vunpack.c.l.b16 %v3349
    %v3388 = vunpack.c.l.b16 %v3350
    %v3389 = vunpack.c.l.b16 %v3351
    %v3390 = vunpack.c.l.b16 %v3352
    %v3391 = vunpack.c.l.b16 %v3353
    %v3392 = vunpack.c.l.b16 %v3354
    %v3393 = vunpack.c.l.b16 %v3355
    %v3394 = vunpack.c.l.b16 %v3356
    %v3395 = vunpack.c.l.b16 %v3357
    %v3396 = vpack.c.b16 %v3381, %v3380
    %v3397 = vpack.c.b16 %v3383, %v3382
    %v3398 = vpack.c.b16 %v3385, %v3384
    %v3399 = vpack.c.b16 %v3387, %v3386
    %v3400 = vpack.c.b16 %v3389, %v3388
    %v3401 = vpack.c.b16 %v3391, %v3390
    %v3402 = vpack.c.b16 %v3393, %v3392
    %v3403 = vpack.c.b16 %v3395, %v3394
    %3412 = vmatprep.subr.bf16.mxu0 0
    %3413 = vmatpush1.bf16.msra.mxu0 %v3396
    %3414 = vmatprep.subr.bf16.mxu0 0
    %3415 = vmatpush1.bf16.msra.mxu0 %v3397
    %3416 = vmatprep.subr.bf16.mxu0 0
    %3417 = vmatpush1.bf16.msra.mxu0 %v3398
    %3418 = vmatprep.subr.bf16.mxu0 0
    %3419 = vmatpush1.bf16.msra.mxu0 %v3399
    %3420 = vmatprep.subr.bf16.mxu0 0
    %3421 = vmatpush1.bf16.msra.mxu0 %v3400
    %3422 = vmatprep.subr.bf16.mxu0 0
    %3423 = vmatpush1.bf16.msra.mxu0 %v3401
    %3424 = vmatprep.subr.bf16.mxu0 0
    %3425 = vmatpush1.bf16.msra.mxu0 %v3402
    %3426 = vmatprep.subr.bf16.mxu0 0
    %3427 = vmatpush1.bf16.msra.mxu0 %v3403
    %3428 = vmatprep.subr.bf16.mxu0 0
    %3429 = vmatpush1.bf16.msra.mxu0 0
    %3430 = vmatprep.subr.bf16.mxu0 0
    %3431 = vmatpush1.bf16.msra.mxu0 0
    %3432 = vmatprep.subr.bf16.mxu0 0
    %3433 = vmatpush1.bf16.msra.mxu0 0
    %3434 = vmatprep.subr.bf16.mxu0 0
    %3435 = vmatpush1.bf16.msra.mxu0 0
    %3436 = vmatprep.subr.bf16.mxu0 0
    %3437 = vmatpush1.bf16.msra.mxu0 0
    %3438 = vmatprep.subr.bf16.mxu0 0
    %3439 = vmatpush1.bf16.msra.mxu0 0
    %3440 = vmatprep.subr.bf16.mxu0 0
    %3441 = vmatpush1.bf16.msra.mxu0 0
    %3442 = vmatprep.subr.bf16.mxu0 0
    %3443 = vmatpush1.bf16.msra.mxu0 0
    %3444 = vmatprep.mubr.bf16.mxu0 0
    %3445 = vmatmul.mubr.bf16.gmra.mrb[0].mxu0 %v3358
    %v3446 = vpop.f32.mrb[0].mxu0
    %v3447 = vadd.f32 %v3363, %v3446
    %v3448 = vpop.f32.mrb[0].mxu0
    %v3449 = vpop.f32.mrb[0].mxu0
    %v3450 = vadd.f32 %v3363, %v3449
    %v3451 = vpop.f32.mrb[0].mxu0
    %3452 = vdwg.mxu0
    %v3453 = vadd.f32 %v3272, %v3447
    %v3454 = vadd.f32 %v3273, %v3450
    %v3455 = vsel %vm102, %v3453, 0.0
    %3456 = vadd.xlane.f32.xlu0 %v3455
    %v3457 = vpop.xlane.xlu0 %3456
    %v3458 = vsel %vm102, %v3454, 0.0
    %3459 = vadd.xlane.f32.xlu0 %v3458
    %v3460 = vpop.xlane.xlu0 %3459
    %v3461 = vmul.f32 %v3457, %v791
    %v3462 = vmul.f32 %v3460, %v791
    %v3463 = vsub.f32 %v3453, %v3461
    %v3464 = vsub.f32 %v3454, %v3462
    %v3465 = vmul.f32 %v3463, %v3463
    %v3466 = vmul.f32 %v3464, %v3464
    %v3467 = vsel %vm102, %v3465, 0.0
    %3468 = vadd.xlane.f32.xlu0 %v3467
    %v3469 = vpop.xlane.xlu0 %3468
    %v3470 = vsel %vm102, %v3466, 0.0
    %3471 = vadd.xlane.f32.xlu0 %v3470
    %v3472 = vpop.xlane.xlu0 %3471
    %v3473 = vmul.f32 %v3469, %v791
    %v3474 = vmul.f32 %v3472, %v791
    %v3475 = vadd.f32 %v3473, 1e-05
    %v3476 = vadd.f32 %v3474, 1e-05
    %v3477 = vrsqrt.pop %v3475
    %v3478 = vrsqrt.pop %v3476
    %v3479 = vmul.f32 %v3463, %v3477
    %v3480 = vmul.f32 %v3464, %v3478
    %v3481 = vld [vmem:[#allocation7 + $0x120] sm:$0xf]
    %v3482 = vld [vmem:[#allocation7 + $0x124] sm:$0xf]
    %v3483 = vld [vmem:[#allocation7 + $0x128] sm:$0xf]
    %v3484 = vld [vmem:[#allocation7 + $0x12c] sm:$0xf]
    %v3485 = vpack.c.bf16 %v3480, %v3479
    %v3486 = vld [vmem:[#allocation8 + $0x18] sm:$0x1]
    %v3487 = vlaneseq
    %v3488 = vshrl.u32 %v3487, 7
    %v3489 = vsub.s32 0, %v3488
    %v3490 = vrot.slane %v3486, %v3489
    %v3495 = vunpack.c.l.b16 %v3481
    %v3496 = vunpack.c.l.b16 %v3482
    %v3497 = vunpack.c.l.b16 %v3483
    %v3498 = vunpack.c.l.b16 %v3484
    %v3499 = vpack.c.b16 %v3496, %v3495
    %v3500 = vpack.c.b16 %v3498, %v3497
    %v3504 = vsel %vm102, %v3485, 0
    %3506 = vmatprep.subr.bf16.mxu0 0
    %3507 = vmatpush1.bf16.msra.mxu0 %v3499
    %3508 = vmatprep.subr.bf16.mxu0 0
    %3509 = vmatpush1.bf16.msra.mxu0 %v3500
    %3510 = vmatprep.subr.bf16.mxu0 0
    %3511 = vmatpush1.bf16.msra.mxu0 0
    %3512 = vmatprep.subr.bf16.mxu0 0
    %3513 = vmatpush1.bf16.msra.mxu0 0
    %3514 = vmatprep.subr.bf16.mxu0 0
    %3515 = vmatpush1.bf16.msra.mxu0 0
    %3516 = vmatprep.subr.bf16.mxu0 0
    %3517 = vmatpush1.bf16.msra.mxu0 0
    %3518 = vmatprep.subr.bf16.mxu0 0
    %3519 = vmatpush1.bf16.msra.mxu0 0
    %3520 = vmatprep.subr.bf16.mxu0 0
    %3521 = vmatpush1.bf16.msra.mxu0 0
    %3522 = vmatprep.subr.bf16.mxu0 0
    %3523 = vmatpush1.bf16.msra.mxu0 0
    %3524 = vmatprep.subr.bf16.mxu0 0
    %3525 = vmatpush1.bf16.msra.mxu0 0
    %3526 = vmatprep.subr.bf16.mxu0 0
    %3527 = vmatpush1.bf16.msra.mxu0 0
    %3528 = vmatprep.subr.bf16.mxu0 0
    %3529 = vmatpush1.bf16.msra.mxu0 0
    %3530 = vmatprep.subr.bf16.mxu0 0
    %3531 = vmatpush1.bf16.msra.mxu0 0
    %3532 = vmatprep.subr.bf16.mxu0 0
    %3533 = vmatpush1.bf16.msra.mxu0 0
    %3534 = vmatprep.subr.bf16.mxu0 0
    %3535 = vmatpush1.bf16.msra.mxu0 0
    %3536 = vmatprep.subr.bf16.mxu0 0
    %3537 = vmatpush1.bf16.msra.mxu0 0
    %3538 = vmatprep.mubr.bf16.mxu0 0
    %3539 = vmatmul.mubr.bf16.gmra.mrb[0].mxu0 %v3504
    %v3540 = vpop.f32.mrb[0].mxu0
    %v3541 = vadd.f32 %v3490, %v3540
    %v3542 = vpop.f32.mrb[0].mxu0
    %v3543 = vpop.f32.mrb[0].mxu0
    %v3544 = vadd.f32 %v3490, %v3543
    %v3545 = vpop.f32.mrb[0].mxu0
    %3546 = vdwg.mxu0
    %3547 = vst [vmem:[#allocation10] sm:$0xff] %v3541
    %3548 = vst [vmem:[#allocation10 + $0x8] sm:$0xff] %v3544
    // Predicated region
    $region34: #{tpu_custom_call.1} parent=1 // pred_check
      _
    $region35: #{tpu_custom_call.1} parent=1 // pred_check_branch
      %3550 = sbr.rel (0) target = $region37
    $region36: #{tpu_custom_call.1} parent=1 // pred_region
      %s3552 = ssub.s32 256, 256
      %3553 = vsyncadd [#allocation4], %s3552
      %s3554 = sshll.u32 [#allocation10], 4
      %s3555 = int_to_ptr.vmem [resolvable:$true] %s3554
      %3560 = dma.vmem_to_hbm [thread:$0]  %s3555, 256, %s4, [#allocation4], 128, 128, 8
    $region37: #{tpu_custom_call.1} parent=1 // pred_fallthru
      _
    // Predicated region
    $region38: #{tpu_custom_call.1} parent=1 // pred_check
      _
    $region39: #{tpu_custom_call.1} parent=1 // pred_check_branch
      %3562 = sbr.rel (0) target = $region41
    $region40: #{tpu_custom_call.1} parent=1 // pred_region
      %3563 = dma.done [#allocation4], 256
    $region41: #{tpu_custom_call.1} parent=1 // pred_fallthru
      _
    %3564 = vsyncpa [#allocation3], 1
    %3565 = vsyncpa [#allocation6], 1
    %3566 = vsyncpa [#allocation9], 1
    %3567 = vsyncpa [#allocation4], 1

</llo_original>
